<compile_context>
chip_gen: v6e
topology: v6e:2x2x1
jax: 0.10.0
libtpu: 0.0.40
codegen_flags: <defaults>
</compile_context>

<pallas_src>
import jax
import jax.numpy as jnp
from jax.experimental import pallas as pl
from jax.experimental.pallas import tpu as pltpu


def fusion_kernel(x_ref, len_ref,
                  wihf_ref, wihb_ref,
                  binf_ref, binb_ref,
                  whhf_ref, whhb_ref,
                  bhnf_ref, bhnb_ref,
                  wout_ref, bout_ref,
                  y_ref,
                  gxf_ref, gxb_ref, h_ref):
    """Bi-GRU + output linear, single grid point, all tiles resident in VMEM.

    x_ref    : (T*B, Din)  time-major-flattened input (row = t*B + b)
    len_ref  : (B, 1) int32 valid lengths
    wih*_ref : (Din, 3H)   input weights (transposed), per direction, gates (r,z,n)
    bin*_ref : (1, 3H)     folded input biases per dir: [bir+bhr, biz+bhz, bin]
    whh*_ref : (H, 3H)     recurrent weights (transposed), per direction
    bhn*_ref : (1, H)      b_hn per direction (applied inside r * (...))
    wout_ref : (2H, d_out) output weights ([fwd | bwd] rows); bout: (1, d_out)
    y_ref    : (T*B, d_out)
    gxf/gxb  : (T*B, 3H)   scratch: hoisted input-projection results per direction
    h_ref    : (T*B, 2H)   scratch: per-step hidden states, [h_fwd | h_bwd]
    """
    TB_rows, _ = x_ref.shape
    B = len_ref.shape[0]
    T = TB_rows // B
    H = whhf_ref.shape[0]

    lens = len_ref[...]                        # (B, 1) int32

    # ---- hoisted input projection for both directions: two bulk MXU matmuls ----
    x = x_ref[...]
    gxf_ref[...] = (jnp.dot(x, wihf_ref[...], preferred_element_type=jnp.float32)
                    + binf_ref[...])           # (T*B, 3H)
    gxb_ref[...] = (jnp.dot(x, wihb_ref[...], preferred_element_type=jnp.float32)
                    + binb_ref[...])           # (T*B, 3H)

    whh_f = whhf_ref[...]
    whh_b = whhb_ref[...]
    bhn_f = bhnf_ref[...]
    bhn_b = bhnb_ref[...]

    def gru_step(gx_t, h, whh_t, bhh_n):
        # r/z input+hidden biases already folded into gx_t; only b_hn here.
        gh = jnp.dot(h, whh_t, preferred_element_type=jnp.float32)     # (B, 3H)
        r = jax.nn.sigmoid(gx_t[:, 0:H] + gh[:, 0:H])
        z = jax.nn.sigmoid(gx_t[:, H:2 * H] + gh[:, H:2 * H])
        n = jnp.tanh(gx_t[:, 2 * H:3 * H] + r * (gh[:, 2 * H:3 * H] + bhh_n))
        return (1.0 - z) * n + z * h

    h_f = jnp.zeros((B, H), jnp.float32)
    h_b = jnp.zeros((B, H), jnp.float32)

    # ---- fused forward + backward recurrence, fully unrolled (T is static) ----
    for i in range(T):
        tf = i
        tb = T - 1 - i
        gx_f = gxf_ref[tf * B:(tf + 1) * B, :]            # (B, 3H) fwd gates
        gx_b = gxb_ref[tb * B:(tb + 1) * B, :]            # (B, 3H) bwd gates

        hn_f = gru_step(gx_f, h_f, whh_f, bhn_f)
        hn_b = gru_step(gx_b, h_b, whh_b, bhn_b)

        m_f = lens > tf                                   # (B, 1), tf is a Python int
        m_b = lens > tb

        # packed-sequence semantics: padded positions emit 0
        h_ref[tf * B:(tf + 1) * B, 0:H] = jnp.where(m_f, hn_f, 0.0)
        h_ref[tb * B:(tb + 1) * B, H:2 * H] = jnp.where(m_b, hn_b, 0.0)

        h_f = jnp.where(m_f, hn_f, h_f)
        # backward carry only starts updating at t = len-1 (h stays 0 before that)
        h_b = jnp.where(m_b, hn_b, h_b)

    # ---- hoisted output Linear: one bulk matmul + bias + one dense store ----
    y_ref[...] = (jnp.dot(h_ref[...], wout_ref[...],
                          preferred_element_type=jnp.float32)
                  + bout_ref[...])


def fusion_forward(x, x_len, params):
    """x: (B, T, D_in) f32, x_len: (B,) int -> (B, T, d_out) f32."""
    B, T, Din = x.shape
    H = params['weight_hh_l0'].shape[1]
    d_out = params['out_weight'].shape[0]

    f32 = jnp.float32
    # time-major flattened rows: row = t*B + b  (keeps all kernel tiles 2D)
    x_2d = jnp.transpose(x.astype(f32), (1, 0, 2)).reshape(T * B, Din)
    lens = x_len.astype(jnp.int32).reshape(B, 1)

    # --- weight prep (would be done once at parameter-load time in practice) ---
    wih_f = params['weight_ih_l0'].astype(f32)             # (3H, Din)
    wih_b = params['weight_ih_l0_reverse'].astype(f32)
    whh_f = params['weight_hh_l0'].astype(f32)              # (3H, H)
    whh_b = params['weight_hh_l0_reverse'].astype(f32)
    bih_f = params['bias_ih_l0'].astype(f32)
    bhh_f = params['bias_hh_l0'].astype(f32)
    bih_b = params['bias_ih_l0_reverse'].astype(f32)
    bhh_b = params['bias_hh_l0_reverse'].astype(f32)

    def fold_bias(bih, bhh):
        # r/z: fold both biases; n: only the input bias (b_hn stays in-loop)
        return jnp.concatenate([bih[:2 * H] + bhh[:2 * H], bih[2 * H:]], axis=0)

    bin_f = fold_bias(bih_f, bhh_f).reshape(1, 3 * H)
    bin_b = fold_bias(bih_b, bhh_b).reshape(1, 3 * H)
    bhn_f = bhh_f[2 * H:].reshape(1, H)
    bhn_b = bhh_b[2 * H:].reshape(1, H)

    wout = params['out_weight'].astype(f32).T               # (2H, d_out), [fwd|bwd]
    bout = params['out_bias'].astype(f32).reshape(1, d_out)

    args = (x_2d, lens,
            wih_f.T, wih_b.T,
            bin_f, bin_b,
            whh_f.T, whh_b.T,
            bhn_f, bhn_b,
            wout, bout)

    def spec(shape):
        nd = len(shape)
        return pl.BlockSpec(shape, lambda i, nd=nd: (0,) * nd)

    y_2d = pl.pallas_call(
        fusion_kernel,
        out_shape=jax.ShapeDtypeStruct((T * B, d_out), f32),
        grid=(1,),
        in_specs=[spec(a.shape) for a in args],
        out_specs=spec((T * B, d_out)),
        scratch_shapes=[
            pltpu.VMEM((T * B, 3 * H), f32),   # hoisted input projection (fwd)
            pltpu.VMEM((T * B, 3 * H), f32),   # hoisted input projection (bwd)
            pltpu.VMEM((T * B, 2 * H), f32),   # per-step hidden states [fwd | bwd]
        ],
        compiler_params=pltpu.CompilerParams(
            dimension_semantics=("arbitrary",)),
    )(*args)

    return jnp.transpose(y_2d.reshape(T, B, d_out), (1, 0, 2))


def reference_forward(x, x_len, params):
    """Pure-JAX mirror of the PyTorch forward (bi-GRU with pack/pad + Linear)."""
    x = jnp.asarray(x, jnp.float32)
    B, T, Din = x.shape
    H = params['weight_hh_l0'].shape[1]
    lens = x_len.astype(jnp.int32)[:, None]

    def cell(xt, h, wih, whh, bih, bhh):
        gi = xt @ wih.T + bih
        gh = h @ whh.T + bhh
        r = jax.nn.sigmoid(gi[:, :H] + gh[:, :H])
        z = jax.nn.sigmoid(gi[:, H:2 * H] + gh[:, H:2 * H])
        n = jnp.tanh(gi[:, 2 * H:] + r * gh[:, 2 * H:])
        return (1.0 - z) * n + z * h

    h = jnp.zeros((B, H), jnp.float32)
    outs_f = []
    for t in range(T):
        hn = cell(x[:, t], h, params['weight_ih_l0'], params['weight_hh_l0'],
                  params['bias_ih_l0'], params['bias_hh_l0'])
        m = lens > t
        outs_f.append(jnp.where(m, hn, 0.0))
        h = jnp.where(m, hn, h)
    out_f = jnp.stack(outs_f, axis=1)

    h = jnp.zeros((B, H), jnp.float32)
    outs_b = [None] * T
    for t in range(T - 1, -1, -1):
        hn = cell(x[:, t], h, params['weight_ih_l0_reverse'],
                  params['weight_hh_l0_reverse'],
                  params['bias_ih_l0_reverse'], params['bias_hh_l0_reverse'])
        m = lens > t
        outs_b[t] = jnp.where(m, hn, 0.0)
        h = jnp.where(m, hn, h)
    out_b = jnp.stack(outs_b, axis=1)

    hcat = jnp.concatenate([out_f, out_b], axis=-1)          # (B, T, 2H)
    return hcat @ params['out_weight'].T + params['out_bias']


if __name__ == "__main__":
    # Small shapes implied by the module: batch=2, seq=8, d_in=16, d_model=32, d_out=4
    B, T, D_IN, D_MODEL, D_OUT = 2, 8, 16, 32, 4

    key = jax.random.PRNGKey(0)
    keys = jax.random.split(key, 12)

    def u(k, shape, scale=0.1):
        return jax.random.uniform(k, shape, jnp.float32, -scale, scale)

    params = {
        'weight_ih_l0':          u(keys[0], (3 * D_MODEL, D_IN)),
        'weight_hh_l0':          u(keys[1], (3 * D_MODEL, D_MODEL)),
        'bias_ih_l0':            u(keys[2], (3 * D_MODEL,)),
        'bias_hh_l0':            u(keys[3], (3 * D_MODEL,)),
        'weight_ih_l0_reverse':  u(keys[4], (3 * D_MODEL, D_IN)),
        'weight_hh_l0_reverse':  u(keys[5], (3 * D_MODEL, D_MODEL)),
        'bias_ih_l0_reverse':    u(keys[6], (3 * D_MODEL,)),
        'bias_hh_l0_reverse':    u(keys[7], (3 * D_MODEL,)),
        'out_weight':            u(keys[8], (D_OUT, 2 * D_MODEL)),
        'out_bias':              u(keys[9], (D_OUT,)),
    }

    x = jax.random.normal(keys[10], (B, T, D_IN), jnp.float32)
    x_len = jnp.array([T, 5], dtype=jnp.int32)   # one full, one padded sequence

    y = fusion_forward(x, x_len, params)
    y = jax.block_until_ready(y)

    y_ref = reference_forward(x, x_len, params)
    max_err = float(jnp.max(jnp.abs(y - y_ref)))
    assert y.shape == (B, T, D_OUT)
    assert max_err < 1e-2, f"mismatch vs reference, max |diff| = {max_err}"

    print("KERNEL_OK")
</pallas_src>

<mosaic_0001>
module attributes {stable_mosaic.version = 11 : i64} {
  func.func @fusion_kernel(%arg0: i32, %arg1: memref<16x16xf32, #tpu.memory_space<vmem>>, %arg2: memref<2x1xi32, #tpu.memory_space<vmem>>, %arg3: memref<16x96xf32, #tpu.memory_space<vmem>>, %arg4: memref<16x96xf32, #tpu.memory_space<vmem>>, %arg5: memref<1x96xf32, #tpu.memory_space<vmem>>, %arg6: memref<1x96xf32, #tpu.memory_space<vmem>>, %arg7: memref<32x96xf32, #tpu.memory_space<vmem>>, %arg8: memref<32x96xf32, #tpu.memory_space<vmem>>, %arg9: memref<1x32xf32, #tpu.memory_space<vmem>>, %arg10: memref<1x32xf32, #tpu.memory_space<vmem>>, %arg11: memref<64x4xf32, #tpu.memory_space<vmem>>, %arg12: memref<1x4xf32, #tpu.memory_space<vmem>>, %arg13: memref<16x4xf32, #tpu.memory_space<vmem>>, %arg14: memref<16x96xf32, #tpu.memory_space<vmem>>, %arg15: memref<16x96xf32, #tpu.memory_space<vmem>>, %arg16: memref<16x64xf32, #tpu.memory_space<vmem>>) attributes {dimension_semantics = [#tpu.dimension_semantics<arbitrary>], iteration_bounds = array<i64: 1>, scalar_prefetch = 0 : i64, scratch_operands = 3 : i64, tpu.core_type = #tpu.core_type<tc>, window_params = [{pipeline_mode = #tpu.pipeline_mode<synchronous>, transform_indices = @transform_0, window_bounds = array<i64: 16, 16>}, {pipeline_mode = #tpu.pipeline_mode<synchronous>, transform_indices = @transform_1, window_bounds = array<i64: 2, 1>}, {pipeline_mode = #tpu.pipeline_mode<synchronous>, transform_indices = @transform_2, window_bounds = array<i64: 16, 96>}, {pipeline_mode = #tpu.pipeline_mode<synchronous>, transform_indices = @transform_3, window_bounds = array<i64: 16, 96>}, {pipeline_mode = #tpu.pipeline_mode<synchronous>, transform_indices = @transform_4, window_bounds = array<i64: 1, 96>}, {pipeline_mode = #tpu.pipeline_mode<synchronous>, transform_indices = @transform_5, window_bounds = array<i64: 1, 96>}, {pipeline_mode = #tpu.pipeline_mode<synchronous>, transform_indices = @transform_6, window_bounds = array<i64: 32, 96>}, {pipeline_mode = #tpu.pipeline_mode<synchronous>, transform_indices = @transform_7, window_bounds = array<i64: 32, 96>}, {pipeline_mode = #tpu.pipeline_mode<synchronous>, transform_indices = @transform_8, window_bounds = array<i64: 1, 32>}, {pipeline_mode = #tpu.pipeline_mode<synchronous>, transform_indices = @transform_9, window_bounds = array<i64: 1, 32>}, {pipeline_mode = #tpu.pipeline_mode<synchronous>, transform_indices = @transform_10, window_bounds = array<i64: 64, 4>}, {pipeline_mode = #tpu.pipeline_mode<synchronous>, transform_indices = @transform_11, window_bounds = array<i64: 1, 4>}, {pipeline_mode = #tpu.pipeline_mode<synchronous>, transform_indices = @transform_12, window_bounds = array<i64: 16, 4>}]} {
    %c0 = arith.constant 0 : index
    %c0_0 = arith.constant 0 : index
    %0 = vector.load %arg2[%c0, %c0_0] : memref<2x1xi32, #tpu.memory_space<vmem>>, vector<2x1xi32>
    %c0_1 = arith.constant 0 : index
    %c0_2 = arith.constant 0 : index
    %1 = vector.load %arg1[%c0_1, %c0_2] : memref<16x16xf32, #tpu.memory_space<vmem>>, vector<16x16xf32>
    %c0_3 = arith.constant 0 : index
    %c0_4 = arith.constant 0 : index
    %2 = vector.load %arg3[%c0_3, %c0_4] : memref<16x96xf32, #tpu.memory_space<vmem>>, vector<16x96xf32>
    %cst = arith.constant dense<0.000000e+00> : vector<16x96xf32>
    %3 = tpu.matmul %1, %2, %cst {dimension_numbers = #tpu.dot_dimension_numbers<[1], [0], [0], [1], [0, 0, 1, 1], [], []>} : vector<16x16xf32>, vector<16x96xf32>, vector<16x96xf32> -> vector<16x96xf32>
    %c0_5 = arith.constant 0 : index
    %c0_6 = arith.constant 0 : index
    %4 = vector.load %arg5[%c0_5, %c0_6] : memref<1x96xf32, #tpu.memory_space<vmem>>, vector<1x96xf32>
    %5 = vector.broadcast %4 : vector<1x96xf32> to vector<16x96xf32>
    %6 = arith.addf %3, %5 : vector<16x96xf32>
    %c0_7 = arith.constant 0 : index
    %c0_8 = arith.constant 0 : index
    %7 = vector.load %arg14[%c0_7, %c0_8] : memref<16x96xf32, #tpu.memory_space<vmem>>, vector<16x96xf32>
    tpu.vector_store %arg14[%c0_7, %c0_8], %6 {strides = array<i32>} : memref<16x96xf32, #tpu.memory_space<vmem>>, vector<16x96xf32>,
    %c0_9 = arith.constant 0 : index
    %c0_10 = arith.constant 0 : index
    %8 = vector.load %arg4[%c0_9, %c0_10] : memref<16x96xf32, #tpu.memory_space<vmem>>, vector<16x96xf32>
    %cst_11 = arith.constant dense<0.000000e+00> : vector<16x96xf32>
    %9 = tpu.matmul %1, %8, %cst_11 {dimension_numbers = #tpu.dot_dimension_numbers<[1], [0], [0], [1], [0, 0, 1, 1], [], []>} : vector<16x16xf32>, vector<16x96xf32>, vector<16x96xf32> -> vector<16x96xf32>
    %c0_12 = arith.constant 0 : index
    %c0_13 = arith.constant 0 : index
    %10 = vector.load %arg6[%c0_12, %c0_13] : memref<1x96xf32, #tpu.memory_space<vmem>>, vector<1x96xf32>
    %11 = vector.broadcast %10 : vector<1x96xf32> to vector<16x96xf32>
    %12 = arith.addf %9, %11 : vector<16x96xf32>
    %c0_14 = arith.constant 0 : index
    %c0_15 = arith.constant 0 : index
    %13 = vector.load %arg15[%c0_14, %c0_15] : memref<16x96xf32, #tpu.memory_space<vmem>>, vector<16x96xf32>
    tpu.vector_store %arg15[%c0_14, %c0_15], %12 {strides = array<i32>} : memref<16x96xf32, #tpu.memory_space<vmem>>, vector<16x96xf32>,
    %c0_16 = arith.constant 0 : index
    %c0_17 = arith.constant 0 : index
    %14 = vector.load %arg7[%c0_16, %c0_17] : memref<32x96xf32, #tpu.memory_space<vmem>>, vector<32x96xf32>
    %c0_18 = arith.constant 0 : index
    %c0_19 = arith.constant 0 : index
    %15 = vector.load %arg8[%c0_18, %c0_19] : memref<32x96xf32, #tpu.memory_space<vmem>>, vector<32x96xf32>
    %c0_20 = arith.constant 0 : index
    %c0_21 = arith.constant 0 : index
    %16 = vector.load %arg9[%c0_20, %c0_21] : memref<1x32xf32, #tpu.memory_space<vmem>>, vector<1x32xf32>
    %c0_22 = arith.constant 0 : index
    %c0_23 = arith.constant 0 : index
    %17 = vector.load %arg10[%c0_22, %c0_23] : memref<1x32xf32, #tpu.memory_space<vmem>>, vector<1x32xf32>
    %cst_24 = arith.constant 0.000000e+00 : f32
    %18 = vector.broadcast %cst_24 : f32 to vector<2x32xf32>
    %cst_25 = arith.constant 0.000000e+00 : f32
    %19 = vector.broadcast %cst_25 : f32 to vector<2x32xf32>
    %c0_26 = arith.constant 0 : index
    %c0_27 = arith.constant 0 : index
    %20 = vector.load %arg14[%c0_26, %c0_27] : memref<16x96xf32, #tpu.memory_space<vmem>>, vector<2x96xf32>
    %c14 = arith.constant 14 : index
    %c0_28 = arith.constant 0 : index
    %21 = vector.load %arg15[%c14, %c0_28] : memref<16x96xf32, #tpu.memory_space<vmem>>, vector<2x96xf32>
    %cst_29 = arith.constant dense<0.000000e+00> : vector<2x96xf32>
    %22 = tpu.matmul %18, %14, %cst_29 {dimension_numbers = #tpu.dot_dimension_numbers<[1], [0], [0], [1], [0, 0, 1, 1], [], []>} : vector<2x32xf32>, vector<32x96xf32>, vector<2x96xf32> -> vector<2x96xf32>
    %23 = vector.extract_strided_slice %20 {offsets = [0, 0], sizes = [2, 32], strides = [1, 1]} : vector<2x96xf32> to vector<2x32xf32>
    %24 = vector.extract_strided_slice %22 {offsets = [0, 0], sizes = [2, 32], strides = [1, 1]} : vector<2x96xf32> to vector<2x32xf32>
    %25 = arith.addf %23, %24 : vector<2x32xf32>
    %26 = arith.negf %25 : vector<2x32xf32>
    %27 = math.exp %26 : vector<2x32xf32>
    %cst_30 = arith.constant 1.000000e+00 : f32
    %28 = vector.broadcast %cst_30 : f32 to vector<2x32xf32>
    %29 = arith.addf %28, %27 : vector<2x32xf32>
    %30 = arith.divf %28, %29 : vector<2x32xf32>
    %31 = vector.extract_strided_slice %20 {offsets = [0, 32], sizes = [2, 32], strides = [1, 1]} : vector<2x96xf32> to vector<2x32xf32>
    %32 = vector.extract_strided_slice %22 {offsets = [0, 32], sizes = [2, 32], strides = [1, 1]} : vector<2x96xf32> to vector<2x32xf32>
    %33 = arith.addf %31, %32 : vector<2x32xf32>
    %34 = arith.negf %33 : vector<2x32xf32>
    %35 = math.exp %34 : vector<2x32xf32>
    %cst_31 = arith.constant 1.000000e+00 : f32
    %36 = vector.broadcast %cst_31 : f32 to vector<2x32xf32>
    %37 = arith.addf %36, %35 : vector<2x32xf32>
    %38 = arith.divf %36, %37 : vector<2x32xf32>
    %39 = vector.extract_strided_slice %20 {offsets = [0, 64], sizes = [2, 32], strides = [1, 1]} : vector<2x96xf32> to vector<2x32xf32>
    %40 = vector.extract_strided_slice %22 {offsets = [0, 64], sizes = [2, 32], strides = [1, 1]} : vector<2x96xf32> to vector<2x32xf32>
    %41 = vector.broadcast %16 : vector<1x32xf32> to vector<2x32xf32>
    %42 = arith.addf %40, %41 : vector<2x32xf32>
    %43 = arith.mulf %30, %42 : vector<2x32xf32>
    %44 = arith.addf %39, %43 : vector<2x32xf32>
    %45 = math.tanh %44 : vector<2x32xf32>
    %cst_32 = arith.constant 1.000000e+00 : f32
    %46 = vector.broadcast %cst_32 : f32 to vector<2x32xf32>
    %47 = arith.subf %46, %38 : vector<2x32xf32>
    %48 = arith.mulf %47, %45 : vector<2x32xf32>
    %49 = arith.mulf %38, %18 : vector<2x32xf32>
    %50 = arith.addf %48, %49 : vector<2x32xf32>
    %cst_33 = arith.constant dense<0.000000e+00> : vector<2x96xf32>
    %51 = tpu.matmul %19, %15, %cst_33 {dimension_numbers = #tpu.dot_dimension_numbers<[1], [0], [0], [1], [0, 0, 1, 1], [], []>} : vector<2x32xf32>, vector<32x96xf32>, vector<2x96xf32> -> vector<2x96xf32>
    %52 = vector.extract_strided_slice %21 {offsets = [0, 0], sizes = [2, 32], strides = [1, 1]} : vector<2x96xf32> to vector<2x32xf32>
    %53 = vector.extract_strided_slice %51 {offsets = [0, 0], sizes = [2, 32], strides = [1, 1]} : vector<2x96xf32> to vector<2x32xf32>
    %54 = arith.addf %52, %53 : vector<2x32xf32>
    %55 = arith.negf %54 : vector<2x32xf32>
    %56 = math.exp %55 : vector<2x32xf32>
    %cst_34 = arith.constant 1.000000e+00 : f32
    %57 = vector.broadcast %cst_34 : f32 to vector<2x32xf32>
    %58 = arith.addf %57, %56 : vector<2x32xf32>
    %59 = arith.divf %57, %58 : vector<2x32xf32>
    %60 = vector.extract_strided_slice %21 {offsets = [0, 32], sizes = [2, 32], strides = [1, 1]} : vector<2x96xf32> to vector<2x32xf32>
    %61 = vector.extract_strided_slice %51 {offsets = [0, 32], sizes = [2, 32], strides = [1, 1]} : vector<2x96xf32> to vector<2x32xf32>
    %62 = arith.addf %60, %61 : vector<2x32xf32>
    %63 = arith.negf %62 : vector<2x32xf32>
    %64 = math.exp %63 : vector<2x32xf32>
    %cst_35 = arith.constant 1.000000e+00 : f32
    %65 = vector.broadcast %cst_35 : f32 to vector<2x32xf32>
    %66 = arith.addf %65, %64 : vector<2x32xf32>
    %67 = arith.divf %65, %66 : vector<2x32xf32>
    %68 = vector.extract_strided_slice %21 {offsets = [0, 64], sizes = [2, 32], strides = [1, 1]} : vector<2x96xf32> to vector<2x32xf32>
    %69 = vector.extract_strided_slice %51 {offsets = [0, 64], sizes = [2, 32], strides = [1, 1]} : vector<2x96xf32> to vector<2x32xf32>
    %70 = vector.broadcast %17 : vector<1x32xf32> to vector<2x32xf32>
    %71 = arith.addf %69, %70 : vector<2x32xf32>
    %72 = arith.mulf %59, %71 : vector<2x32xf32>
    %73 = arith.addf %68, %72 : vector<2x32xf32>
    %74 = math.tanh %73 : vector<2x32xf32>
    %cst_36 = arith.constant 1.000000e+00 : f32
    %75 = vector.broadcast %cst_36 : f32 to vector<2x32xf32>
    %76 = arith.subf %75, %67 : vector<2x32xf32>
    %77 = arith.mulf %76, %74 : vector<2x32xf32>
    %78 = arith.mulf %67, %19 : vector<2x32xf32>
    %79 = arith.addf %77, %78 : vector<2x32xf32>
    %c0_i32 = arith.constant 0 : i32
    %80 = vector.broadcast %c0_i32 : i32 to vector<2x1xi32>
    %81 = arith.cmpi sgt, %0, %80 : vector<2x1xi32>
    %c7_i32 = arith.constant 7 : i32
    %82 = vector.broadcast %c7_i32 : i32 to vector<2x1xi32>
    %83 = arith.cmpi sgt, %0, %82 : vector<2x1xi32>
    %cst_37 = arith.constant 0.000000e+00 : f32
    %84 = vector.shape_cast %81 : vector<2x1xi1> to vector<2x1xi1>
    %85 = vector.broadcast %84 : vector<2x1xi1> to vector<2x32xi1>
    %86 = vector.broadcast %cst_37 : f32 to vector<2x32xf32>
    %87 = arith.select %85, %50, %86 : vector<2x32xi1>, vector<2x32xf32>
    %c0_38 = arith.constant 0 : index
    %c0_39 = arith.constant 0 : index
    %88 = vector.load %arg16[%c0_38, %c0_39] : memref<16x64xf32, #tpu.memory_space<vmem>>, vector<2x32xf32>
    tpu.vector_store %arg16[%c0_38, %c0_39], %87 {strides = array<i32>} : memref<16x64xf32, #tpu.memory_space<vmem>>, vector<2x32xf32>,
    %cst_40 = arith.constant 0.000000e+00 : f32
    %89 = vector.shape_cast %83 : vector<2x1xi1> to vector<2x1xi1>
    %90 = vector.broadcast %89 : vector<2x1xi1> to vector<2x32xi1>
    %91 = vector.broadcast %cst_40 : f32 to vector<2x32xf32>
    %92 = arith.select %90, %79, %91 : vector<2x32xi1>, vector<2x32xf32>
    %c14_41 = arith.constant 14 : index
    %c32 = arith.constant 32 : index
    %93 = vector.load %arg16[%c14_41, %c32] : memref<16x64xf32, #tpu.memory_space<vmem>>, vector<2x32xf32>
    tpu.vector_store %arg16[%c14_41, %c32], %92 {strides = array<i32>} : memref<16x64xf32, #tpu.memory_space<vmem>>, vector<2x32xf32>,
    %94 = vector.shape_cast %81 : vector<2x1xi1> to vector<2x1xi1>
    %95 = vector.broadcast %94 : vector<2x1xi1> to vector<2x32xi1>
    %96 = arith.select %95, %50, %18 : vector<2x32xi1>, vector<2x32xf32>
    %97 = vector.shape_cast %83 : vector<2x1xi1> to vector<2x1xi1>
    %98 = vector.broadcast %97 : vector<2x1xi1> to vector<2x32xi1>
    %99 = arith.select %98, %79, %19 : vector<2x32xi1>, vector<2x32xf32>
    %c2 = arith.constant 2 : index
    %c0_42 = arith.constant 0 : index
    %100 = vector.load %arg14[%c2, %c0_42] : memref<16x96xf32, #tpu.memory_space<vmem>>, vector<2x96xf32>
    %c12 = arith.constant 12 : index
    %c0_43 = arith.constant 0 : index
    %101 = vector.load %arg15[%c12, %c0_43] : memref<16x96xf32, #tpu.memory_space<vmem>>, vector<2x96xf32>
    %cst_44 = arith.constant dense<0.000000e+00> : vector<2x96xf32>
    %102 = tpu.matmul %96, %14, %cst_44 {dimension_numbers = #tpu.dot_dimension_numbers<[1], [0], [0], [1], [0, 0, 1, 1], [], []>} : vector<2x32xf32>, vector<32x96xf32>, vector<2x96xf32> -> vector<2x96xf32>
    %103 = vector.extract_strided_slice %100 {offsets = [0, 0], sizes = [2, 32], strides = [1, 1]} : vector<2x96xf32> to vector<2x32xf32>
    %104 = vector.extract_strided_slice %102 {offsets = [0, 0], sizes = [2, 32], strides = [1, 1]} : vector<2x96xf32> to vector<2x32xf32>
    %105 = arith.addf %103, %104 : vector<2x32xf32>
    %106 = arith.negf %105 : vector<2x32xf32>
    %107 = math.exp %106 : vector<2x32xf32>
    %cst_45 = arith.constant 1.000000e+00 : f32
    %108 = vector.broadcast %cst_45 : f32 to vector<2x32xf32>
    %109 = arith.addf %108, %107 : vector<2x32xf32>
    %110 = arith.divf %108, %109 : vector<2x32xf32>
    %111 = vector.extract_strided_slice %100 {offsets = [0, 32], sizes = [2, 32], strides = [1, 1]} : vector<2x96xf32> to vector<2x32xf32>
    %112 = vector.extract_strided_slice %102 {offsets = [0, 32], sizes = [2, 32], strides = [1, 1]} : vector<2x96xf32> to vector<2x32xf32>
    %113 = arith.addf %111, %112 : vector<2x32xf32>
    %114 = arith.negf %113 : vector<2x32xf32>
    %115 = math.exp %114 : vector<2x32xf32>
    %cst_46 = arith.constant 1.000000e+00 : f32
    %116 = vector.broadcast %cst_46 : f32 to vector<2x32xf32>
    %117 = arith.addf %116, %115 : vector<2x32xf32>
    %118 = arith.divf %116, %117 : vector<2x32xf32>
    %119 = vector.extract_strided_slice %100 {offsets = [0, 64], sizes = [2, 32], strides = [1, 1]} : vector<2x96xf32> to vector<2x32xf32>
    %120 = vector.extract_strided_slice %102 {offsets = [0, 64], sizes = [2, 32], strides = [1, 1]} : vector<2x96xf32> to vector<2x32xf32>
    %121 = vector.broadcast %16 : vector<1x32xf32> to vector<2x32xf32>
    %122 = arith.addf %120, %121 : vector<2x32xf32>
    %123 = arith.mulf %110, %122 : vector<2x32xf32>
    %124 = arith.addf %119, %123 : vector<2x32xf32>
    %125 = math.tanh %124 : vector<2x32xf32>
    %cst_47 = arith.constant 1.000000e+00 : f32
    %126 = vector.broadcast %cst_47 : f32 to vector<2x32xf32>
    %127 = arith.subf %126, %118 : vector<2x32xf32>
    %128 = arith.mulf %127, %125 : vector<2x32xf32>
    %129 = arith.mulf %118, %96 : vector<2x32xf32>
    %130 = arith.addf %128, %129 : vector<2x32xf32>
    %cst_48 = arith.constant dense<0.000000e+00> : vector<2x96xf32>
    %131 = tpu.matmul %99, %15, %cst_48 {dimension_numbers = #tpu.dot_dimension_numbers<[1], [0], [0], [1], [0, 0, 1, 1], [], []>} : vector<2x32xf32>, vector<32x96xf32>, vector<2x96xf32> -> vector<2x96xf32>
    %132 = vector.extract_strided_slice %101 {offsets = [0, 0], sizes = [2, 32], strides = [1, 1]} : vector<2x96xf32> to vector<2x32xf32>
    %133 = vector.extract_strided_slice %131 {offsets = [0, 0], sizes = [2, 32], strides = [1, 1]} : vector<2x96xf32> to vector<2x32xf32>
    %134 = arith.addf %132, %133 : vector<2x32xf32>
    %135 = arith.negf %134 : vector<2x32xf32>
    %136 = math.exp %135 : vector<2x32xf32>
    %cst_49 = arith.constant 1.000000e+00 : f32
    %137 = vector.broadcast %cst_49 : f32 to vector<2x32xf32>
    %138 = arith.addf %137, %136 : vector<2x32xf32>
    %139 = arith.divf %137, %138 : vector<2x32xf32>
    %140 = vector.extract_strided_slice %101 {offsets = [0, 32], sizes = [2, 32], strides = [1, 1]} : vector<2x96xf32> to vector<2x32xf32>
    %141 = vector.extract_strided_slice %131 {offsets = [0, 32], sizes = [2, 32], strides = [1, 1]} : vector<2x96xf32> to vector<2x32xf32>
    %142 = arith.addf %140, %141 : vector<2x32xf32>
    %143 = arith.negf %142 : vector<2x32xf32>
    %144 = math.exp %143 : vector<2x32xf32>
    %cst_50 = arith.constant 1.000000e+00 : f32
    %145 = vector.broadcast %cst_50 : f32 to vector<2x32xf32>
    %146 = arith.addf %145, %144 : vector<2x32xf32>
    %147 = arith.divf %145, %146 : vector<2x32xf32>
    %148 = vector.extract_strided_slice %101 {offsets = [0, 64], sizes = [2, 32], strides = [1, 1]} : vector<2x96xf32> to vector<2x32xf32>
    %149 = vector.extract_strided_slice %131 {offsets = [0, 64], sizes = [2, 32], strides = [1, 1]} : vector<2x96xf32> to vector<2x32xf32>
    %150 = vector.broadcast %17 : vector<1x32xf32> to vector<2x32xf32>
    %151 = arith.addf %149, %150 : vector<2x32xf32>
    %152 = arith.mulf %139, %151 : vector<2x32xf32>
    %153 = arith.addf %148, %152 : vector<2x32xf32>
    %154 = math.tanh %153 : vector<2x32xf32>
    %cst_51 = arith.constant 1.000000e+00 : f32
    %155 = vector.broadcast %cst_51 : f32 to vector<2x32xf32>
    %156 = arith.subf %155, %147 : vector<2x32xf32>
    %157 = arith.mulf %156, %154 : vector<2x32xf32>
    %158 = arith.mulf %147, %99 : vector<2x32xf32>
    %159 = arith.addf %157, %158 : vector<2x32xf32>
    %c1_i32 = arith.constant 1 : i32
    %160 = vector.broadcast %c1_i32 : i32 to vector<2x1xi32>
    %161 = arith.cmpi sgt, %0, %160 : vector<2x1xi32>
    %c6_i32 = arith.constant 6 : i32
    %162 = vector.broadcast %c6_i32 : i32 to vector<2x1xi32>
    %163 = arith.cmpi sgt, %0, %162 : vector<2x1xi32>
    %cst_52 = arith.constant 0.000000e+00 : f32
    %164 = vector.shape_cast %161 : vector<2x1xi1> to vector<2x1xi1>
    %165 = vector.broadcast %164 : vector<2x1xi1> to vector<2x32xi1>
    %166 = vector.broadcast %cst_52 : f32 to vector<2x32xf32>
    %167 = arith.select %165, %130, %166 : vector<2x32xi1>, vector<2x32xf32>
    %c2_53 = arith.constant 2 : index
    %c0_54 = arith.constant 0 : index
    %168 = vector.load %arg16[%c2_53, %c0_54] : memref<16x64xf32, #tpu.memory_space<vmem>>, vector<2x32xf32>
    tpu.vector_store %arg16[%c2_53, %c0_54], %167 {strides = array<i32>} : memref<16x64xf32, #tpu.memory_space<vmem>>, vector<2x32xf32>,
    %cst_55 = arith.constant 0.000000e+00 : f32
    %169 = vector.shape_cast %163 : vector<2x1xi1> to vector<2x1xi1>
    %170 = vector.broadcast %169 : vector<2x1xi1> to vector<2x32xi1>
    %171 = vector.broadcast %cst_55 : f32 to vector<2x32xf32>
    %172 = arith.select %170, %159, %171 : vector<2x32xi1>, vector<2x32xf32>
    %c12_56 = arith.constant 12 : index
    %c32_57 = arith.constant 32 : index
    %173 = vector.load %arg16[%c12_56, %c32_57] : memref<16x64xf32, #tpu.memory_space<vmem>>, vector<2x32xf32>
    tpu.vector_store %arg16[%c12_56, %c32_57], %172 {strides = array<i32>} : memref<16x64xf32, #tpu.memory_space<vmem>>, vector<2x32xf32>,
    %174 = vector.shape_cast %161 : vector<2x1xi1> to vector<2x1xi1>
    %175 = vector.broadcast %174 : vector<2x1xi1> to vector<2x32xi1>
    %176 = arith.select %175, %130, %96 : vector<2x32xi1>, vector<2x32xf32>
    %177 = vector.shape_cast %163 : vector<2x1xi1> to vector<2x1xi1>
    %178 = vector.broadcast %177 : vector<2x1xi1> to vector<2x32xi1>
    %179 = arith.select %178, %159, %99 : vector<2x32xi1>, vector<2x32xf32>
    %c4 = arith.constant 4 : index
    %c0_58 = arith.constant 0 : index
    %180 = vector.load %arg14[%c4, %c0_58] : memref<16x96xf32, #tpu.memory_space<vmem>>, vector<2x96xf32>
    %c10 = arith.constant 10 : index
    %c0_59 = arith.constant 0 : index
    %181 = vector.load %arg15[%c10, %c0_59] : memref<16x96xf32, #tpu.memory_space<vmem>>, vector<2x96xf32>
    %cst_60 = arith.constant dense<0.000000e+00> : vector<2x96xf32>
    %182 = tpu.matmul %176, %14, %cst_60 {dimension_numbers = #tpu.dot_dimension_numbers<[1], [0], [0], [1], [0, 0, 1, 1], [], []>} : vector<2x32xf32>, vector<32x96xf32>, vector<2x96xf32> -> vector<2x96xf32>
    %183 = vector.extract_strided_slice %180 {offsets = [0, 0], sizes = [2, 32], strides = [1, 1]} : vector<2x96xf32> to vector<2x32xf32>
    %184 = vector.extract_strided_slice %182 {offsets = [0, 0], sizes = [2, 32], strides = [1, 1]} : vector<2x96xf32> to vector<2x32xf32>
    %185 = arith.addf %183, %184 : vector<2x32xf32>
    %186 = arith.negf %185 : vector<2x32xf32>
    %187 = math.exp %186 : vector<2x32xf32>
    %cst_61 = arith.constant 1.000000e+00 : f32
    %188 = vector.broadcast %cst_61 : f32 to vector<2x32xf32>
    %189 = arith.addf %188, %187 : vector<2x32xf32>
    %190 = arith.divf %188, %189 : vector<2x32xf32>
    %191 = vector.extract_strided_slice %180 {offsets = [0, 32], sizes = [2, 32], strides = [1, 1]} : vector<2x96xf32> to vector<2x32xf32>
    %192 = vector.extract_strided_slice %182 {offsets = [0, 32], sizes = [2, 32], strides = [1, 1]} : vector<2x96xf32> to vector<2x32xf32>
    %193 = arith.addf %191, %192 : vector<2x32xf32>
    %194 = arith.negf %193 : vector<2x32xf32>
    %195 = math.exp %194 : vector<2x32xf32>
    %cst_62 = arith.constant 1.000000e+00 : f32
    %196 = vector.broadcast %cst_62 : f32 to vector<2x32xf32>
    %197 = arith.addf %196, %195 : vector<2x32xf32>
    %198 = arith.divf %196, %197 : vector<2x32xf32>
    %199 = vector.extract_strided_slice %180 {offsets = [0, 64], sizes = [2, 32], strides = [1, 1]} : vector<2x96xf32> to vector<2x32xf32>
    %200 = vector.extract_strided_slice %182 {offsets = [0, 64], sizes = [2, 32], strides = [1, 1]} : vector<2x96xf32> to vector<2x32xf32>
    %201 = vector.broadcast %16 : vector<1x32xf32> to vector<2x32xf32>
    %202 = arith.addf %200, %201 : vector<2x32xf32>
    %203 = arith.mulf %190, %202 : vector<2x32xf32>
    %204 = arith.addf %199, %203 : vector<2x32xf32>
    %205 = math.tanh %204 : vector<2x32xf32>
    %cst_63 = arith.constant 1.000000e+00 : f32
    %206 = vector.broadcast %cst_63 : f32 to vector<2x32xf32>
    %207 = arith.subf %206, %198 : vector<2x32xf32>
    %208 = arith.mulf %207, %205 : vector<2x32xf32>
    %209 = arith.mulf %198, %176 : vector<2x32xf32>
    %210 = arith.addf %208, %209 : vector<2x32xf32>
    %cst_64 = arith.constant dense<0.000000e+00> : vector<2x96xf32>
    %211 = tpu.matmul %179, %15, %cst_64 {dimension_numbers = #tpu.dot_dimension_numbers<[1], [0], [0], [1], [0, 0, 1, 1], [], []>} : vector<2x32xf32>, vector<32x96xf32>, vector<2x96xf32> -> vector<2x96xf32>
    %212 = vector.extract_strided_slice %181 {offsets = [0, 0], sizes = [2, 32], strides = [1, 1]} : vector<2x96xf32> to vector<2x32xf32>
    %213 = vector.extract_strided_slice %211 {offsets = [0, 0], sizes = [2, 32], strides = [1, 1]} : vector<2x96xf32> to vector<2x32xf32>
    %214 = arith.addf %212, %213 : vector<2x32xf32>
    %215 = arith.negf %214 : vector<2x32xf32>
    %216 = math.exp %215 : vector<2x32xf32>
    %cst_65 = arith.constant 1.000000e+00 : f32
    %217 = vector.broadcast %cst_65 : f32 to vector<2x32xf32>
    %218 = arith.addf %217, %216 : vector<2x32xf32>
    %219 = arith.divf %217, %218 : vector<2x32xf32>
    %220 = vector.extract_strided_slice %181 {offsets = [0, 32], sizes = [2, 32], strides = [1, 1]} : vector<2x96xf32> to vector<2x32xf32>
    %221 = vector.extract_strided_slice %211 {offsets = [0, 32], sizes = [2, 32], strides = [1, 1]} : vector<2x96xf32> to vector<2x32xf32>
    %222 = arith.addf %220, %221 : vector<2x32xf32>
    %223 = arith.negf %222 : vector<2x32xf32>
    %224 = math.exp %223 : vector<2x32xf32>
    %cst_66 = arith.constant 1.000000e+00 : f32
    %225 = vector.broadcast %cst_66 : f32 to vector<2x32xf32>
    %226 = arith.addf %225, %224 : vector<2x32xf32>
    %227 = arith.divf %225, %226 : vector<2x32xf32>
    %228 = vector.extract_strided_slice %181 {offsets = [0, 64], sizes = [2, 32], strides = [1, 1]} : vector<2x96xf32> to vector<2x32xf32>
    %229 = vector.extract_strided_slice %211 {offsets = [0, 64], sizes = [2, 32], strides = [1, 1]} : vector<2x96xf32> to vector<2x32xf32>
    %230 = vector.broadcast %17 : vector<1x32xf32> to vector<2x32xf32>
    %231 = arith.addf %229, %230 : vector<2x32xf32>
    %232 = arith.mulf %219, %231 : vector<2x32xf32>
    %233 = arith.addf %228, %232 : vector<2x32xf32>
    %234 = math.tanh %233 : vector<2x32xf32>
    %cst_67 = arith.constant 1.000000e+00 : f32
    %235 = vector.broadcast %cst_67 : f32 to vector<2x32xf32>
    %236 = arith.subf %235, %227 : vector<2x32xf32>
    %237 = arith.mulf %236, %234 : vector<2x32xf32>
    %238 = arith.mulf %227, %179 : vector<2x32xf32>
    %239 = arith.addf %237, %238 : vector<2x32xf32>
    %c2_i32 = arith.constant 2 : i32
    %240 = vector.broadcast %c2_i32 : i32 to vector<2x1xi32>
    %241 = arith.cmpi sgt, %0, %240 : vector<2x1xi32>
    %c5_i32 = arith.constant 5 : i32
    %242 = vector.broadcast %c5_i32 : i32 to vector<2x1xi32>
    %243 = arith.cmpi sgt, %0, %242 : vector<2x1xi32>
    %cst_68 = arith.constant 0.000000e+00 : f32
    %244 = vector.shape_cast %241 : vector<2x1xi1> to vector<2x1xi1>
    %245 = vector.broadcast %244 : vector<2x1xi1> to vector<2x32xi1>
    %246 = vector.broadcast %cst_68 : f32 to vector<2x32xf32>
    %247 = arith.select %245, %210, %246 : vector<2x32xi1>, vector<2x32xf32>
    %c4_69 = arith.constant 4 : index
    %c0_70 = arith.constant 0 : index
    %248 = vector.load %arg16[%c4_69, %c0_70] : memref<16x64xf32, #tpu.memory_space<vmem>>, vector<2x32xf32>
    tpu.vector_store %arg16[%c4_69, %c0_70], %247 {strides = array<i32>} : memref<16x64xf32, #tpu.memory_space<vmem>>, vector<2x32xf32>,
    %cst_71 = arith.constant 0.000000e+00 : f32
    %249 = vector.shape_cast %243 : vector<2x1xi1> to vector<2x1xi1>
    %250 = vector.broadcast %249 : vector<2x1xi1> to vector<2x32xi1>
    %251 = vector.broadcast %cst_71 : f32 to vector<2x32xf32>
    %252 = arith.select %250, %239, %251 : vector<2x32xi1>, vector<2x32xf32>
    %c10_72 = arith.constant 10 : index
    %c32_73 = arith.constant 32 : index
    %253 = vector.load %arg16[%c10_72, %c32_73] : memref<16x64xf32, #tpu.memory_space<vmem>>, vector<2x32xf32>
    tpu.vector_store %arg16[%c10_72, %c32_73], %252 {strides = array<i32>} : memref<16x64xf32, #tpu.memory_space<vmem>>, vector<2x32xf32>,
    %254 = vector.shape_cast %241 : vector<2x1xi1> to vector<2x1xi1>
    %255 = vector.broadcast %254 : vector<2x1xi1> to vector<2x32xi1>
    %256 = arith.select %255, %210, %176 : vector<2x32xi1>, vector<2x32xf32>
    %257 = vector.shape_cast %243 : vector<2x1xi1> to vector<2x1xi1>
    %258 = vector.broadcast %257 : vector<2x1xi1> to vector<2x32xi1>
    %259 = arith.select %258, %239, %179 : vector<2x32xi1>, vector<2x32xf32>
    %c6 = arith.constant 6 : index
    %c0_74 = arith.constant 0 : index
    %260 = vector.load %arg14[%c6, %c0_74] : memref<16x96xf32, #tpu.memory_space<vmem>>, vector<2x96xf32>
    %c8 = arith.constant 8 : index
    %c0_75 = arith.constant 0 : index
    %261 = vector.load %arg15[%c8, %c0_75] : memref<16x96xf32, #tpu.memory_space<vmem>>, vector<2x96xf32>
    %cst_76 = arith.constant dense<0.000000e+00> : vector<2x96xf32>
    %262 = tpu.matmul %256, %14, %cst_76 {dimension_numbers = #tpu.dot_dimension_numbers<[1], [0], [0], [1], [0, 0, 1, 1], [], []>} : vector<2x32xf32>, vector<32x96xf32>, vector<2x96xf32> -> vector<2x96xf32>
    %263 = vector.extract_strided_slice %260 {offsets = [0, 0], sizes = [2, 32], strides = [1, 1]} : vector<2x96xf32> to vector<2x32xf32>
    %264 = vector.extract_strided_slice %262 {offsets = [0, 0], sizes = [2, 32], strides = [1, 1]} : vector<2x96xf32> to vector<2x32xf32>
    %265 = arith.addf %263, %264 : vector<2x32xf32>
    %266 = arith.negf %265 : vector<2x32xf32>
    %267 = math.exp %266 : vector<2x32xf32>
    %cst_77 = arith.constant 1.000000e+00 : f32
    %268 = vector.broadcast %cst_77 : f32 to vector<2x32xf32>
    %269 = arith.addf %268, %267 : vector<2x32xf32>
    %270 = arith.divf %268, %269 : vector<2x32xf32>
    %271 = vector.extract_strided_slice %260 {offsets = [0, 32], sizes = [2, 32], strides = [1, 1]} : vector<2x96xf32> to vector<2x32xf32>
    %272 = vector.extract_strided_slice %262 {offsets = [0, 32], sizes = [2, 32], strides = [1, 1]} : vector<2x96xf32> to vector<2x32xf32>
    %273 = arith.addf %271, %272 : vector<2x32xf32>
    %274 = arith.negf %273 : vector<2x32xf32>
    %275 = math.exp %274 : vector<2x32xf32>
    %cst_78 = arith.constant 1.000000e+00 : f32
    %276 = vector.broadcast %cst_78 : f32 to vector<2x32xf32>
    %277 = arith.addf %276, %275 : vector<2x32xf32>
    %278 = arith.divf %276, %277 : vector<2x32xf32>
    %279 = vector.extract_strided_slice %260 {offsets = [0, 64], sizes = [2, 32], strides = [1, 1]} : vector<2x96xf32> to vector<2x32xf32>
    %280 = vector.extract_strided_slice %262 {offsets = [0, 64], sizes = [2, 32], strides = [1, 1]} : vector<2x96xf32> to vector<2x32xf32>
    %281 = vector.broadcast %16 : vector<1x32xf32> to vector<2x32xf32>
    %282 = arith.addf %280, %281 : vector<2x32xf32>
    %283 = arith.mulf %270, %282 : vector<2x32xf32>
    %284 = arith.addf %279, %283 : vector<2x32xf32>
    %285 = math.tanh %284 : vector<2x32xf32>
    %cst_79 = arith.constant 1.000000e+00 : f32
    %286 = vector.broadcast %cst_79 : f32 to vector<2x32xf32>
    %287 = arith.subf %286, %278 : vector<2x32xf32>
    %288 = arith.mulf %287, %285 : vector<2x32xf32>
    %289 = arith.mulf %278, %256 : vector<2x32xf32>
    %290 = arith.addf %288, %289 : vector<2x32xf32>
    %cst_80 = arith.constant dense<0.000000e+00> : vector<2x96xf32>
    %291 = tpu.matmul %259, %15, %cst_80 {dimension_numbers = #tpu.dot_dimension_numbers<[1], [0], [0], [1], [0, 0, 1, 1], [], []>} : vector<2x32xf32>, vector<32x96xf32>, vector<2x96xf32> -> vector<2x96xf32>
    %292 = vector.extract_strided_slice %261 {offsets = [0, 0], sizes = [2, 32], strides = [1, 1]} : vector<2x96xf32> to vector<2x32xf32>
    %293 = vector.extract_strided_slice %291 {offsets = [0, 0], sizes = [2, 32], strides = [1, 1]} : vector<2x96xf32> to vector<2x32xf32>
    %294 = arith.addf %292, %293 : vector<2x32xf32>
    %295 = arith.negf %294 : vector<2x32xf32>
    %296 = math.exp %295 : vector<2x32xf32>
    %cst_81 = arith.constant 1.000000e+00 : f32
    %297 = vector.broadcast %cst_81 : f32 to vector<2x32xf32>
    %298 = arith.addf %297, %296 : vector<2x32xf32>
    %299 = arith.divf %297, %298 : vector<2x32xf32>
    %300 = vector.extract_strided_slice %261 {offsets = [0, 32], sizes = [2, 32], strides = [1, 1]} : vector<2x96xf32> to vector<2x32xf32>
    %301 = vector.extract_strided_slice %291 {offsets = [0, 32], sizes = [2, 32], strides = [1, 1]} : vector<2x96xf32> to vector<2x32xf32>
    %302 = arith.addf %300, %301 : vector<2x32xf32>
    %303 = arith.negf %302 : vector<2x32xf32>
    %304 = math.exp %303 : vector<2x32xf32>
    %cst_82 = arith.constant 1.000000e+00 : f32
    %305 = vector.broadcast %cst_82 : f32 to vector<2x32xf32>
    %306 = arith.addf %305, %304 : vector<2x32xf32>
    %307 = arith.divf %305, %306 : vector<2x32xf32>
    %308 = vector.extract_strided_slice %261 {offsets = [0, 64], sizes = [2, 32], strides = [1, 1]} : vector<2x96xf32> to vector<2x32xf32>
    %309 = vector.extract_strided_slice %291 {offsets = [0, 64], sizes = [2, 32], strides = [1, 1]} : vector<2x96xf32> to vector<2x32xf32>
    %310 = vector.broadcast %17 : vector<1x32xf32> to vector<2x32xf32>
    %311 = arith.addf %309, %310 : vector<2x32xf32>
    %312 = arith.mulf %299, %311 : vector<2x32xf32>
    %313 = arith.addf %308, %312 : vector<2x32xf32>
    %314 = math.tanh %313 : vector<2x32xf32>
    %cst_83 = arith.constant 1.000000e+00 : f32
    %315 = vector.broadcast %cst_83 : f32 to vector<2x32xf32>
    %316 = arith.subf %315, %307 : vector<2x32xf32>
    %317 = arith.mulf %316, %314 : vector<2x32xf32>
    %318 = arith.mulf %307, %259 : vector<2x32xf32>
    %319 = arith.addf %317, %318 : vector<2x32xf32>
    %c3_i32 = arith.constant 3 : i32
    %320 = vector.broadcast %c3_i32 : i32 to vector<2x1xi32>
    %321 = arith.cmpi sgt, %0, %320 : vector<2x1xi32>
    %c4_i32 = arith.constant 4 : i32
    %322 = vector.broadcast %c4_i32 : i32 to vector<2x1xi32>
    %323 = arith.cmpi sgt, %0, %322 : vector<2x1xi32>
    %cst_84 = arith.constant 0.000000e+00 : f32
    %324 = vector.shape_cast %321 : vector<2x1xi1> to vector<2x1xi1>
    %325 = vector.broadcast %324 : vector<2x1xi1> to vector<2x32xi1>
    %326 = vector.broadcast %cst_84 : f32 to vector<2x32xf32>
    %327 = arith.select %325, %290, %326 : vector<2x32xi1>, vector<2x32xf32>
    %c6_85 = arith.constant 6 : index
    %c0_86 = arith.constant 0 : index
    %328 = vector.load %arg16[%c6_85, %c0_86] : memref<16x64xf32, #tpu.memory_space<vmem>>, vector<2x32xf32>
    tpu.vector_store %arg16[%c6_85, %c0_86], %327 {strides = array<i32>} : memref<16x64xf32, #tpu.memory_space<vmem>>, vector<2x32xf32>,
    %cst_87 = arith.constant 0.000000e+00 : f32
    %329 = vector.shape_cast %323 : vector<2x1xi1> to vector<2x1xi1>
    %330 = vector.broadcast %329 : vector<2x1xi1> to vector<2x32xi1>
    %331 = vector.broadcast %cst_87 : f32 to vector<2x32xf32>
    %332 = arith.select %330, %319, %331 : vector<2x32xi1>, vector<2x32xf32>
    %c8_88 = arith.constant 8 : index
    %c32_89 = arith.constant 32 : index
    %333 = vector.load %arg16[%c8_88, %c32_89] : memref<16x64xf32, #tpu.memory_space<vmem>>, vector<2x32xf32>
    tpu.vector_store %arg16[%c8_88, %c32_89], %332 {strides = array<i32>} : memref<16x64xf32, #tpu.memory_space<vmem>>, vector<2x32xf32>,
    %334 = vector.shape_cast %321 : vector<2x1xi1> to vector<2x1xi1>
    %335 = vector.broadcast %334 : vector<2x1xi1> to vector<2x32xi1>
    %336 = arith.select %335, %290, %256 : vector<2x32xi1>, vector<2x32xf32>
    %337 = vector.shape_cast %323 : vector<2x1xi1> to vector<2x1xi1>
    %338 = vector.broadcast %337 : vector<2x1xi1> to vector<2x32xi1>
    %339 = arith.select %338, %319, %259 : vector<2x32xi1>, vector<2x32xf32>
    %c8_90 = arith.constant 8 : index
    %c0_91 = arith.constant 0 : index
    %340 = vector.load %arg14[%c8_90, %c0_91] : memref<16x96xf32, #tpu.memory_space<vmem>>, vector<2x96xf32>
    %c6_92 = arith.constant 6 : index
    %c0_93 = arith.constant 0 : index
    %341 = vector.load %arg15[%c6_92, %c0_93] : memref<16x96xf32, #tpu.memory_space<vmem>>, vector<2x96xf32>
    %cst_94 = arith.constant dense<0.000000e+00> : vector<2x96xf32>
    %342 = tpu.matmul %336, %14, %cst_94 {dimension_numbers = #tpu.dot_dimension_numbers<[1], [0], [0], [1], [0, 0, 1, 1], [], []>} : vector<2x32xf32>, vector<32x96xf32>, vector<2x96xf32> -> vector<2x96xf32>
    %343 = vector.extract_strided_slice %340 {offsets = [0, 0], sizes = [2, 32], strides = [1, 1]} : vector<2x96xf32> to vector<2x32xf32>
    %344 = vector.extract_strided_slice %342 {offsets = [0, 0], sizes = [2, 32], strides = [1, 1]} : vector<2x96xf32> to vector<2x32xf32>
    %345 = arith.addf %343, %344 : vector<2x32xf32>
    %346 = arith.negf %345 : vector<2x32xf32>
    %347 = math.exp %346 : vector<2x32xf32>
    %cst_95 = arith.constant 1.000000e+00 : f32
    %348 = vector.broadcast %cst_95 : f32 to vector<2x32xf32>
    %349 = arith.addf %348, %347 : vector<2x32xf32>
    %350 = arith.divf %348, %349 : vector<2x32xf32>
    %351 = vector.extract_strided_slice %340 {offsets = [0, 32], sizes = [2, 32], strides = [1, 1]} : vector<2x96xf32> to vector<2x32xf32>
    %352 = vector.extract_strided_slice %342 {offsets = [0, 32], sizes = [2, 32], strides = [1, 1]} : vector<2x96xf32> to vector<2x32xf32>
    %353 = arith.addf %351, %352 : vector<2x32xf32>
    %354 = arith.negf %353 : vector<2x32xf32>
    %355 = math.exp %354 : vector<2x32xf32>
    %cst_96 = arith.constant 1.000000e+00 : f32
    %356 = vector.broadcast %cst_96 : f32 to vector<2x32xf32>
    %357 = arith.addf %356, %355 : vector<2x32xf32>
    %358 = arith.divf %356, %357 : vector<2x32xf32>
    %359 = vector.extract_strided_slice %340 {offsets = [0, 64], sizes = [2, 32], strides = [1, 1]} : vector<2x96xf32> to vector<2x32xf32>
    %360 = vector.extract_strided_slice %342 {offsets = [0, 64], sizes = [2, 32], strides = [1, 1]} : vector<2x96xf32> to vector<2x32xf32>
    %361 = vector.broadcast %16 : vector<1x32xf32> to vector<2x32xf32>
    %362 = arith.addf %360, %361 : vector<2x32xf32>
    %363 = arith.mulf %350, %362 : vector<2x32xf32>
    %364 = arith.addf %359, %363 : vector<2x32xf32>
    %365 = math.tanh %364 : vector<2x32xf32>
    %cst_97 = arith.constant 1.000000e+00 : f32
    %366 = vector.broadcast %cst_97 : f32 to vector<2x32xf32>
    %367 = arith.subf %366, %358 : vector<2x32xf32>
    %368 = arith.mulf %367, %365 : vector<2x32xf32>
    %369 = arith.mulf %358, %336 : vector<2x32xf32>
    %370 = arith.addf %368, %369 : vector<2x32xf32>
    %cst_98 = arith.constant dense<0.000000e+00> : vector<2x96xf32>
    %371 = tpu.matmul %339, %15, %cst_98 {dimension_numbers = #tpu.dot_dimension_numbers<[1], [0], [0], [1], [0, 0, 1, 1], [], []>} : vector<2x32xf32>, vector<32x96xf32>, vector<2x96xf32> -> vector<2x96xf32>
    %372 = vector.extract_strided_slice %341 {offsets = [0, 0], sizes = [2, 32], strides = [1, 1]} : vector<2x96xf32> to vector<2x32xf32>
    %373 = vector.extract_strided_slice %371 {offsets = [0, 0], sizes = [2, 32], strides = [1, 1]} : vector<2x96xf32> to vector<2x32xf32>
    %374 = arith.addf %372, %373 : vector<2x32xf32>
    %375 = arith.negf %374 : vector<2x32xf32>
    %376 = math.exp %375 : vector<2x32xf32>
    %cst_99 = arith.constant 1.000000e+00 : f32
    %377 = vector.broadcast %cst_99 : f32 to vector<2x32xf32>
    %378 = arith.addf %377, %376 : vector<2x32xf32>
    %379 = arith.divf %377, %378 : vector<2x32xf32>
    %380 = vector.extract_strided_slice %341 {offsets = [0, 32], sizes = [2, 32], strides = [1, 1]} : vector<2x96xf32> to vector<2x32xf32>
    %381 = vector.extract_strided_slice %371 {offsets = [0, 32], sizes = [2, 32], strides = [1, 1]} : vector<2x96xf32> to vector<2x32xf32>
    %382 = arith.addf %380, %381 : vector<2x32xf32>
    %383 = arith.negf %382 : vector<2x32xf32>
    %384 = math.exp %383 : vector<2x32xf32>
    %cst_100 = arith.constant 1.000000e+00 : f32
    %385 = vector.broadcast %cst_100 : f32 to vector<2x32xf32>
    %386 = arith.addf %385, %384 : vector<2x32xf32>
    %387 = arith.divf %385, %386 : vector<2x32xf32>
    %388 = vector.extract_strided_slice %341 {offsets = [0, 64], sizes = [2, 32], strides = [1, 1]} : vector<2x96xf32> to vector<2x32xf32>
    %389 = vector.extract_strided_slice %371 {offsets = [0, 64], sizes = [2, 32], strides = [1, 1]} : vector<2x96xf32> to vector<2x32xf32>
    %390 = vector.broadcast %17 : vector<1x32xf32> to vector<2x32xf32>
    %391 = arith.addf %389, %390 : vector<2x32xf32>
    %392 = arith.mulf %379, %391 : vector<2x32xf32>
    %393 = arith.addf %388, %392 : vector<2x32xf32>
    %394 = math.tanh %393 : vector<2x32xf32>
    %cst_101 = arith.constant 1.000000e+00 : f32
    %395 = vector.broadcast %cst_101 : f32 to vector<2x32xf32>
    %396 = arith.subf %395, %387 : vector<2x32xf32>
    %397 = arith.mulf %396, %394 : vector<2x32xf32>
    %398 = arith.mulf %387, %339 : vector<2x32xf32>
    %399 = arith.addf %397, %398 : vector<2x32xf32>
    %c4_i32_102 = arith.constant 4 : i32
    %400 = vector.broadcast %c4_i32_102 : i32 to vector<2x1xi32>
    %401 = arith.cmpi sgt, %0, %400 : vector<2x1xi32>
    %c3_i32_103 = arith.constant 3 : i32
    %402 = vector.broadcast %c3_i32_103 : i32 to vector<2x1xi32>
    %403 = arith.cmpi sgt, %0, %402 : vector<2x1xi32>
    %cst_104 = arith.constant 0.000000e+00 : f32
    %404 = vector.shape_cast %401 : vector<2x1xi1> to vector<2x1xi1>
    %405 = vector.broadcast %404 : vector<2x1xi1> to vector<2x32xi1>
    %406 = vector.broadcast %cst_104 : f32 to vector<2x32xf32>
    %407 = arith.select %405, %370, %406 : vector<2x32xi1>, vector<2x32xf32>
    %c8_105 = arith.constant 8 : index
    %c0_106 = arith.constant 0 : index
    %408 = vector.load %arg16[%c8_105, %c0_106] : memref<16x64xf32, #tpu.memory_space<vmem>>, vector<2x32xf32>
    tpu.vector_store %arg16[%c8_105, %c0_106], %407 {strides = array<i32>} : memref<16x64xf32, #tpu.memory_space<vmem>>, vector<2x32xf32>,
    %cst_107 = arith.constant 0.000000e+00 : f32
    %409 = vector.shape_cast %403 : vector<2x1xi1> to vector<2x1xi1>
    %410 = vector.broadcast %409 : vector<2x1xi1> to vector<2x32xi1>
    %411 = vector.broadcast %cst_107 : f32 to vector<2x32xf32>
    %412 = arith.select %410, %399, %411 : vector<2x32xi1>, vector<2x32xf32>
    %c6_108 = arith.constant 6 : index
    %c32_109 = arith.constant 32 : index
    %413 = vector.load %arg16[%c6_108, %c32_109] : memref<16x64xf32, #tpu.memory_space<vmem>>, vector<2x32xf32>
    tpu.vector_store %arg16[%c6_108, %c32_109], %412 {strides = array<i32>} : memref<16x64xf32, #tpu.memory_space<vmem>>, vector<2x32xf32>,
    %414 = vector.shape_cast %401 : vector<2x1xi1> to vector<2x1xi1>
    %415 = vector.broadcast %414 : vector<2x1xi1> to vector<2x32xi1>
    %416 = arith.select %415, %370, %336 : vector<2x32xi1>, vector<2x32xf32>
    %417 = vector.shape_cast %403 : vector<2x1xi1> to vector<2x1xi1>
    %418 = vector.broadcast %417 : vector<2x1xi1> to vector<2x32xi1>
    %419 = arith.select %418, %399, %339 : vector<2x32xi1>, vector<2x32xf32>
    %c10_110 = arith.constant 10 : index
    %c0_111 = arith.constant 0 : index
    %420 = vector.load %arg14[%c10_110, %c0_111] : memref<16x96xf32, #tpu.memory_space<vmem>>, vector<2x96xf32>
    %c4_112 = arith.constant 4 : index
    %c0_113 = arith.constant 0 : index
    %421 = vector.load %arg15[%c4_112, %c0_113] : memref<16x96xf32, #tpu.memory_space<vmem>>, vector<2x96xf32>
    %cst_114 = arith.constant dense<0.000000e+00> : vector<2x96xf32>
    %422 = tpu.matmul %416, %14, %cst_114 {dimension_numbers = #tpu.dot_dimension_numbers<[1], [0], [0], [1], [0, 0, 1, 1], [], []>} : vector<2x32xf32>, vector<32x96xf32>, vector<2x96xf32> -> vector<2x96xf32>
    %423 = vector.extract_strided_slice %420 {offsets = [0, 0], sizes = [2, 32], strides = [1, 1]} : vector<2x96xf32> to vector<2x32xf32>
    %424 = vector.extract_strided_slice %422 {offsets = [0, 0], sizes = [2, 32], strides = [1, 1]} : vector<2x96xf32> to vector<2x32xf32>
    %425 = arith.addf %423, %424 : vector<2x32xf32>
    %426 = arith.negf %425 : vector<2x32xf32>
    %427 = math.exp %426 : vector<2x32xf32>
    %cst_115 = arith.constant 1.000000e+00 : f32
    %428 = vector.broadcast %cst_115 : f32 to vector<2x32xf32>
    %429 = arith.addf %428, %427 : vector<2x32xf32>
    %430 = arith.divf %428, %429 : vector<2x32xf32>
    %431 = vector.extract_strided_slice %420 {offsets = [0, 32], sizes = [2, 32], strides = [1, 1]} : vector<2x96xf32> to vector<2x32xf32>
    %432 = vector.extract_strided_slice %422 {offsets = [0, 32], sizes = [2, 32], strides = [1, 1]} : vector<2x96xf32> to vector<2x32xf32>
    %433 = arith.addf %431, %432 : vector<2x32xf32>
    %434 = arith.negf %433 : vector<2x32xf32>
    %435 = math.exp %434 : vector<2x32xf32>
    %cst_116 = arith.constant 1.000000e+00 : f32
    %436 = vector.broadcast %cst_116 : f32 to vector<2x32xf32>
    %437 = arith.addf %436, %435 : vector<2x32xf32>
    %438 = arith.divf %436, %437 : vector<2x32xf32>
    %439 = vector.extract_strided_slice %420 {offsets = [0, 64], sizes = [2, 32], strides = [1, 1]} : vector<2x96xf32> to vector<2x32xf32>
    %440 = vector.extract_strided_slice %422 {offsets = [0, 64], sizes = [2, 32], strides = [1, 1]} : vector<2x96xf32> to vector<2x32xf32>
    %441 = vector.broadcast %16 : vector<1x32xf32> to vector<2x32xf32>
    %442 = arith.addf %440, %441 : vector<2x32xf32>
    %443 = arith.mulf %430, %442 : vector<2x32xf32>
    %444 = arith.addf %439, %443 : vector<2x32xf32>
    %445 = math.tanh %444 : vector<2x32xf32>
    %cst_117 = arith.constant 1.000000e+00 : f32
    %446 = vector.broadcast %cst_117 : f32 to vector<2x32xf32>
    %447 = arith.subf %446, %438 : vector<2x32xf32>
    %448 = arith.mulf %447, %445 : vector<2x32xf32>
    %449 = arith.mulf %438, %416 : vector<2x32xf32>
    %450 = arith.addf %448, %449 : vector<2x32xf32>
    %cst_118 = arith.constant dense<0.000000e+00> : vector<2x96xf32>
    %451 = tpu.matmul %419, %15, %cst_118 {dimension_numbers = #tpu.dot_dimension_numbers<[1], [0], [0], [1], [0, 0, 1, 1], [], []>} : vector<2x32xf32>, vector<32x96xf32>, vector<2x96xf32> -> vector<2x96xf32>
    %452 = vector.extract_strided_slice %421 {offsets = [0, 0], sizes = [2, 32], strides = [1, 1]} : vector<2x96xf32> to vector<2x32xf32>
    %453 = vector.extract_strided_slice %451 {offsets = [0, 0], sizes = [2, 32], strides = [1, 1]} : vector<2x96xf32> to vector<2x32xf32>
    %454 = arith.addf %452, %453 : vector<2x32xf32>
    %455 = arith.negf %454 : vector<2x32xf32>
    %456 = math.exp %455 : vector<2x32xf32>
    %cst_119 = arith.constant 1.000000e+00 : f32
    %457 = vector.broadcast %cst_119 : f32 to vector<2x32xf32>
    %458 = arith.addf %457, %456 : vector<2x32xf32>
    %459 = arith.divf %457, %458 : vector<2x32xf32>
    %460 = vector.extract_strided_slice %421 {offsets = [0, 32], sizes = [2, 32], strides = [1, 1]} : vector<2x96xf32> to vector<2x32xf32>
    %461 = vector.extract_strided_slice %451 {offsets = [0, 32], sizes = [2, 32], strides = [1, 1]} : vector<2x96xf32> to vector<2x32xf32>
    %462 = arith.addf %460, %461 : vector<2x32xf32>
    %463 = arith.negf %462 : vector<2x32xf32>
    %464 = math.exp %463 : vector<2x32xf32>
    %cst_120 = arith.constant 1.000000e+00 : f32
    %465 = vector.broadcast %cst_120 : f32 to vector<2x32xf32>
    %466 = arith.addf %465, %464 : vector<2x32xf32>
    %467 = arith.divf %465, %466 : vector<2x32xf32>
    %468 = vector.extract_strided_slice %421 {offsets = [0, 64], sizes = [2, 32], strides = [1, 1]} : vector<2x96xf32> to vector<2x32xf32>
    %469 = vector.extract_strided_slice %451 {offsets = [0, 64], sizes = [2, 32], strides = [1, 1]} : vector<2x96xf32> to vector<2x32xf32>
    %470 = vector.broadcast %17 : vector<1x32xf32> to vector<2x32xf32>
    %471 = arith.addf %469, %470 : vector<2x32xf32>
    %472 = arith.mulf %459, %471 : vector<2x32xf32>
    %473 = arith.addf %468, %472 : vector<2x32xf32>
    %474 = math.tanh %473 : vector<2x32xf32>
    %cst_121 = arith.constant 1.000000e+00 : f32
    %475 = vector.broadcast %cst_121 : f32 to vector<2x32xf32>
    %476 = arith.subf %475, %467 : vector<2x32xf32>
    %477 = arith.mulf %476, %474 : vector<2x32xf32>
    %478 = arith.mulf %467, %419 : vector<2x32xf32>
    %479 = arith.addf %477, %478 : vector<2x32xf32>
    %c5_i32_122 = arith.constant 5 : i32
    %480 = vector.broadcast %c5_i32_122 : i32 to vector<2x1xi32>
    %481 = arith.cmpi sgt, %0, %480 : vector<2x1xi32>
    %c2_i32_123 = arith.constant 2 : i32
    %482 = vector.broadcast %c2_i32_123 : i32 to vector<2x1xi32>
    %483 = arith.cmpi sgt, %0, %482 : vector<2x1xi32>
    %cst_124 = arith.constant 0.000000e+00 : f32
    %484 = vector.shape_cast %481 : vector<2x1xi1> to vector<2x1xi1>
    %485 = vector.broadcast %484 : vector<2x1xi1> to vector<2x32xi1>
    %486 = vector.broadcast %cst_124 : f32 to vector<2x32xf32>
    %487 = arith.select %485, %450, %486 : vector<2x32xi1>, vector<2x32xf32>
    %c10_125 = arith.constant 10 : index
    %c0_126 = arith.constant 0 : index
    %488 = vector.load %arg16[%c10_125, %c0_126] : memref<16x64xf32, #tpu.memory_space<vmem>>, vector<2x32xf32>
    tpu.vector_store %arg16[%c10_125, %c0_126], %487 {strides = array<i32>} : memref<16x64xf32, #tpu.memory_space<vmem>>, vector<2x32xf32>,
    %cst_127 = arith.constant 0.000000e+00 : f32
    %489 = vector.shape_cast %483 : vector<2x1xi1> to vector<2x1xi1>
    %490 = vector.broadcast %489 : vector<2x1xi1> to vector<2x32xi1>
    %491 = vector.broadcast %cst_127 : f32 to vector<2x32xf32>
    %492 = arith.select %490, %479, %491 : vector<2x32xi1>, vector<2x32xf32>
    %c4_128 = arith.constant 4 : index
    %c32_129 = arith.constant 32 : index
    %493 = vector.load %arg16[%c4_128, %c32_129] : memref<16x64xf32, #tpu.memory_space<vmem>>, vector<2x32xf32>
    tpu.vector_store %arg16[%c4_128, %c32_129], %492 {strides = array<i32>} : memref<16x64xf32, #tpu.memory_space<vmem>>, vector<2x32xf32>,
    %494 = vector.shape_cast %481 : vector<2x1xi1> to vector<2x1xi1>
    %495 = vector.broadcast %494 : vector<2x1xi1> to vector<2x32xi1>
    %496 = arith.select %495, %450, %416 : vector<2x32xi1>, vector<2x32xf32>
    %497 = vector.shape_cast %483 : vector<2x1xi1> to vector<2x1xi1>
    %498 = vector.broadcast %497 : vector<2x1xi1> to vector<2x32xi1>
    %499 = arith.select %498, %479, %419 : vector<2x32xi1>, vector<2x32xf32>
    %c12_130 = arith.constant 12 : index
    %c0_131 = arith.constant 0 : index
    %500 = vector.load %arg14[%c12_130, %c0_131] : memref<16x96xf32, #tpu.memory_space<vmem>>, vector<2x96xf32>
    %c2_132 = arith.constant 2 : index
    %c0_133 = arith.constant 0 : index
    %501 = vector.load %arg15[%c2_132, %c0_133] : memref<16x96xf32, #tpu.memory_space<vmem>>, vector<2x96xf32>
    %cst_134 = arith.constant dense<0.000000e+00> : vector<2x96xf32>
    %502 = tpu.matmul %496, %14, %cst_134 {dimension_numbers = #tpu.dot_dimension_numbers<[1], [0], [0], [1], [0, 0, 1, 1], [], []>} : vector<2x32xf32>, vector<32x96xf32>, vector<2x96xf32> -> vector<2x96xf32>
    %503 = vector.extract_strided_slice %500 {offsets = [0, 0], sizes = [2, 32], strides = [1, 1]} : vector<2x96xf32> to vector<2x32xf32>
    %504 = vector.extract_strided_slice %502 {offsets = [0, 0], sizes = [2, 32], strides = [1, 1]} : vector<2x96xf32> to vector<2x32xf32>
    %505 = arith.addf %503, %504 : vector<2x32xf32>
    %506 = arith.negf %505 : vector<2x32xf32>
    %507 = math.exp %506 : vector<2x32xf32>
    %cst_135 = arith.constant 1.000000e+00 : f32
    %508 = vector.broadcast %cst_135 : f32 to vector<2x32xf32>
    %509 = arith.addf %508, %507 : vector<2x32xf32>
    %510 = arith.divf %508, %509 : vector<2x32xf32>
    %511 = vector.extract_strided_slice %500 {offsets = [0, 32], sizes = [2, 32], strides = [1, 1]} : vector<2x96xf32> to vector<2x32xf32>
    %512 = vector.extract_strided_slice %502 {offsets = [0, 32], sizes = [2, 32], strides = [1, 1]} : vector<2x96xf32> to vector<2x32xf32>
    %513 = arith.addf %511, %512 : vector<2x32xf32>
    %514 = arith.negf %513 : vector<2x32xf32>
    %515 = math.exp %514 : vector<2x32xf32>
    %cst_136 = arith.constant 1.000000e+00 : f32
    %516 = vector.broadcast %cst_136 : f32 to vector<2x32xf32>
    %517 = arith.addf %516, %515 : vector<2x32xf32>
    %518 = arith.divf %516, %517 : vector<2x32xf32>
    %519 = vector.extract_strided_slice %500 {offsets = [0, 64], sizes = [2, 32], strides = [1, 1]} : vector<2x96xf32> to vector<2x32xf32>
    %520 = vector.extract_strided_slice %502 {offsets = [0, 64], sizes = [2, 32], strides = [1, 1]} : vector<2x96xf32> to vector<2x32xf32>
    %521 = vector.broadcast %16 : vector<1x32xf32> to vector<2x32xf32>
    %522 = arith.addf %520, %521 : vector<2x32xf32>
    %523 = arith.mulf %510, %522 : vector<2x32xf32>
    %524 = arith.addf %519, %523 : vector<2x32xf32>
    %525 = math.tanh %524 : vector<2x32xf32>
    %cst_137 = arith.constant 1.000000e+00 : f32
    %526 = vector.broadcast %cst_137 : f32 to vector<2x32xf32>
    %527 = arith.subf %526, %518 : vector<2x32xf32>
    %528 = arith.mulf %527, %525 : vector<2x32xf32>
    %529 = arith.mulf %518, %496 : vector<2x32xf32>
    %530 = arith.addf %528, %529 : vector<2x32xf32>
    %cst_138 = arith.constant dense<0.000000e+00> : vector<2x96xf32>
    %531 = tpu.matmul %499, %15, %cst_138 {dimension_numbers = #tpu.dot_dimension_numbers<[1], [0], [0], [1], [0, 0, 1, 1], [], []>} : vector<2x32xf32>, vector<32x96xf32>, vector<2x96xf32> -> vector<2x96xf32>
    %532 = vector.extract_strided_slice %501 {offsets = [0, 0], sizes = [2, 32], strides = [1, 1]} : vector<2x96xf32> to vector<2x32xf32>
    %533 = vector.extract_strided_slice %531 {offsets = [0, 0], sizes = [2, 32], strides = [1, 1]} : vector<2x96xf32> to vector<2x32xf32>
    %534 = arith.addf %532, %533 : vector<2x32xf32>
    %535 = arith.negf %534 : vector<2x32xf32>
    %536 = math.exp %535 : vector<2x32xf32>
    %cst_139 = arith.constant 1.000000e+00 : f32
    %537 = vector.broadcast %cst_139 : f32 to vector<2x32xf32>
    %538 = arith.addf %537, %536 : vector<2x32xf32>
    %539 = arith.divf %537, %538 : vector<2x32xf32>
    %540 = vector.extract_strided_slice %501 {offsets = [0, 32], sizes = [2, 32], strides = [1, 1]} : vector<2x96xf32> to vector<2x32xf32>
    %541 = vector.extract_strided_slice %531 {offsets = [0, 32], sizes = [2, 32], strides = [1, 1]} : vector<2x96xf32> to vector<2x32xf32>
    %542 = arith.addf %540, %541 : vector<2x32xf32>
    %543 = arith.negf %542 : vector<2x32xf32>
    %544 = math.exp %543 : vector<2x32xf32>
    %cst_140 = arith.constant 1.000000e+00 : f32
    %545 = vector.broadcast %cst_140 : f32 to vector<2x32xf32>
    %546 = arith.addf %545, %544 : vector<2x32xf32>
    %547 = arith.divf %545, %546 : vector<2x32xf32>
    %548 = vector.extract_strided_slice %501 {offsets = [0, 64], sizes = [2, 32], strides = [1, 1]} : vector<2x96xf32> to vector<2x32xf32>
    %549 = vector.extract_strided_slice %531 {offsets = [0, 64], sizes = [2, 32], strides = [1, 1]} : vector<2x96xf32> to vector<2x32xf32>
    %550 = vector.broadcast %17 : vector<1x32xf32> to vector<2x32xf32>
    %551 = arith.addf %549, %550 : vector<2x32xf32>
    %552 = arith.mulf %539, %551 : vector<2x32xf32>
    %553 = arith.addf %548, %552 : vector<2x32xf32>
    %554 = math.tanh %553 : vector<2x32xf32>
    %cst_141 = arith.constant 1.000000e+00 : f32
    %555 = vector.broadcast %cst_141 : f32 to vector<2x32xf32>
    %556 = arith.subf %555, %547 : vector<2x32xf32>
    %557 = arith.mulf %556, %554 : vector<2x32xf32>
    %558 = arith.mulf %547, %499 : vector<2x32xf32>
    %559 = arith.addf %557, %558 : vector<2x32xf32>
    %c6_i32_142 = arith.constant 6 : i32
    %560 = vector.broadcast %c6_i32_142 : i32 to vector<2x1xi32>
    %561 = arith.cmpi sgt, %0, %560 : vector<2x1xi32>
    %c1_i32_143 = arith.constant 1 : i32
    %562 = vector.broadcast %c1_i32_143 : i32 to vector<2x1xi32>
    %563 = arith.cmpi sgt, %0, %562 : vector<2x1xi32>
    %cst_144 = arith.constant 0.000000e+00 : f32
    %564 = vector.shape_cast %561 : vector<2x1xi1> to vector<2x1xi1>
    %565 = vector.broadcast %564 : vector<2x1xi1> to vector<2x32xi1>
    %566 = vector.broadcast %cst_144 : f32 to vector<2x32xf32>
    %567 = arith.select %565, %530, %566 : vector<2x32xi1>, vector<2x32xf32>
    %c12_145 = arith.constant 12 : index
    %c0_146 = arith.constant 0 : index
    %568 = vector.load %arg16[%c12_145, %c0_146] : memref<16x64xf32, #tpu.memory_space<vmem>>, vector<2x32xf32>
    tpu.vector_store %arg16[%c12_145, %c0_146], %567 {strides = array<i32>} : memref<16x64xf32, #tpu.memory_space<vmem>>, vector<2x32xf32>,
    %cst_147 = arith.constant 0.000000e+00 : f32
    %569 = vector.shape_cast %563 : vector<2x1xi1> to vector<2x1xi1>
    %570 = vector.broadcast %569 : vector<2x1xi1> to vector<2x32xi1>
    %571 = vector.broadcast %cst_147 : f32 to vector<2x32xf32>
    %572 = arith.select %570, %559, %571 : vector<2x32xi1>, vector<2x32xf32>
    %c2_148 = arith.constant 2 : index
    %c32_149 = arith.constant 32 : index
    %573 = vector.load %arg16[%c2_148, %c32_149] : memref<16x64xf32, #tpu.memory_space<vmem>>, vector<2x32xf32>
    tpu.vector_store %arg16[%c2_148, %c32_149], %572 {strides = array<i32>} : memref<16x64xf32, #tpu.memory_space<vmem>>, vector<2x32xf32>,
    %574 = vector.shape_cast %561 : vector<2x1xi1> to vector<2x1xi1>
    %575 = vector.broadcast %574 : vector<2x1xi1> to vector<2x32xi1>
    %576 = arith.select %575, %530, %496 : vector<2x32xi1>, vector<2x32xf32>
    %577 = vector.shape_cast %563 : vector<2x1xi1> to vector<2x1xi1>
    %578 = vector.broadcast %577 : vector<2x1xi1> to vector<2x32xi1>
    %579 = arith.select %578, %559, %499 : vector<2x32xi1>, vector<2x32xf32>
    %c14_150 = arith.constant 14 : index
    %c0_151 = arith.constant 0 : index
    %580 = vector.load %arg14[%c14_150, %c0_151] : memref<16x96xf32, #tpu.memory_space<vmem>>, vector<2x96xf32>
    %c0_152 = arith.constant 0 : index
    %c0_153 = arith.constant 0 : index
    %581 = vector.load %arg15[%c0_152, %c0_153] : memref<16x96xf32, #tpu.memory_space<vmem>>, vector<2x96xf32>
    %cst_154 = arith.constant dense<0.000000e+00> : vector<2x96xf32>
    %582 = tpu.matmul %576, %14, %cst_154 {dimension_numbers = #tpu.dot_dimension_numbers<[1], [0], [0], [1], [0, 0, 1, 1], [], []>} : vector<2x32xf32>, vector<32x96xf32>, vector<2x96xf32> -> vector<2x96xf32>
    %583 = vector.extract_strided_slice %580 {offsets = [0, 0], sizes = [2, 32], strides = [1, 1]} : vector<2x96xf32> to vector<2x32xf32>
    %584 = vector.extract_strided_slice %582 {offsets = [0, 0], sizes = [2, 32], strides = [1, 1]} : vector<2x96xf32> to vector<2x32xf32>
    %585 = arith.addf %583, %584 : vector<2x32xf32>
    %586 = arith.negf %585 : vector<2x32xf32>
    %587 = math.exp %586 : vector<2x32xf32>
    %cst_155 = arith.constant 1.000000e+00 : f32
    %588 = vector.broadcast %cst_155 : f32 to vector<2x32xf32>
    %589 = arith.addf %588, %587 : vector<2x32xf32>
    %590 = arith.divf %588, %589 : vector<2x32xf32>
    %591 = vector.extract_strided_slice %580 {offsets = [0, 32], sizes = [2, 32], strides = [1, 1]} : vector<2x96xf32> to vector<2x32xf32>
    %592 = vector.extract_strided_slice %582 {offsets = [0, 32], sizes = [2, 32], strides = [1, 1]} : vector<2x96xf32> to vector<2x32xf32>
    %593 = arith.addf %591, %592 : vector<2x32xf32>
    %594 = arith.negf %593 : vector<2x32xf32>
    %595 = math.exp %594 : vector<2x32xf32>
    %cst_156 = arith.constant 1.000000e+00 : f32
    %596 = vector.broadcast %cst_156 : f32 to vector<2x32xf32>
    %597 = arith.addf %596, %595 : vector<2x32xf32>
    %598 = arith.divf %596, %597 : vector<2x32xf32>
    %599 = vector.extract_strided_slice %580 {offsets = [0, 64], sizes = [2, 32], strides = [1, 1]} : vector<2x96xf32> to vector<2x32xf32>
    %600 = vector.extract_strided_slice %582 {offsets = [0, 64], sizes = [2, 32], strides = [1, 1]} : vector<2x96xf32> to vector<2x32xf32>
    %601 = vector.broadcast %16 : vector<1x32xf32> to vector<2x32xf32>
    %602 = arith.addf %600, %601 : vector<2x32xf32>
    %603 = arith.mulf %590, %602 : vector<2x32xf32>
    %604 = arith.addf %599, %603 : vector<2x32xf32>
    %605 = math.tanh %604 : vector<2x32xf32>
    %cst_157 = arith.constant 1.000000e+00 : f32
    %606 = vector.broadcast %cst_157 : f32 to vector<2x32xf32>
    %607 = arith.subf %606, %598 : vector<2x32xf32>
    %608 = arith.mulf %607, %605 : vector<2x32xf32>
    %609 = arith.mulf %598, %576 : vector<2x32xf32>
    %610 = arith.addf %608, %609 : vector<2x32xf32>
    %cst_158 = arith.constant dense<0.000000e+00> : vector<2x96xf32>
    %611 = tpu.matmul %579, %15, %cst_158 {dimension_numbers = #tpu.dot_dimension_numbers<[1], [0], [0], [1], [0, 0, 1, 1], [], []>} : vector<2x32xf32>, vector<32x96xf32>, vector<2x96xf32> -> vector<2x96xf32>
    %612 = vector.extract_strided_slice %581 {offsets = [0, 0], sizes = [2, 32], strides = [1, 1]} : vector<2x96xf32> to vector<2x32xf32>
    %613 = vector.extract_strided_slice %611 {offsets = [0, 0], sizes = [2, 32], strides = [1, 1]} : vector<2x96xf32> to vector<2x32xf32>
    %614 = arith.addf %612, %613 : vector<2x32xf32>
    %615 = arith.negf %614 : vector<2x32xf32>
    %616 = math.exp %615 : vector<2x32xf32>
    %cst_159 = arith.constant 1.000000e+00 : f32
    %617 = vector.broadcast %cst_159 : f32 to vector<2x32xf32>
    %618 = arith.addf %617, %616 : vector<2x32xf32>
    %619 = arith.divf %617, %618 : vector<2x32xf32>
    %620 = vector.extract_strided_slice %581 {offsets = [0, 32], sizes = [2, 32], strides = [1, 1]} : vector<2x96xf32> to vector<2x32xf32>
    %621 = vector.extract_strided_slice %611 {offsets = [0, 32], sizes = [2, 32], strides = [1, 1]} : vector<2x96xf32> to vector<2x32xf32>
    %622 = arith.addf %620, %621 : vector<2x32xf32>
    %623 = arith.negf %622 : vector<2x32xf32>
    %624 = math.exp %623 : vector<2x32xf32>
    %cst_160 = arith.constant 1.000000e+00 : f32
    %625 = vector.broadcast %cst_160 : f32 to vector<2x32xf32>
    %626 = arith.addf %625, %624 : vector<2x32xf32>
    %627 = arith.divf %625, %626 : vector<2x32xf32>
    %628 = vector.extract_strided_slice %581 {offsets = [0, 64], sizes = [2, 32], strides = [1, 1]} : vector<2x96xf32> to vector<2x32xf32>
    %629 = vector.extract_strided_slice %611 {offsets = [0, 64], sizes = [2, 32], strides = [1, 1]} : vector<2x96xf32> to vector<2x32xf32>
    %630 = vector.broadcast %17 : vector<1x32xf32> to vector<2x32xf32>
    %631 = arith.addf %629, %630 : vector<2x32xf32>
    %632 = arith.mulf %619, %631 : vector<2x32xf32>
    %633 = arith.addf %628, %632 : vector<2x32xf32>
    %634 = math.tanh %633 : vector<2x32xf32>
    %cst_161 = arith.constant 1.000000e+00 : f32
    %635 = vector.broadcast %cst_161 : f32 to vector<2x32xf32>
    %636 = arith.subf %635, %627 : vector<2x32xf32>
    %637 = arith.mulf %636, %634 : vector<2x32xf32>
    %638 = arith.mulf %627, %579 : vector<2x32xf32>
    %639 = arith.addf %637, %638 : vector<2x32xf32>
    %c7_i32_162 = arith.constant 7 : i32
    %640 = vector.broadcast %c7_i32_162 : i32 to vector<2x1xi32>
    %641 = arith.cmpi sgt, %0, %640 : vector<2x1xi32>
    %c0_i32_163 = arith.constant 0 : i32
    %642 = vector.broadcast %c0_i32_163 : i32 to vector<2x1xi32>
    %643 = arith.cmpi sgt, %0, %642 : vector<2x1xi32>
    %cst_164 = arith.constant 0.000000e+00 : f32
    %644 = vector.shape_cast %641 : vector<2x1xi1> to vector<2x1xi1>
    %645 = vector.broadcast %644 : vector<2x1xi1> to vector<2x32xi1>
    %646 = vector.broadcast %cst_164 : f32 to vector<2x32xf32>
    %647 = arith.select %645, %610, %646 : vector<2x32xi1>, vector<2x32xf32>
    %c14_165 = arith.constant 14 : index
    %c0_166 = arith.constant 0 : index
    %648 = vector.load %arg16[%c14_165, %c0_166] : memref<16x64xf32, #tpu.memory_space<vmem>>, vector<2x32xf32>
    tpu.vector_store %arg16[%c14_165, %c0_166], %647 {strides = array<i32>} : memref<16x64xf32, #tpu.memory_space<vmem>>, vector<2x32xf32>,
    %cst_167 = arith.constant 0.000000e+00 : f32
    %649 = vector.shape_cast %643 : vector<2x1xi1> to vector<2x1xi1>
    %650 = vector.broadcast %649 : vector<2x1xi1> to vector<2x32xi1>
    %651 = vector.broadcast %cst_167 : f32 to vector<2x32xf32>
    %652 = arith.select %650, %639, %651 : vector<2x32xi1>, vector<2x32xf32>
    %c0_168 = arith.constant 0 : index
    %c32_169 = arith.constant 32 : index
    %653 = vector.load %arg16[%c0_168, %c32_169] : memref<16x64xf32, #tpu.memory_space<vmem>>, vector<2x32xf32>
    tpu.vector_store %arg16[%c0_168, %c32_169], %652 {strides = array<i32>} : memref<16x64xf32, #tpu.memory_space<vmem>>, vector<2x32xf32>,
    %c0_170 = arith.constant 0 : index
    %c0_171 = arith.constant 0 : index
    %654 = vector.load %arg16[%c0_170, %c0_171] : memref<16x64xf32, #tpu.memory_space<vmem>>, vector<16x64xf32>
    %c0_172 = arith.constant 0 : index
    %c0_173 = arith.constant 0 : index
    %655 = vector.load %arg11[%c0_172, %c0_173] : memref<64x4xf32, #tpu.memory_space<vmem>>, vector<64x4xf32>
    %cst_174 = arith.constant dense<0.000000e+00> : vector<16x4xf32>
    %656 = tpu.matmul %654, %655, %cst_174 {dimension_numbers = #tpu.dot_dimension_numbers<[1], [0], [0], [1], [0, 0, 1, 1], [], []>} : vector<16x64xf32>, vector<64x4xf32>, vector<16x4xf32> -> vector<16x4xf32>
    %c0_175 = arith.constant 0 : index
    %c0_176 = arith.constant 0 : index
    %657 = vector.load %arg12[%c0_175, %c0_176] : memref<1x4xf32, #tpu.memory_space<vmem>>, vector<1x4xf32>
    %658 = vector.broadcast %657 : vector<1x4xf32> to vector<16x4xf32>
    %659 = arith.addf %656, %658 : vector<16x4xf32>
    %c0_177 = arith.constant 0 : index
    %c0_178 = arith.constant 0 : index
    %660 = vector.load %arg13[%c0_177, %c0_178] : memref<16x4xf32, #tpu.memory_space<vmem>>, vector<16x4xf32>
    tpu.vector_store %arg13[%c0_177, %c0_178], %659 {strides = array<i32>} : memref<16x4xf32, #tpu.memory_space<vmem>>, vector<16x4xf32>,
    return
  }
  func.func @transform_0(%arg0: i32) -> (i32, i32) {
    %c0_i32 = arith.constant 0 : i32
    %c0_i32_0 = arith.constant 0 : i32
    %c0_i32_1 = arith.constant 0 : i32
    return %c0_i32, %c0_i32_0 : i32, i32
  }
  func.func @transform_1(%arg0: i32) -> (i32, i32) {
    %c0_i32 = arith.constant 0 : i32
    %c0_i32_0 = arith.constant 0 : i32
    %c0_i32_1 = arith.constant 0 : i32
    return %c0_i32, %c0_i32_0 : i32, i32
  }
  func.func @transform_2(%arg0: i32) -> (i32, i32) {
    %c0_i32 = arith.constant 0 : i32
    %c0_i32_0 = arith.constant 0 : i32
    %c0_i32_1 = arith.constant 0 : i32
    return %c0_i32, %c0_i32_0 : i32, i32
  }
  func.func @transform_3(%arg0: i32) -> (i32, i32) {
    %c0_i32 = arith.constant 0 : i32
    %c0_i32_0 = arith.constant 0 : i32
    %c0_i32_1 = arith.constant 0 : i32
    return %c0_i32, %c0_i32_0 : i32, i32
  }
  func.func @transform_4(%arg0: i32) -> (i32, i32) {
    %c0_i32 = arith.constant 0 : i32
    %c0_i32_0 = arith.constant 0 : i32
    %c0_i32_1 = arith.constant 0 : i32
    return %c0_i32, %c0_i32_0 : i32, i32
  }
  func.func @transform_5(%arg0: i32) -> (i32, i32) {
    %c0_i32 = arith.constant 0 : i32
    %c0_i32_0 = arith.constant 0 : i32
    %c0_i32_1 = arith.constant 0 : i32
    return %c0_i32, %c0_i32_0 : i32, i32
  }
  func.func @transform_6(%arg0: i32) -> (i32, i32) {
    %c0_i32 = arith.constant 0 : i32
    %c0_i32_0 = arith.constant 0 : i32
    %c0_i32_1 = arith.constant 0 : i32
    return %c0_i32, %c0_i32_0 : i32, i32
  }
  func.func @transform_7(%arg0: i32) -> (i32, i32) {
    %c0_i32 = arith.constant 0 : i32
    %c0_i32_0 = arith.constant 0 : i32
    %c0_i32_1 = arith.constant 0 : i32
    return %c0_i32, %c0_i32_0 : i32, i32
  }
  func.func @transform_8(%arg0: i32) -> (i32, i32) {
    %c0_i32 = arith.constant 0 : i32
    %c0_i32_0 = arith.constant 0 : i32
    %c0_i32_1 = arith.constant 0 : i32
    return %c0_i32, %c0_i32_0 : i32, i32
  }
  func.func @transform_9(%arg0: i32) -> (i32, i32) {
    %c0_i32 = arith.constant 0 : i32
    %c0_i32_0 = arith.constant 0 : i32
    %c0_i32_1 = arith.constant 0 : i32
    return %c0_i32, %c0_i32_0 : i32, i32
  }
  func.func @transform_10(%arg0: i32) -> (i32, i32) {
    %c0_i32 = arith.constant 0 : i32
    %c0_i32_0 = arith.constant 0 : i32
    %c0_i32_1 = arith.constant 0 : i32
    return %c0_i32, %c0_i32_0 : i32, i32
  }
  func.func @transform_11(%arg0: i32) -> (i32, i32) {
    %c0_i32 = arith.constant 0 : i32
    %c0_i32_0 = arith.constant 0 : i32
    %c0_i32_1 = arith.constant 0 : i32
    return %c0_i32, %c0_i32_0 : i32, i32
  }
  func.func @transform_12(%arg0: i32) -> (i32, i32) {
    %c0_i32 = arith.constant 0 : i32
    %c0_i32_0 = arith.constant 0 : i32
    %c0_i32_1 = arith.constant 0 : i32
    return %c0_i32, %c0_i32_0 : i32, i32
  }
}

</mosaic_0001>

<llo_original>
// kernel: tpu_custom_call.1
$region0: #{tpu_custom_call.1}
  #allocation0 [shape = 'u32[]', space=smem, size = 0x4, offset = 0x4, fixed_abs, tag = 'smem constant byte address 0x4 - core index']
  #allocation1 [shape = 'u32[144,128]{1,0:T(1,128)}', space=vmem, size = 0x12000, scoped, tag = 'internal scratch']
  #allocation2 [shape = 'f32[16,96]{1,0:T(8,128)}', space=vmem, size = 0x2000, scoped, tag = 'scratch operand']
  #allocation3 [shape = 'f32[16,96]{1,0:T(8,128)}', space=vmem, size = 0x2000, scoped, tag = 'scratch operand']
  #allocation4 [shape = 'f32[16,64]{1,0:T(8,128)}', space=vmem, size = 0x2000, scoped, tag = 'scratch operand']
  %s0 = inlined_call_operand.hbm [shape: f32[16,16], index: 0, kind: input, shape index: {}]
  %s1 = inlined_call_operand.vmem [shape: s32[2,1], index: 1, kind: input, shape index: {}]
  %s2 = inlined_call_operand.hbm [shape: f32[16,96], index: 2, kind: input, shape index: {}]
  %s3 = inlined_call_operand.hbm [shape: f32[16,96], index: 3, kind: input, shape index: {}]
  %s4 = inlined_call_operand.vmem [shape: f32[1,96], index: 4, kind: input, shape index: {}]
  %s5 = inlined_call_operand.vmem [shape: f32[1,96], index: 5, kind: input, shape index: {}]
  %s6 = inlined_call_operand.vmem [shape: f32[32,96], index: 6, kind: input, shape index: {}]
  %s7 = inlined_call_operand.vmem [shape: f32[32,96], index: 7, kind: input, shape index: {}]
  %s8 = inlined_call_operand.vmem [shape: f32[1,32], index: 8, kind: input, shape index: {}]
  %s9 = inlined_call_operand.vmem [shape: f32[1,32], index: 9, kind: input, shape index: {}]
  %s10 = inlined_call_operand.vmem [shape: f32[64,4], index: 10, kind: input, shape index: {}]
  %s11 = inlined_call_operand.vmem [shape: f32[1,4], index: 11, kind: input, shape index: {}]
  %s12 = inlined_call_operand.vmem [shape: f32[16,4], index: 12, kind: output, shape index: {}]
  %s13 = sld [smem:[#allocation0]]
  $region70: #{tpu_custom_call.1} parent=0
    _
  %s15 = ssub.s32 1, %s13
  %s16 = scalar_select 0, %s15, %s13
  $region1: #{tpu_custom_call.1} parent=0
    #allocation5 [shape = 'u8[8192]{0}', space=vmem, size = 0x2000, scoped, tag = 'input window, operand 0, single buffered']
    #allocation6 [shape = 's32[1]{0}', space=sflag, size = 0x4, scoped, tag = 'scoped memory for tpu_custom_call.1']
    #allocation7 [shape = 'u8[8192]{0}', space=vmem, size = 0x2000, scoped, tag = 'input window, operand 2, single buffered']
    #allocation8 [shape = 's32[1]{0}', space=sflag, size = 0x4, scoped, tag = 'scoped memory for tpu_custom_call.1']
    #allocation9 [shape = 'u8[8192]{0}', space=vmem, size = 0x2000, scoped, tag = 'input window, operand 3, single buffered']
    %17 = vsyncpa [#allocation6], 0
    %18 = vsyncpa [#allocation8], 0
    // Predicated region
    $region2: #{tpu_custom_call.1} parent=1 // pred_check
      _
    $region3: #{tpu_custom_call.1} parent=1 // pred_check_branch
      %20 = sbr.rel (0) target = $region5
    $region4: #{tpu_custom_call.1} parent=1 // pred_region
      %s22 = ssub.s32 256, 256
      %23 = vsyncadd [#allocation6], %s22
      %s24 = sshll.u32 [#allocation5], 4
      %s25 = int_to_ptr.vmem [resolvable:$true] %s24
      %30 = dma.hbm_to_vmem [thread:$0]  %s0, 256, %s25, [#allocation6], 128, 128, 8
    $region5: #{tpu_custom_call.1} parent=1 // pred_fallthru
      _
    // Predicated region
    $region6: #{tpu_custom_call.1} parent=1 // pred_check
      _
    $region7: #{tpu_custom_call.1} parent=1 // pred_check_branch
      %32 = sbr.rel (0) target = $region9
    $region8: #{tpu_custom_call.1} parent=1 // pred_region
      _
    $region9: #{tpu_custom_call.1} parent=1 // pred_fallthru
      _
    // Predicated region
    $region10: #{tpu_custom_call.1} parent=1 // pred_check
      _
    $region11: #{tpu_custom_call.1} parent=1 // pred_check_branch
      %34 = sbr.rel (0) target = $region13
    $region12: #{tpu_custom_call.1} parent=1 // pred_region
      %s36 = ssub.s32 256, 256
      %37 = vsyncadd [#allocation8], %s36
      %s38 = sshll.u32 [#allocation7], 4
      %s39 = int_to_ptr.vmem [resolvable:$true] %s38
      %44 = dma.hbm_to_vmem [thread:$0]  %s2, 256, %s39, [#allocation8], 128, 128, 8
    $region13: #{tpu_custom_call.1} parent=1 // pred_fallthru
      _
    // Predicated region
    $region14: #{tpu_custom_call.1} parent=1 // pred_check
      _
    $region15: #{tpu_custom_call.1} parent=1 // pred_check_branch
      %46 = sbr.rel (0) target = $region17
    $region16: #{tpu_custom_call.1} parent=1 // pred_region
      %s48 = ssub.s32 256, 256
      %49 = vsyncadd [#allocation8], %s48
      %s50 = sshll.u32 [#allocation9], 4
      %s51 = int_to_ptr.vmem [resolvable:$true] %s50
      %56 = dma.hbm_to_vmem [thread:$0]  %s3, 256, %s51, [#allocation8], 128, 128, 8
    $region17: #{tpu_custom_call.1} parent=1 // pred_fallthru
      _
    // Predicated region
    $region18: #{tpu_custom_call.1} parent=1 // pred_check
      _
    $region19: #{tpu_custom_call.1} parent=1 // pred_check_branch
      %58 = sbr.rel (0) target = $region21
    $region20: #{tpu_custom_call.1} parent=1 // pred_region
      _
    $region21: #{tpu_custom_call.1} parent=1 // pred_fallthru
      _
    // Predicated region
    $region22: #{tpu_custom_call.1} parent=1 // pred_check
      _
    $region23: #{tpu_custom_call.1} parent=1 // pred_check_branch
      %60 = sbr.rel (0) target = $region25
    $region24: #{tpu_custom_call.1} parent=1 // pred_region
      _
    $region25: #{tpu_custom_call.1} parent=1 // pred_fallthru
      _
    // Predicated region
    $region26: #{tpu_custom_call.1} parent=1 // pred_check
      _
    $region27: #{tpu_custom_call.1} parent=1 // pred_check_branch
      %62 = sbr.rel (0) target = $region29
    $region28: #{tpu_custom_call.1} parent=1 // pred_region
      _
    $region29: #{tpu_custom_call.1} parent=1 // pred_fallthru
      _
    // Predicated region
    $region30: #{tpu_custom_call.1} parent=1 // pred_check
      _
    $region31: #{tpu_custom_call.1} parent=1 // pred_check_branch
      %64 = sbr.rel (0) target = $region33
    $region32: #{tpu_custom_call.1} parent=1 // pred_region
      _
    $region33: #{tpu_custom_call.1} parent=1 // pred_fallthru
      _
    // Predicated region
    $region34: #{tpu_custom_call.1} parent=1 // pred_check
      _
    $region35: #{tpu_custom_call.1} parent=1 // pred_check_branch
      %66 = sbr.rel (0) target = $region37
    $region36: #{tpu_custom_call.1} parent=1 // pred_region
      _
    $region37: #{tpu_custom_call.1} parent=1 // pred_fallthru
      _
    // Predicated region
    $region38: #{tpu_custom_call.1} parent=1 // pred_check
      _
    $region39: #{tpu_custom_call.1} parent=1 // pred_check_branch
      %68 = sbr.rel (0) target = $region41
    $region40: #{tpu_custom_call.1} parent=1 // pred_region
      _
    $region41: #{tpu_custom_call.1} parent=1 // pred_fallthru
      _
    // Predicated region
    $region42: #{tpu_custom_call.1} parent=1 // pred_check
      _
    $region43: #{tpu_custom_call.1} parent=1 // pred_check_branch
      %70 = sbr.rel (0) target = $region45
    $region44: #{tpu_custom_call.1} parent=1 // pred_region
      _
    $region45: #{tpu_custom_call.1} parent=1 // pred_fallthru
      _
    // Predicated region
    $region46: #{tpu_custom_call.1} parent=1 // pred_check
      _
    $region47: #{tpu_custom_call.1} parent=1 // pred_check_branch
      %72 = sbr.rel (0) target = $region49
    $region48: #{tpu_custom_call.1} parent=1 // pred_region
      _
    $region49: #{tpu_custom_call.1} parent=1 // pred_fallthru
      _
    // Predicated region
    $region50: #{tpu_custom_call.1} parent=1 // pred_check
      _
    $region51: #{tpu_custom_call.1} parent=1 // pred_check_branch
      %74 = sbr.rel (0) target = $region53
    $region52: #{tpu_custom_call.1} parent=1 // pred_region
      %75 = dma.done [#allocation6], 256
    $region53: #{tpu_custom_call.1} parent=1 // pred_fallthru
      _
    // Predicated region
    $region54: #{tpu_custom_call.1} parent=1 // pred_check
      _
    $region55: #{tpu_custom_call.1} parent=1 // pred_check_branch
      %77 = sbr.rel (0) target = $region57
    $region56: #{tpu_custom_call.1} parent=1 // pred_region
      %78 = dma.done [#allocation8], 256
    $region57: #{tpu_custom_call.1} parent=1 // pred_fallthru
      _
    // Predicated region
    $region58: #{tpu_custom_call.1} parent=1 // pred_check
      _
    $region59: #{tpu_custom_call.1} parent=1 // pred_check_branch
      %80 = sbr.rel (0) target = $region61
    $region60: #{tpu_custom_call.1} parent=1 // pred_region
      %81 = dma.done [#allocation8], 256
    $region61: #{tpu_custom_call.1} parent=1 // pred_fallthru
      _
    %v82 = vld [vmem:[%s1] sm:$0x3]
    %v83 = vld [vmem:[#allocation5] sm:$0xff]
    %v84 = vld [vmem:[#allocation5 + $0x8] sm:$0xff]
    %v85 = vld [vmem:[#allocation7] sm:$0xff]
    %v86 = vld [vmem:[#allocation7 + $0x8] sm:$0xff]
    %v87 = vld [vmem:[%s4] sm:$0x1]
    %v89 = vlaneseq
    %v90 = vshrl.u32 %v89, 7
    %v91 = vsub.s32 0, %v90
    %v92 = vrot.slane %v87, %v91
    %vm94 = vcmask 130048
    %v96 = vsel %vm94, %v83, 0
    %v99 = vsel %vm94, %v84, 0
    %101 = vmatprep.subr.mxu0 0.0
    %102 = vmatpush1.msra.mxu0 0.0
    %103 = vmatprep.subr.mxu0 0.0
    %104 = vmatpush1.msra.mxu0 0.0
    %105 = vmatprep.subr.mxu0 0.0
    %106 = vmatpush1.msra.mxu0 0.0
    %107 = vmatprep.subr.mxu0 0.0
    %108 = vmatpush1.msra.mxu0 0.0
    %109 = vmatprep.subr.mxu0 0.0
    %110 = vmatpush1.msra.mxu0 0.0
    %111 = vmatprep.subr.mxu0 0.0
    %112 = vmatpush1.msra.mxu0 0.0
    %113 = vmatprep.subr.mxu0 0.0
    %114 = vmatpush1.msra.mxu0 0.0
    %115 = vmatprep.subr.mxu0 0.0
    %116 = vmatpush1.msra.mxu0 0.0
    %117 = vmatprep.subr.mxu0 0.0
    %118 = vmatpush1.msra.mxu0 0.0
    %119 = vmatprep.subr.mxu0 0.0
    %120 = vmatpush1.msra.mxu0 0.0
    %121 = vmatprep.subr.mxu0 0.0
    %122 = vmatpush1.msra.mxu0 0.0
    %123 = vmatprep.subr.mxu0 0.0
    %124 = vmatpush1.msra.mxu0 0.0
    %125 = vmatprep.subr.mxu0 0.0
    %126 = vmatpush1.msra.mxu0 0.0
    %127 = vmatprep.subr.mxu0 0.0
    %128 = vmatpush1.msra.mxu0 0.0
    %129 = vmatprep.subr.mxu0 0.0
    %130 = vmatpush1.msra.mxu0 %v86
    %131 = vmatprep.subr.mxu0 0.0
    %132 = vmatpush1.msra.mxu0 %v85
    %133 = vmatprep.subr.mxu0 0.0
    %134 = vmatpush2.msra.mxu0 0.0
    %135 = vmatprep.subr.mxu0 0.0
    %136 = vmatpush2.msra.mxu0 0.0
    %137 = vmatprep.subr.mxu0 0.0
    %138 = vmatpush2.msra.mxu0 0.0
    %139 = vmatprep.subr.mxu0 0.0
    %140 = vmatpush2.msra.mxu0 0.0
    %141 = vmatprep.subr.mxu0 0.0
    %142 = vmatpush2.msra.mxu0 0.0
    %143 = vmatprep.subr.mxu0 0.0
    %144 = vmatpush2.msra.mxu0 0.0
    %145 = vmatprep.subr.mxu0 0.0
    %146 = vmatpush2.msra.mxu0 0.0
    %147 = vmatprep.subr.mxu0 0.0
    %148 = vmatpush2.msra.mxu0 0.0
    %149 = vmatprep.subr.mxu0 0.0
    %150 = vmatpush2.msra.mxu0 0.0
    %151 = vmatprep.subr.mxu0 0.0
    %152 = vmatpush2.msra.mxu0 0.0
    %153 = vmatprep.subr.mxu0 0.0
    %154 = vmatpush2.msra.mxu0 0.0
    %155 = vmatprep.subr.mxu0 0.0
    %156 = vmatpush2.msra.mxu0 0.0
    %157 = vmatprep.subr.mxu0 0.0
    %158 = vmatpush2.msra.mxu0 0.0
    %159 = vmatprep.subr.mxu0 0.0
    %160 = vmatpush2.msra.mxu0 0.0
    %161 = vmatprep.subr.mxu0 0.0
    %162 = vmatpush2.msra.mxu0 0.0
    %163 = vmatprep.subr.mxu0 0.0
    %164 = vmatpush2.msra.mxu0 0.0
    %165 = vmatprep.mubr.f32.mxu0 0.0
    %166 = vmatmul.mubr.f32.gmra.mxu0 %v96
    %v167 = vpop.f32.mrf.mxu0
    %v168 = vadd.f32 %v92, %v167
    %v169 = vpop.f32.mrf.mxu0
    %170 = vmatprep.mubr.f32.mxu0 0.0
    %171 = vmatmul.mubr.f32.gmra.mxu0 %v99
    %v172 = vpop.f32.mrf.mxu0
    %v173 = vadd.f32 %v92, %v172
    %v174 = vpop.f32.mrf.mxu0
    %175 = vdwg.mxu0
    %vm176 = vcmask 785408
    %177 = vst.msk [vmem:[#allocation2] sm:$0xff] %vm176, %v168
    %178 = vst.msk [vmem:[#allocation2 + $0x8] sm:$0xff] %vm176, %v173
    %v179 = vld [vmem:[#allocation9] sm:$0xff]
    %v180 = vld [vmem:[#allocation9 + $0x8] sm:$0xff]
    %v181 = vld [vmem:[%s5] sm:$0x1]
    %v183 = vlaneseq
    %v184 = vshrl.u32 %v183, 7
    %v185 = vsub.s32 0, %v184
    %v186 = vrot.slane %v181, %v185
    %188 = vmatprep.subr.mxu0 0.0
    %189 = vmatpush1.msra.mxu0 0.0
    %190 = vmatprep.subr.mxu0 0.0
    %191 = vmatpush1.msra.mxu0 0.0
    %192 = vmatprep.subr.mxu0 0.0
    %193 = vmatpush1.msra.mxu0 0.0
    %194 = vmatprep.subr.mxu0 0.0
    %195 = vmatpush1.msra.mxu0 0.0
    %196 = vmatprep.subr.mxu0 0.0
    %197 = vmatpush1.msra.mxu0 0.0
    %198 = vmatprep.subr.mxu0 0.0
    %199 = vmatpush1.msra.mxu0 0.0
    %200 = vmatprep.subr.mxu0 0.0
    %201 = vmatpush1.msra.mxu0 0.0
    %202 = vmatprep.subr.mxu0 0.0
    %203 = vmatpush1.msra.mxu0 0.0
    %204 = vmatprep.subr.mxu0 0.0
    %205 = vmatpush1.msra.mxu0 0.0
    %206 = vmatprep.subr.mxu0 0.0
    %207 = vmatpush1.msra.mxu0 0.0
    %208 = vmatprep.subr.mxu0 0.0
    %209 = vmatpush1.msra.mxu0 0.0
    %210 = vmatprep.subr.mxu0 0.0
    %211 = vmatpush1.msra.mxu0 0.0
    %212 = vmatprep.subr.mxu0 0.0
    %213 = vmatpush1.msra.mxu0 0.0
    %214 = vmatprep.subr.mxu0 0.0
    %215 = vmatpush1.msra.mxu0 0.0
    %216 = vmatprep.subr.mxu0 0.0
    %217 = vmatpush1.msra.mxu0 %v180
    %218 = vmatprep.subr.mxu0 0.0
    %219 = vmatpush1.msra.mxu0 %v179
    %220 = vmatprep.subr.mxu0 0.0
    %221 = vmatpush2.msra.mxu0 0.0
    %222 = vmatprep.subr.mxu0 0.0
    %223 = vmatpush2.msra.mxu0 0.0
    %224 = vmatprep.subr.mxu0 0.0
    %225 = vmatpush2.msra.mxu0 0.0
    %226 = vmatprep.subr.mxu0 0.0
    %227 = vmatpush2.msra.mxu0 0.0
    %228 = vmatprep.subr.mxu0 0.0
    %229 = vmatpush2.msra.mxu0 0.0
    %230 = vmatprep.subr.mxu0 0.0
    %231 = vmatpush2.msra.mxu0 0.0
    %232 = vmatprep.subr.mxu0 0.0
    %233 = vmatpush2.msra.mxu0 0.0
    %234 = vmatprep.subr.mxu0 0.0
    %235 = vmatpush2.msra.mxu0 0.0
    %236 = vmatprep.subr.mxu0 0.0
    %237 = vmatpush2.msra.mxu0 0.0
    %238 = vmatprep.subr.mxu0 0.0
    %239 = vmatpush2.msra.mxu0 0.0
    %240 = vmatprep.subr.mxu0 0.0
    %241 = vmatpush2.msra.mxu0 0.0
    %242 = vmatprep.subr.mxu0 0.0
    %243 = vmatpush2.msra.mxu0 0.0
    %244 = vmatprep.subr.mxu0 0.0
    %245 = vmatpush2.msra.mxu0 0.0
    %246 = vmatprep.subr.mxu0 0.0
    %247 = vmatpush2.msra.mxu0 0.0
    %248 = vmatprep.subr.mxu0 0.0
    %249 = vmatpush2.msra.mxu0 0.0
    %250 = vmatprep.subr.mxu0 0.0
    %251 = vmatpush2.msra.mxu0 0.0
    %252 = vmatprep.mubr.f32.mxu0 0.0
    %253 = vmatmul.mubr.f32.gmra.mxu0 %v96
    %v254 = vpop.f32.mrf.mxu0
    %v255 = vadd.f32 %v186, %v254
    %v256 = vpop.f32.mrf.mxu0
    %257 = vmatprep.mubr.f32.mxu0 0.0
    %258 = vmatmul.mubr.f32.gmra.mxu0 %v99
    %v259 = vpop.f32.mrf.mxu0
    %v260 = vadd.f32 %v186, %v259
    %v261 = vpop.f32.mrf.mxu0
    %262 = vdwg.mxu0
    %263 = vst.msk [vmem:[#allocation3] sm:$0xff] %vm176, %v255
    %264 = vst.msk [vmem:[#allocation3 + $0x8] sm:$0xff] %vm176, %v260
    %v265 = vld [vmem:[%s6] sm:$0xff]
    %v266 = vld [vmem:[%s6 + $0x8] sm:$0xff]
    %v267 = vld [vmem:[%s6 + $0x10] sm:$0xff]
    %v268 = vld [vmem:[%s6 + $0x18] sm:$0xff]
    %v269 = vld [vmem:[%s7] sm:$0xff]
    %v270 = vld [vmem:[%s7 + $0x8] sm:$0xff]
    %v271 = vld [vmem:[%s7 + $0x10] sm:$0xff]
    %v272 = vld [vmem:[%s7 + $0x18] sm:$0xff]
    %v273 = vld [vmem:[%s8] sm:$0x1]
    %v274 = vld [vmem:[%s9] sm:$0x1]
    %v275 = vld [vmem:[#allocation2] sm:$0x3]
    %v276 = vld [vmem:[#allocation3 + $0xe] sm:$0x3]
    %vm277 = vcmask 261120
    %v279 = vsel %vm277, 0.0, 0
    %281 = vmatprep.subr.mxu0 0.0
    %282 = vmatpush1.msra.mxu0 0.0
    %283 = vmatprep.subr.mxu0 0.0
    %284 = vmatpush1.msra.mxu0 0.0
    %285 = vmatprep.subr.mxu0 0.0
    %286 = vmatpush1.msra.mxu0 0.0
    %287 = vmatprep.subr.mxu0 0.0
    %288 = vmatpush1.msra.mxu0 0.0
    %289 = vmatprep.subr.mxu0 0.0
    %290 = vmatpush1.msra.mxu0 0.0
    %291 = vmatprep.subr.mxu0 0.0
    %292 = vmatpush1.msra.mxu0 0.0
    %293 = vmatprep.subr.mxu0 0.0
    %294 = vmatpush1.msra.mxu0 0.0
    %295 = vmatprep.subr.mxu0 0.0
    %296 = vmatpush1.msra.mxu0 0.0
    %297 = vmatprep.subr.mxu0 0.0
    %298 = vmatpush1.msra.mxu0 0.0
    %299 = vmatprep.subr.mxu0 0.0
    %300 = vmatpush1.msra.mxu0 0.0
    %301 = vmatprep.subr.mxu0 0.0
    %302 = vmatpush1.msra.mxu0 0.0
    %303 = vmatprep.subr.mxu0 0.0
    %304 = vmatpush1.msra.mxu0 0.0
    %305 = vmatprep.subr.mxu0 0.0
    %306 = vmatpush1.msra.mxu0 %v268
    %307 = vmatprep.subr.mxu0 0.0
    %308 = vmatpush1.msra.mxu0 %v267
    %309 = vmatprep.subr.mxu0 0.0
    %310 = vmatpush1.msra.mxu0 %v266
    %311 = vmatprep.subr.mxu0 0.0
    %312 = vmatpush1.msra.mxu0 %v265
    %313 = vmatprep.subr.mxu0 0.0
    %314 = vmatpush2.msra.mxu0 0.0
    %315 = vmatprep.subr.mxu0 0.0
    %316 = vmatpush2.msra.mxu0 0.0
    %317 = vmatprep.subr.mxu0 0.0
    %318 = vmatpush2.msra.mxu0 0.0
    %319 = vmatprep.subr.mxu0 0.0
    %320 = vmatpush2.msra.mxu0 0.0
    %321 = vmatprep.subr.mxu0 0.0
    %322 = vmatpush2.msra.mxu0 0.0
    %323 = vmatprep.subr.mxu0 0.0
    %324 = vmatpush2.msra.mxu0 0.0
    %325 = vmatprep.subr.mxu0 0.0
    %326 = vmatpush2.msra.mxu0 0.0
    %327 = vmatprep.subr.mxu0 0.0
    %328 = vmatpush2.msra.mxu0 0.0
    %329 = vmatprep.subr.mxu0 0.0
    %330 = vmatpush2.msra.mxu0 0.0
    %331 = vmatprep.subr.mxu0 0.0
    %332 = vmatpush2.msra.mxu0 0.0
    %333 = vmatprep.subr.mxu0 0.0
    %334 = vmatpush2.msra.mxu0 0.0
    %335 = vmatprep.subr.mxu0 0.0
    %336 = vmatpush2.msra.mxu0 0.0
    %337 = vmatprep.subr.mxu0 0.0
    %338 = vmatpush2.msra.mxu0 0.0
    %339 = vmatprep.subr.mxu0 0.0
    %340 = vmatpush2.msra.mxu0 0.0
    %341 = vmatprep.subr.mxu0 0.0
    %342 = vmatpush2.msra.mxu0 0.0
    %343 = vmatprep.subr.mxu0 0.0
    %344 = vmatpush2.msra.mxu0 0.0
    %345 = vmatprep.mubr.f32.mxu0 0.0
    %346 = vmatmul.mubr.f32.gmra.mxu0 %v279
    %v347 = vpop.f32.mrf.mxu0
    %v348 = vadd.f32 0.0, %v347
    %v349 = vpop.f32.mrf.mxu0
    %350 = vdwg.mxu0
    %v351 = vadd.f32 %v275, %v348
    %v352 = vxor.u32 %v351, 2147483648
    %v353 = vmul.f32 %v352, 1.442695
    %v354 = vpow.pop %v353
    %v355 = vadd.f32 %v354, 1.0
    %v356 = vrcp.pop %v355
    %v357 = vmul.f32 1.0, %v356
    %v359 = vlaneseq
    %v360 = vshrl.u32 %v359, 7
    %v361 = vsub.s32 0, %v360
    %v362 = vrot.slane %v273, %v361
    %363 = vrot.lane.b32.xlu0 %v362, 64
    %v364 = vpop.permute.xlu0 %363
    %v366 = vadd.f32 %v348, %v364
    %368 = vrot.lane.b32.xlu0 %v366, 64
    %v369 = vpop.permute.xlu0 %368
    %v371 = vmul.f32 %v357, %v369
    %373 = vrot.lane.b32.xlu0 %v371, 64
    %v374 = vpop.permute.xlu0 %373
    %v376 = vadd.f32 %v275, %v374
    %v377 = vtanh.pop %v376
    %v378 = vsub.f32 1.0, %v357
    %380 = vrot.lane.b32.xlu0 %v377, 96
    %v381 = vpop.permute.xlu0 %380
    %v383 = vmul.f32 %v378, %v381
    %v384 = vmul.f32 %v357, 0.0
    %v385 = vadd.f32 %v383, %v384
    %386 = vmatprep.subr.mxu0 0.0
    %387 = vmatpush1.msra.mxu0 0.0
    %388 = vmatprep.subr.mxu0 0.0
    %389 = vmatpush1.msra.mxu0 0.0
    %390 = vmatprep.subr.mxu0 0.0
    %391 = vmatpush1.msra.mxu0 0.0
    %392 = vmatprep.subr.mxu0 0.0
    %393 = vmatpush1.msra.mxu0 0.0
    %394 = vmatprep.subr.mxu0 0.0
    %395 = vmatpush1.msra.mxu0 0.0
    %396 = vmatprep.subr.mxu0 0.0
    %397 = vmatpush1.msra.mxu0 0.0
    %398 = vmatprep.subr.mxu0 0.0
    %399 = vmatpush1.msra.mxu0 0.0
    %400 = vmatprep.subr.mxu0 0.0
    %401 = vmatpush1.msra.mxu0 0.0
    %402 = vmatprep.subr.mxu0 0.0
    %403 = vmatpush1.msra.mxu0 0.0
    %404 = vmatprep.subr.mxu0 0.0
    %405 = vmatpush1.msra.mxu0 0.0
    %406 = vmatprep.subr.mxu0 0.0
    %407 = vmatpush1.msra.mxu0 0.0
    %408 = vmatprep.subr.mxu0 0.0
    %409 = vmatpush1.msra.mxu0 0.0
    %410 = vmatprep.subr.mxu0 0.0
    %411 = vmatpush1.msra.mxu0 %v272
    %412 = vmatprep.subr.mxu0 0.0
    %413 = vmatpush1.msra.mxu0 %v271
    %414 = vmatprep.subr.mxu0 0.0
    %415 = vmatpush1.msra.mxu0 %v270
    %416 = vmatprep.subr.mxu0 0.0
    %417 = vmatpush1.msra.mxu0 %v269
    %418 = vmatprep.subr.mxu0 0.0
    %419 = vmatpush2.msra.mxu0 0.0
    %420 = vmatprep.subr.mxu0 0.0
    %421 = vmatpush2.msra.mxu0 0.0
    %422 = vmatprep.subr.mxu0 0.0
    %423 = vmatpush2.msra.mxu0 0.0
    %424 = vmatprep.subr.mxu0 0.0
    %425 = vmatpush2.msra.mxu0 0.0
    %426 = vmatprep.subr.mxu0 0.0
    %427 = vmatpush2.msra.mxu0 0.0
    %428 = vmatprep.subr.mxu0 0.0
    %429 = vmatpush2.msra.mxu0 0.0
    %430 = vmatprep.subr.mxu0 0.0
    %431 = vmatpush2.msra.mxu0 0.0
    %432 = vmatprep.subr.mxu0 0.0
    %433 = vmatpush2.msra.mxu0 0.0
    %434 = vmatprep.subr.mxu0 0.0
    %435 = vmatpush2.msra.mxu0 0.0
    %436 = vmatprep.subr.mxu0 0.0
    %437 = vmatpush2.msra.mxu0 0.0
    %438 = vmatprep.subr.mxu0 0.0
    %439 = vmatpush2.msra.mxu0 0.0
    %440 = vmatprep.subr.mxu0 0.0
    %441 = vmatpush2.msra.mxu0 0.0
    %442 = vmatprep.subr.mxu0 0.0
    %443 = vmatpush2.msra.mxu0 0.0
    %444 = vmatprep.subr.mxu0 0.0
    %445 = vmatpush2.msra.mxu0 0.0
    %446 = vmatprep.subr.mxu0 0.0
    %447 = vmatpush2.msra.mxu0 0.0
    %448 = vmatprep.subr.mxu0 0.0
    %449 = vmatpush2.msra.mxu0 0.0
    %450 = vmatprep.mubr.f32.mxu0 0.0
    %451 = vmatmul.mubr.f32.gmra.mxu0 %v279
    %v452 = vpop.f32.mrf.mxu0
    %v453 = vadd.f32 0.0, %v452
    %v454 = vpop.f32.mrf.mxu0
    %455 = vdwg.mxu0
    %v456 = vadd.f32 %v276, %v453
    %v457 = vxor.u32 %v456, 2147483648
    %v458 = vmul.f32 %v457, 1.442695
    %v459 = vpow.pop %v458
    %v460 = vadd.f32 %v459, 1.0
    %v461 = vrcp.pop %v460
    %v462 = vmul.f32 1.0, %v461
    %v464 = vlaneseq
    %v465 = vshrl.u32 %v464, 7
    %v466 = vsub.s32 0, %v465
    %v467 = vrot.slane %v274, %v466
    %468 = vrot.lane.b32.xlu0 %v467, 64
    %v469 = vpop.permute.xlu0 %468
    %v471 = vadd.f32 %v453, %v469
    %473 = vrot.lane.b32.xlu0 %v471, 64
    %v474 = vpop.permute.xlu0 %473
    %v476 = vmul.f32 %v462, %v474
    %478 = vrot.lane.b32.xlu0 %v476, 64
    %v479 = vpop.permute.xlu0 %478
    %v481 = vadd.f32 %v276, %v479
    %v482 = vtanh.pop %v481
    %v483 = vsub.f32 1.0, %v462
    %485 = vrot.lane.b32.xlu0 %v482, 96
    %v486 = vpop.permute.xlu0 %485
    %v488 = vmul.f32 %v483, %v486
    %v489 = vmul.f32 %v462, 0.0
    %v490 = vadd.f32 %v488, %v489
    %vm491 = vcmp.gt.s32.totalorder %v82, 0
    %vm492 = vcmp.gt.s32.totalorder %v82, 7
    %v493 = vsel %vm491, 1, 0
    %494 = vset.pattern.permute.xlu0 0
    %495 = vperm.xlu0 %494, %v493
    %v496 = vpop.permute.xlu0 %495
    %vm497 = vcmp.eq.s32.totalorder %v496, 1
    %v498 = vsel %vm497, %v385, 0.0
    %500 = vrot.lane.b32.xlu0 %v498, 96
    %v501 = vpop.permute.xlu0 %500
    %vm503 = vcmask 254976
    %504 = vst.msk [vmem:[#allocation4] sm:$0x3] %vm503, %v501
    %v505 = vsel %vm492, 1, 0
    %506 = vset.pattern.permute.xlu0 0
    %507 = vperm.xlu0 %506, %v505
    %v508 = vpop.permute.xlu0 %507
    %vm509 = vcmp.eq.s32.totalorder %v508, 1
    %v510 = vsel %vm509, %v490, 0.0
    %vm511 = vcmask 517376
    %512 = vst.msk [vmem:[#allocation4 + $0xe] sm:$0x3] %vm511, %v510
    %v513 = vld [vmem:[#allocation2 + $0x2] sm:$0x3]
    %v514 = vld [vmem:[#allocation3 + $0xc] sm:$0x3]
    %v515 = vsel %vm277, %v501, 0
    %517 = vmatprep.subr.mxu0 0.0
    %518 = vmatpush1.msra.mxu0 0.0
    %519 = vmatprep.subr.mxu0 0.0
    %520 = vmatpush1.msra.mxu0 0.0
    %521 = vmatprep.subr.mxu0 0.0
    %522 = vmatpush1.msra.mxu0 0.0
    %523 = vmatprep.subr.mxu0 0.0
    %524 = vmatpush1.msra.mxu0 0.0
    %525 = vmatprep.subr.mxu0 0.0
    %526 = vmatpush1.msra.mxu0 0.0
    %527 = vmatprep.subr.mxu0 0.0
    %528 = vmatpush1.msra.mxu0 0.0
    %529 = vmatprep.subr.mxu0 0.0
    %530 = vmatpush1.msra.mxu0 0.0
    %531 = vmatprep.subr.mxu0 0.0
    %532 = vmatpush1.msra.mxu0 0.0
    %533 = vmatprep.subr.mxu0 0.0
    %534 = vmatpush1.msra.mxu0 0.0
    %535 = vmatprep.subr.mxu0 0.0
    %536 = vmatpush1.msra.mxu0 0.0
    %537 = vmatprep.subr.mxu0 0.0
    %538 = vmatpush1.msra.mxu0 0.0
    %539 = vmatprep.subr.mxu0 0.0
    %540 = vmatpush1.msra.mxu0 0.0
    %541 = vmatprep.subr.mxu0 0.0
    %542 = vmatpush1.msra.mxu0 %v268
    %543 = vmatprep.subr.mxu0 0.0
    %544 = vmatpush1.msra.mxu0 %v267
    %545 = vmatprep.subr.mxu0 0.0
    %546 = vmatpush1.msra.mxu0 %v266
    %547 = vmatprep.subr.mxu0 0.0
    %548 = vmatpush1.msra.mxu0 %v265
    %549 = vmatprep.subr.mxu0 0.0
    %550 = vmatpush2.msra.mxu0 0.0
    %551 = vmatprep.subr.mxu0 0.0
    %552 = vmatpush2.msra.mxu0 0.0
    %553 = vmatprep.subr.mxu0 0.0
    %554 = vmatpush2.msra.mxu0 0.0
    %555 = vmatprep.subr.mxu0 0.0
    %556 = vmatpush2.msra.mxu0 0.0
    %557 = vmatprep.subr.mxu0 0.0
    %558 = vmatpush2.msra.mxu0 0.0
    %559 = vmatprep.subr.mxu0 0.0
    %560 = vmatpush2.msra.mxu0 0.0
    %561 = vmatprep.subr.mxu0 0.0
    %562 = vmatpush2.msra.mxu0 0.0
    %563 = vmatprep.subr.mxu0 0.0
    %564 = vmatpush2.msra.mxu0 0.0
    %565 = vmatprep.subr.mxu0 0.0
    %566 = vmatpush2.msra.mxu0 0.0
    %567 = vmatprep.subr.mxu0 0.0
    %568 = vmatpush2.msra.mxu0 0.0
    %569 = vmatprep.subr.mxu0 0.0
    %570 = vmatpush2.msra.mxu0 0.0
    %571 = vmatprep.subr.mxu0 0.0
    %572 = vmatpush2.msra.mxu0 0.0
    %573 = vmatprep.subr.mxu0 0.0
    %574 = vmatpush2.msra.mxu0 0.0
    %575 = vmatprep.subr.mxu0 0.0
    %576 = vmatpush2.msra.mxu0 0.0
    %577 = vmatprep.subr.mxu0 0.0
    %578 = vmatpush2.msra.mxu0 0.0
    %579 = vmatprep.subr.mxu0 0.0
    %580 = vmatpush2.msra.mxu0 0.0
    %581 = vmatprep.mubr.f32.mxu0 0.0
    %582 = vmatmul.mubr.f32.gmra.mxu0 %v515
    %v583 = vpop.f32.mrf.mxu0
    %v584 = vadd.f32 0.0, %v583
    %v585 = vpop.f32.mrf.mxu0
    %586 = vdwg.mxu0
    %v587 = vadd.f32 %v513, %v584
    %v588 = vxor.u32 %v587, 2147483648
    %v589 = vmul.f32 %v588, 1.442695
    %v590 = vpow.pop %v589
    %v591 = vadd.f32 %v590, 1.0
    %v592 = vrcp.pop %v591
    %v593 = vmul.f32 1.0, %v592
    %v594 = vadd.f32 %v584, %v364
    %596 = vrot.lane.b32.xlu0 %v594, 64
    %v597 = vpop.permute.xlu0 %596
    %v599 = vmul.f32 %v593, %v597
    %601 = vrot.lane.b32.xlu0 %v599, 64
    %v602 = vpop.permute.xlu0 %601
    %v604 = vadd.f32 %v513, %v602
    %v605 = vtanh.pop %v604
    %v606 = vsub.f32 1.0, %v593
    %608 = vrot.lane.b32.xlu0 %v605, 96
    %v609 = vpop.permute.xlu0 %608
    %v611 = vmul.f32 %v606, %v609
    %v612 = vmul.f32 %v593, %v498
    %v613 = vadd.f32 %v611, %v612
    %615 = vrot.lane.b32.xlu0 %v510, 96
    %v616 = vpop.permute.xlu0 %615
    %v617 = vsel %vm277, %v616, 0
    %619 = vmatprep.subr.mxu0 0.0
    %620 = vmatpush1.msra.mxu0 0.0
    %621 = vmatprep.subr.mxu0 0.0
    %622 = vmatpush1.msra.mxu0 0.0
    %623 = vmatprep.subr.mxu0 0.0
    %624 = vmatpush1.msra.mxu0 0.0
    %625 = vmatprep.subr.mxu0 0.0
    %626 = vmatpush1.msra.mxu0 0.0
    %627 = vmatprep.subr.mxu0 0.0
    %628 = vmatpush1.msra.mxu0 0.0
    %629 = vmatprep.subr.mxu0 0.0
    %630 = vmatpush1.msra.mxu0 0.0
    %631 = vmatprep.subr.mxu0 0.0
    %632 = vmatpush1.msra.mxu0 0.0
    %633 = vmatprep.subr.mxu0 0.0
    %634 = vmatpush1.msra.mxu0 0.0
    %635 = vmatprep.subr.mxu0 0.0
    %636 = vmatpush1.msra.mxu0 0.0
    %637 = vmatprep.subr.mxu0 0.0
    %638 = vmatpush1.msra.mxu0 0.0
    %639 = vmatprep.subr.mxu0 0.0
    %640 = vmatpush1.msra.mxu0 0.0
    %641 = vmatprep.subr.mxu0 0.0
    %642 = vmatpush1.msra.mxu0 0.0
    %643 = vmatprep.subr.mxu0 0.0
    %644 = vmatpush1.msra.mxu0 %v272
    %645 = vmatprep.subr.mxu0 0.0
    %646 = vmatpush1.msra.mxu0 %v271
    %647 = vmatprep.subr.mxu0 0.0
    %648 = vmatpush1.msra.mxu0 %v270
    %649 = vmatprep.subr.mxu0 0.0
    %650 = vmatpush1.msra.mxu0 %v269
    %651 = vmatprep.subr.mxu0 0.0
    %652 = vmatpush2.msra.mxu0 0.0
    %653 = vmatprep.subr.mxu0 0.0
    %654 = vmatpush2.msra.mxu0 0.0
    %655 = vmatprep.subr.mxu0 0.0
    %656 = vmatpush2.msra.mxu0 0.0
    %657 = vmatprep.subr.mxu0 0.0
    %658 = vmatpush2.msra.mxu0 0.0
    %659 = vmatprep.subr.mxu0 0.0
    %660 = vmatpush2.msra.mxu0 0.0
    %661 = vmatprep.subr.mxu0 0.0
    %662 = vmatpush2.msra.mxu0 0.0
    %663 = vmatprep.subr.mxu0 0.0
    %664 = vmatpush2.msra.mxu0 0.0
    %665 = vmatprep.subr.mxu0 0.0
    %666 = vmatpush2.msra.mxu0 0.0
    %667 = vmatprep.subr.mxu0 0.0
    %668 = vmatpush2.msra.mxu0 0.0
    %669 = vmatprep.subr.mxu0 0.0
    %670 = vmatpush2.msra.mxu0 0.0
    %671 = vmatprep.subr.mxu0 0.0
    %672 = vmatpush2.msra.mxu0 0.0
    %673 = vmatprep.subr.mxu0 0.0
    %674 = vmatpush2.msra.mxu0 0.0
    %675 = vmatprep.subr.mxu0 0.0
    %676 = vmatpush2.msra.mxu0 0.0
    %677 = vmatprep.subr.mxu0 0.0
    %678 = vmatpush2.msra.mxu0 0.0
    %679 = vmatprep.subr.mxu0 0.0
    %680 = vmatpush2.msra.mxu0 0.0
    %681 = vmatprep.subr.mxu0 0.0
    %682 = vmatpush2.msra.mxu0 0.0
    %683 = vmatprep.mubr.f32.mxu0 0.0
    %684 = vmatmul.mubr.f32.gmra.mxu0 %v617
    %v685 = vpop.f32.mrf.mxu0
    %v686 = vadd.f32 0.0, %v685
    %v687 = vpop.f32.mrf.mxu0
    %688 = vdwg.mxu0
    %v689 = vadd.f32 %v514, %v686
    %v690 = vxor.u32 %v689, 2147483648
    %v691 = vmul.f32 %v690, 1.442695
    %v692 = vpow.pop %v691
    %v693 = vadd.f32 %v692, 1.0
    %v694 = vrcp.pop %v693
    %v695 = vmul.f32 1.0, %v694
    %v696 = vadd.f32 %v686, %v469
    %698 = vrot.lane.b32.xlu0 %v696, 64
    %v699 = vpop.permute.xlu0 %698
    %v701 = vmul.f32 %v695, %v699
    %703 = vrot.lane.b32.xlu0 %v701, 64
    %v704 = vpop.permute.xlu0 %703
    %v706 = vadd.f32 %v514, %v704
    %v707 = vtanh.pop %v706
    %v708 = vsub.f32 1.0, %v695
    %710 = vrot.lane.b32.xlu0 %v707, 96
    %v711 = vpop.permute.xlu0 %710
    %v713 = vmul.f32 %v708, %v711
    %v714 = vmul.f32 %v695, %v510
    %v715 = vadd.f32 %v713, %v714
    %vm716 = vcmp.gt.s32.totalorder %v82, 1
    %vm717 = vcmp.gt.s32.totalorder %v82, 6
    %v718 = vsel %vm716, 1, 0
    %719 = vset.pattern.permute.xlu0 0
    %720 = vperm.xlu0 %719, %v718
    %v721 = vpop.permute.xlu0 %720
    %vm722 = vcmp.eq.s32.totalorder %v721, 1
    %v723 = vsel %vm722, %v613, 0.0
    %725 = vrot.lane.b32.xlu0 %v723, 96
    %v726 = vpop.permute.xlu0 %725
    %728 = vst.msk [vmem:[#allocation4 + $0x2] sm:$0x3] %vm503, %v726
    %v729 = vsel %vm717, 1, 0
    %730 = vset.pattern.permute.xlu0 0
    %731 = vperm.xlu0 %730, %v729
    %v732 = vpop.permute.xlu0 %731
    %vm733 = vcmp.eq.s32.totalorder %v732, 1
    %v734 = vsel %vm733, %v715, 0.0
    %735 = vst.msk [vmem:[#allocation4 + $0xc] sm:$0x3] %vm511, %v734
    %v736 = vsel %vm722, %v613, %v498
    %v737 = vsel %vm733, %v715, %v510
    %v738 = vld [vmem:[#allocation2 + $0x4] sm:$0x3]
    %v739 = vld [vmem:[#allocation3 + $0xa] sm:$0x3]
    %741 = vrot.lane.b32.xlu0 %v736, 96
    %v742 = vpop.permute.xlu0 %741
    %v743 = vsel %vm277, %v742, 0
    %745 = vmatprep.subr.mxu0 0.0
    %746 = vmatpush1.msra.mxu0 0.0
    %747 = vmatprep.subr.mxu0 0.0
    %748 = vmatpush1.msra.mxu0 0.0
    %749 = vmatprep.subr.mxu0 0.0
    %750 = vmatpush1.msra.mxu0 0.0
    %751 = vmatprep.subr.mxu0 0.0
    %752 = vmatpush1.msra.mxu0 0.0
    %753 = vmatprep.subr.mxu0 0.0
    %754 = vmatpush1.msra.mxu0 0.0
    %755 = vmatprep.subr.mxu0 0.0
    %756 = vmatpush1.msra.mxu0 0.0
    %757 = vmatprep.subr.mxu0 0.0
    %758 = vmatpush1.msra.mxu0 0.0
    %759 = vmatprep.subr.mxu0 0.0
    %760 = vmatpush1.msra.mxu0 0.0
    %761 = vmatprep.subr.mxu0 0.0
    %762 = vmatpush1.msra.mxu0 0.0
    %763 = vmatprep.subr.mxu0 0.0
    %764 = vmatpush1.msra.mxu0 0.0
    %765 = vmatprep.subr.mxu0 0.0
    %766 = vmatpush1.msra.mxu0 0.0
    %767 = vmatprep.subr.mxu0 0.0
    %768 = vmatpush1.msra.mxu0 0.0
    %769 = vmatprep.subr.mxu0 0.0
    %770 = vmatpush1.msra.mxu0 %v268
    %771 = vmatprep.subr.mxu0 0.0
    %772 = vmatpush1.msra.mxu0 %v267
    %773 = vmatprep.subr.mxu0 0.0
    %774 = vmatpush1.msra.mxu0 %v266
    %775 = vmatprep.subr.mxu0 0.0
    %776 = vmatpush1.msra.mxu0 %v265
    %777 = vmatprep.subr.mxu0 0.0
    %778 = vmatpush2.msra.mxu0 0.0
    %779 = vmatprep.subr.mxu0 0.0
    %780 = vmatpush2.msra.mxu0 0.0
    %781 = vmatprep.subr.mxu0 0.0
    %782 = vmatpush2.msra.mxu0 0.0
    %783 = vmatprep.subr.mxu0 0.0
    %784 = vmatpush2.msra.mxu0 0.0
    %785 = vmatprep.subr.mxu0 0.0
    %786 = vmatpush2.msra.mxu0 0.0
    %787 = vmatprep.subr.mxu0 0.0
    %788 = vmatpush2.msra.mxu0 0.0
    %789 = vmatprep.subr.mxu0 0.0
    %790 = vmatpush2.msra.mxu0 0.0
    %791 = vmatprep.subr.mxu0 0.0
    %792 = vmatpush2.msra.mxu0 0.0
    %793 = vmatprep.subr.mxu0 0.0
    %794 = vmatpush2.msra.mxu0 0.0
    %795 = vmatprep.subr.mxu0 0.0
    %796 = vmatpush2.msra.mxu0 0.0
    %797 = vmatprep.subr.mxu0 0.0
    %798 = vmatpush2.msra.mxu0 0.0
    %799 = vmatprep.subr.mxu0 0.0
    %800 = vmatpush2.msra.mxu0 0.0
    %801 = vmatprep.subr.mxu0 0.0
    %802 = vmatpush2.msra.mxu0 0.0
    %803 = vmatprep.subr.mxu0 0.0
    %804 = vmatpush2.msra.mxu0 0.0
    %805 = vmatprep.subr.mxu0 0.0
    %806 = vmatpush2.msra.mxu0 0.0
    %807 = vmatprep.subr.mxu0 0.0
    %808 = vmatpush2.msra.mxu0 0.0
    %809 = vmatprep.mubr.f32.mxu0 0.0
    %810 = vmatmul.mubr.f32.gmra.mxu0 %v743
    %v811 = vpop.f32.mrf.mxu0
    %v812 = vadd.f32 0.0, %v811
    %v813 = vpop.f32.mrf.mxu0
    %814 = vdwg.mxu0
    %v815 = vadd.f32 %v738, %v812
    %v816 = vxor.u32 %v815, 2147483648
    %v817 = vmul.f32 %v816, 1.442695
    %v818 = vpow.pop %v817
    %v819 = vadd.f32 %v818, 1.0
    %v820 = vrcp.pop %v819
    %v821 = vmul.f32 1.0, %v820
    %v822 = vadd.f32 %v812, %v364
    %824 = vrot.lane.b32.xlu0 %v822, 64
    %v825 = vpop.permute.xlu0 %824
    %v827 = vmul.f32 %v821, %v825
    %829 = vrot.lane.b32.xlu0 %v827, 64
    %v830 = vpop.permute.xlu0 %829
    %v832 = vadd.f32 %v738, %v830
    %v833 = vtanh.pop %v832
    %v834 = vsub.f32 1.0, %v821
    %836 = vrot.lane.b32.xlu0 %v833, 96
    %v837 = vpop.permute.xlu0 %836
    %v839 = vmul.f32 %v834, %v837
    %v840 = vmul.f32 %v821, %v736
    %v841 = vadd.f32 %v839, %v840
    %843 = vrot.lane.b32.xlu0 %v737, 96
    %v844 = vpop.permute.xlu0 %843
    %v845 = vsel %vm277, %v844, 0
    %847 = vmatprep.subr.mxu0 0.0
    %848 = vmatpush1.msra.mxu0 0.0
    %849 = vmatprep.subr.mxu0 0.0
    %850 = vmatpush1.msra.mxu0 0.0
    %851 = vmatprep.subr.mxu0 0.0
    %852 = vmatpush1.msra.mxu0 0.0
    %853 = vmatprep.subr.mxu0 0.0
    %854 = vmatpush1.msra.mxu0 0.0
    %855 = vmatprep.subr.mxu0 0.0
    %856 = vmatpush1.msra.mxu0 0.0
    %857 = vmatprep.subr.mxu0 0.0
    %858 = vmatpush1.msra.mxu0 0.0
    %859 = vmatprep.subr.mxu0 0.0
    %860 = vmatpush1.msra.mxu0 0.0
    %861 = vmatprep.subr.mxu0 0.0
    %862 = vmatpush1.msra.mxu0 0.0
    %863 = vmatprep.subr.mxu0 0.0
    %864 = vmatpush1.msra.mxu0 0.0
    %865 = vmatprep.subr.mxu0 0.0
    %866 = vmatpush1.msra.mxu0 0.0
    %867 = vmatprep.subr.mxu0 0.0
    %868 = vmatpush1.msra.mxu0 0.0
    %869 = vmatprep.subr.mxu0 0.0
    %870 = vmatpush1.msra.mxu0 0.0
    %871 = vmatprep.subr.mxu0 0.0
    %872 = vmatpush1.msra.mxu0 %v272
    %873 = vmatprep.subr.mxu0 0.0
    %874 = vmatpush1.msra.mxu0 %v271
    %875 = vmatprep.subr.mxu0 0.0
    %876 = vmatpush1.msra.mxu0 %v270
    %877 = vmatprep.subr.mxu0 0.0
    %878 = vmatpush1.msra.mxu0 %v269
    %879 = vmatprep.subr.mxu0 0.0
    %880 = vmatpush2.msra.mxu0 0.0
    %881 = vmatprep.subr.mxu0 0.0
    %882 = vmatpush2.msra.mxu0 0.0
    %883 = vmatprep.subr.mxu0 0.0
    %884 = vmatpush2.msra.mxu0 0.0
    %885 = vmatprep.subr.mxu0 0.0
    %886 = vmatpush2.msra.mxu0 0.0
    %887 = vmatprep.subr.mxu0 0.0
    %888 = vmatpush2.msra.mxu0 0.0
    %889 = vmatprep.subr.mxu0 0.0
    %890 = vmatpush2.msra.mxu0 0.0
    %891 = vmatprep.subr.mxu0 0.0
    %892 = vmatpush2.msra.mxu0 0.0
    %893 = vmatprep.subr.mxu0 0.0
    %894 = vmatpush2.msra.mxu0 0.0
    %895 = vmatprep.subr.mxu0 0.0
    %896 = vmatpush2.msra.mxu0 0.0
    %897 = vmatprep.subr.mxu0 0.0
    %898 = vmatpush2.msra.mxu0 0.0
    %899 = vmatprep.subr.mxu0 0.0
    %900 = vmatpush2.msra.mxu0 0.0
    %901 = vmatprep.subr.mxu0 0.0
    %902 = vmatpush2.msra.mxu0 0.0
    %903 = vmatprep.subr.mxu0 0.0
    %904 = vmatpush2.msra.mxu0 0.0
    %905 = vmatprep.subr.mxu0 0.0
    %906 = vmatpush2.msra.mxu0 0.0
    %907 = vmatprep.subr.mxu0 0.0
    %908 = vmatpush2.msra.mxu0 0.0
    %909 = vmatprep.subr.mxu0 0.0
    %910 = vmatpush2.msra.mxu0 0.0
    %911 = vmatprep.mubr.f32.mxu0 0.0
    %912 = vmatmul.mubr.f32.gmra.mxu0 %v845
    %v913 = vpop.f32.mrf.mxu0
    %v914 = vadd.f32 0.0, %v913
    %v915 = vpop.f32.mrf.mxu0
    %916 = vdwg.mxu0
    %v917 = vadd.f32 %v739, %v914
    %v918 = vxor.u32 %v917, 2147483648
    %v919 = vmul.f32 %v918, 1.442695
    %v920 = vpow.pop %v919
    %v921 = vadd.f32 %v920, 1.0
    %v922 = vrcp.pop %v921
    %v923 = vmul.f32 1.0, %v922
    %v924 = vadd.f32 %v914, %v469
    %926 = vrot.lane.b32.xlu0 %v924, 64
    %v927 = vpop.permute.xlu0 %926
    %v929 = vmul.f32 %v923, %v927
    %931 = vrot.lane.b32.xlu0 %v929, 64
    %v932 = vpop.permute.xlu0 %931
    %v934 = vadd.f32 %v739, %v932
    %v935 = vtanh.pop %v934
    %v936 = vsub.f32 1.0, %v923
    %938 = vrot.lane.b32.xlu0 %v935, 96
    %v939 = vpop.permute.xlu0 %938
    %v941 = vmul.f32 %v936, %v939
    %v942 = vmul.f32 %v923, %v737
    %v943 = vadd.f32 %v941, %v942
    %vm944 = vcmp.gt.s32.totalorder %v82, 2
    %vm945 = vcmp.gt.s32.totalorder %v82, 5
    %v946 = vsel %vm944, 1, 0
    %947 = vset.pattern.permute.xlu0 0
    %948 = vperm.xlu0 %947, %v946
    %v949 = vpop.permute.xlu0 %948
    %vm950 = vcmp.eq.s32.totalorder %v949, 1
    %v951 = vsel %vm950, %v841, 0.0
    %953 = vrot.lane.b32.xlu0 %v951, 96
    %v954 = vpop.permute.xlu0 %953
    %956 = vst.msk [vmem:[#allocation4 + $0x4] sm:$0x3] %vm503, %v954
    %v957 = vsel %vm945, 1, 0
    %958 = vset.pattern.permute.xlu0 0
    %959 = vperm.xlu0 %958, %v957
    %v960 = vpop.permute.xlu0 %959
    %vm961 = vcmp.eq.s32.totalorder %v960, 1
    %v962 = vsel %vm961, %v943, 0.0
    %963 = vst.msk [vmem:[#allocation4 + $0xa] sm:$0x3] %vm511, %v962
    %v964 = vsel %vm950, %v841, %v736
    %v965 = vsel %vm961, %v943, %v737
    %v966 = vld [vmem:[#allocation2 + $0x6] sm:$0x3]
    %v967 = vld [vmem:[#allocation3 + $0x8] sm:$0x3]
    %969 = vrot.lane.b32.xlu0 %v964, 96
    %v970 = vpop.permute.xlu0 %969
    %v971 = vsel %vm277, %v970, 0
    %973 = vmatprep.subr.mxu0 0.0
    %974 = vmatpush1.msra.mxu0 0.0
    %975 = vmatprep.subr.mxu0 0.0
    %976 = vmatpush1.msra.mxu0 0.0
    %977 = vmatprep.subr.mxu0 0.0
    %978 = vmatpush1.msra.mxu0 0.0
    %979 = vmatprep.subr.mxu0 0.0
    %980 = vmatpush1.msra.mxu0 0.0
    %981 = vmatprep.subr.mxu0 0.0
    %982 = vmatpush1.msra.mxu0 0.0
    %983 = vmatprep.subr.mxu0 0.0
    %984 = vmatpush1.msra.mxu0 0.0
    %985 = vmatprep.subr.mxu0 0.0
    %986 = vmatpush1.msra.mxu0 0.0
    %987 = vmatprep.subr.mxu0 0.0
    %988 = vmatpush1.msra.mxu0 0.0
    %989 = vmatprep.subr.mxu0 0.0
    %990 = vmatpush1.msra.mxu0 0.0
    %991 = vmatprep.subr.mxu0 0.0
    %992 = vmatpush1.msra.mxu0 0.0
    %993 = vmatprep.subr.mxu0 0.0
    %994 = vmatpush1.msra.mxu0 0.0
    %995 = vmatprep.subr.mxu0 0.0
    %996 = vmatpush1.msra.mxu0 0.0
    %997 = vmatprep.subr.mxu0 0.0
    %998 = vmatpush1.msra.mxu0 %v268
    %999 = vmatprep.subr.mxu0 0.0
    %1000 = vmatpush1.msra.mxu0 %v267
    %1001 = vmatprep.subr.mxu0 0.0
    %1002 = vmatpush1.msra.mxu0 %v266
    %1003 = vmatprep.subr.mxu0 0.0
    %1004 = vmatpush1.msra.mxu0 %v265
    %1005 = vmatprep.subr.mxu0 0.0
    %1006 = vmatpush2.msra.mxu0 0.0
    %1007 = vmatprep.subr.mxu0 0.0
    %1008 = vmatpush2.msra.mxu0 0.0
    %1009 = vmatprep.subr.mxu0 0.0
    %1010 = vmatpush2.msra.mxu0 0.0
    %1011 = vmatprep.subr.mxu0 0.0
    %1012 = vmatpush2.msra.mxu0 0.0
    %1013 = vmatprep.subr.mxu0 0.0
    %1014 = vmatpush2.msra.mxu0 0.0
    %1015 = vmatprep.subr.mxu0 0.0
    %1016 = vmatpush2.msra.mxu0 0.0
    %1017 = vmatprep.subr.mxu0 0.0
    %1018 = vmatpush2.msra.mxu0 0.0
    %1019 = vmatprep.subr.mxu0 0.0
    %1020 = vmatpush2.msra.mxu0 0.0
    %1021 = vmatprep.subr.mxu0 0.0
    %1022 = vmatpush2.msra.mxu0 0.0
    %1023 = vmatprep.subr.mxu0 0.0
    %1024 = vmatpush2.msra.mxu0 0.0
    %1025 = vmatprep.subr.mxu0 0.0
    %1026 = vmatpush2.msra.mxu0 0.0
    %1027 = vmatprep.subr.mxu0 0.0
    %1028 = vmatpush2.msra.mxu0 0.0
    %1029 = vmatprep.subr.mxu0 0.0
    %1030 = vmatpush2.msra.mxu0 0.0
    %1031 = vmatprep.subr.mxu0 0.0
    %1032 = vmatpush2.msra.mxu0 0.0
    %1033 = vmatprep.subr.mxu0 0.0
    %1034 = vmatpush2.msra.mxu0 0.0
    %1035 = vmatprep.subr.mxu0 0.0
    %1036 = vmatpush2.msra.mxu0 0.0
    %1037 = vmatprep.mubr.f32.mxu0 0.0
    %1038 = vmatmul.mubr.f32.gmra.mxu0 %v971
    %v1039 = vpop.f32.mrf.mxu0
    %v1040 = vadd.f32 0.0, %v1039
    %v1041 = vpop.f32.mrf.mxu0
    %1042 = vdwg.mxu0
    %v1043 = vadd.f32 %v966, %v1040
    %v1044 = vxor.u32 %v1043, 2147483648
    %v1045 = vmul.f32 %v1044, 1.442695
    %v1046 = vpow.pop %v1045
    %v1047 = vadd.f32 %v1046, 1.0
    %v1048 = vrcp.pop %v1047
    %v1049 = vmul.f32 1.0, %v1048
    %v1050 = vadd.f32 %v1040, %v364
    %1052 = vrot.lane.b32.xlu0 %v1050, 64
    %v1053 = vpop.permute.xlu0 %1052
    %v1055 = vmul.f32 %v1049, %v1053
    %1057 = vrot.lane.b32.xlu0 %v1055, 64
    %v1058 = vpop.permute.xlu0 %1057
    %v1060 = vadd.f32 %v966, %v1058
    %v1061 = vtanh.pop %v1060
    %v1062 = vsub.f32 1.0, %v1049
    %1064 = vrot.lane.b32.xlu0 %v1061, 96
    %v1065 = vpop.permute.xlu0 %1064
    %v1067 = vmul.f32 %v1062, %v1065
    %v1068 = vmul.f32 %v1049, %v964
    %v1069 = vadd.f32 %v1067, %v1068
    %1071 = vrot.lane.b32.xlu0 %v965, 96
    %v1072 = vpop.permute.xlu0 %1071
    %v1073 = vsel %vm277, %v1072, 0
    %1075 = vmatprep.subr.mxu0 0.0
    %1076 = vmatpush1.msra.mxu0 0.0
    %1077 = vmatprep.subr.mxu0 0.0
    %1078 = vmatpush1.msra.mxu0 0.0
    %1079 = vmatprep.subr.mxu0 0.0
    %1080 = vmatpush1.msra.mxu0 0.0
    %1081 = vmatprep.subr.mxu0 0.0
    %1082 = vmatpush1.msra.mxu0 0.0
    %1083 = vmatprep.subr.mxu0 0.0
    %1084 = vmatpush1.msra.mxu0 0.0
    %1085 = vmatprep.subr.mxu0 0.0
    %1086 = vmatpush1.msra.mxu0 0.0
    %1087 = vmatprep.subr.mxu0 0.0
    %1088 = vmatpush1.msra.mxu0 0.0
    %1089 = vmatprep.subr.mxu0 0.0
    %1090 = vmatpush1.msra.mxu0 0.0
    %1091 = vmatprep.subr.mxu0 0.0
    %1092 = vmatpush1.msra.mxu0 0.0
    %1093 = vmatprep.subr.mxu0 0.0
    %1094 = vmatpush1.msra.mxu0 0.0
    %1095 = vmatprep.subr.mxu0 0.0
    %1096 = vmatpush1.msra.mxu0 0.0
    %1097 = vmatprep.subr.mxu0 0.0
    %1098 = vmatpush1.msra.mxu0 0.0
    %1099 = vmatprep.subr.mxu0 0.0
    %1100 = vmatpush1.msra.mxu0 %v272
    %1101 = vmatprep.subr.mxu0 0.0
    %1102 = vmatpush1.msra.mxu0 %v271
    %1103 = vmatprep.subr.mxu0 0.0
    %1104 = vmatpush1.msra.mxu0 %v270
    %1105 = vmatprep.subr.mxu0 0.0
    %1106 = vmatpush1.msra.mxu0 %v269
    %1107 = vmatprep.subr.mxu0 0.0
    %1108 = vmatpush2.msra.mxu0 0.0
    %1109 = vmatprep.subr.mxu0 0.0
    %1110 = vmatpush2.msra.mxu0 0.0
    %1111 = vmatprep.subr.mxu0 0.0
    %1112 = vmatpush2.msra.mxu0 0.0
    %1113 = vmatprep.subr.mxu0 0.0
    %1114 = vmatpush2.msra.mxu0 0.0
    %1115 = vmatprep.subr.mxu0 0.0
    %1116 = vmatpush2.msra.mxu0 0.0
    %1117 = vmatprep.subr.mxu0 0.0
    %1118 = vmatpush2.msra.mxu0 0.0
    %1119 = vmatprep.subr.mxu0 0.0
    %1120 = vmatpush2.msra.mxu0 0.0
    %1121 = vmatprep.subr.mxu0 0.0
    %1122 = vmatpush2.msra.mxu0 0.0
    %1123 = vmatprep.subr.mxu0 0.0
    %1124 = vmatpush2.msra.mxu0 0.0
    %1125 = vmatprep.subr.mxu0 0.0
    %1126 = vmatpush2.msra.mxu0 0.0
    %1127 = vmatprep.subr.mxu0 0.0
    %1128 = vmatpush2.msra.mxu0 0.0
    %1129 = vmatprep.subr.mxu0 0.0
    %1130 = vmatpush2.msra.mxu0 0.0
    %1131 = vmatprep.subr.mxu0 0.0
    %1132 = vmatpush2.msra.mxu0 0.0
    %1133 = vmatprep.subr.mxu0 0.0
    %1134 = vmatpush2.msra.mxu0 0.0
    %1135 = vmatprep.subr.mxu0 0.0
    %1136 = vmatpush2.msra.mxu0 0.0
    %1137 = vmatprep.subr.mxu0 0.0
    %1138 = vmatpush2.msra.mxu0 0.0
    %1139 = vmatprep.mubr.f32.mxu0 0.0
    %1140 = vmatmul.mubr.f32.gmra.mxu0 %v1073
    %v1141 = vpop.f32.mrf.mxu0
    %v1142 = vadd.f32 0.0, %v1141
    %v1143 = vpop.f32.mrf.mxu0
    %1144 = vdwg.mxu0
    %v1145 = vadd.f32 %v967, %v1142
    %v1146 = vxor.u32 %v1145, 2147483648
    %v1147 = vmul.f32 %v1146, 1.442695
    %v1148 = vpow.pop %v1147
    %v1149 = vadd.f32 %v1148, 1.0
    %v1150 = vrcp.pop %v1149
    %v1151 = vmul.f32 1.0, %v1150
    %v1152 = vadd.f32 %v1142, %v469
    %1154 = vrot.lane.b32.xlu0 %v1152, 64
    %v1155 = vpop.permute.xlu0 %1154
    %v1157 = vmul.f32 %v1151, %v1155
    %1159 = vrot.lane.b32.xlu0 %v1157, 64
    %v1160 = vpop.permute.xlu0 %1159
    %v1162 = vadd.f32 %v967, %v1160
    %v1163 = vtanh.pop %v1162
    %v1164 = vsub.f32 1.0, %v1151
    %1166 = vrot.lane.b32.xlu0 %v1163, 96
    %v1167 = vpop.permute.xlu0 %1166
    %v1169 = vmul.f32 %v1164, %v1167
    %v1170 = vmul.f32 %v1151, %v965
    %v1171 = vadd.f32 %v1169, %v1170
    %vm1172 = vcmp.gt.s32.totalorder %v82, 3
    %vm1173 = vcmp.gt.s32.totalorder %v82, 4
    %v1174 = vsel %vm1172, 1, 0
    %1175 = vset.pattern.permute.xlu0 0
    %1176 = vperm.xlu0 %1175, %v1174
    %v1177 = vpop.permute.xlu0 %1176
    %vm1178 = vcmp.eq.s32.totalorder %v1177, 1
    %v1179 = vsel %vm1178, %v1069, 0.0
    %1181 = vrot.lane.b32.xlu0 %v1179, 96
    %v1182 = vpop.permute.xlu0 %1181
    %1184 = vst.msk [vmem:[#allocation4 + $0x6] sm:$0x3] %vm503, %v1182
    %v1185 = vsel %vm1173, 1, 0
    %1186 = vset.pattern.permute.xlu0 0
    %1187 = vperm.xlu0 %1186, %v1185
    %v1188 = vpop.permute.xlu0 %1187
    %vm1189 = vcmp.eq.s32.totalorder %v1188, 1
    %v1190 = vsel %vm1189, %v1171, 0.0
    %1191 = vst.msk [vmem:[#allocation4 + $0x8] sm:$0x3] %vm511, %v1190
    %v1192 = vsel %vm1178, %v1069, %v964
    %v1193 = vsel %vm1189, %v1171, %v965
    %v1194 = vld [vmem:[#allocation2 + $0x8] sm:$0x3]
    %v1195 = vld [vmem:[#allocation3 + $0x6] sm:$0x3]
    %1197 = vrot.lane.b32.xlu0 %v1192, 96
    %v1198 = vpop.permute.xlu0 %1197
    %v1199 = vsel %vm277, %v1198, 0
    %1201 = vmatprep.subr.mxu0 0.0
    %1202 = vmatpush1.msra.mxu0 0.0
    %1203 = vmatprep.subr.mxu0 0.0
    %1204 = vmatpush1.msra.mxu0 0.0
    %1205 = vmatprep.subr.mxu0 0.0
    %1206 = vmatpush1.msra.mxu0 0.0
    %1207 = vmatprep.subr.mxu0 0.0
    %1208 = vmatpush1.msra.mxu0 0.0
    %1209 = vmatprep.subr.mxu0 0.0
    %1210 = vmatpush1.msra.mxu0 0.0
    %1211 = vmatprep.subr.mxu0 0.0
    %1212 = vmatpush1.msra.mxu0 0.0
    %1213 = vmatprep.subr.mxu0 0.0
    %1214 = vmatpush1.msra.mxu0 0.0
    %1215 = vmatprep.subr.mxu0 0.0
    %1216 = vmatpush1.msra.mxu0 0.0
    %1217 = vmatprep.subr.mxu0 0.0
    %1218 = vmatpush1.msra.mxu0 0.0
    %1219 = vmatprep.subr.mxu0 0.0
    %1220 = vmatpush1.msra.mxu0 0.0
    %1221 = vmatprep.subr.mxu0 0.0
    %1222 = vmatpush1.msra.mxu0 0.0
    %1223 = vmatprep.subr.mxu0 0.0
    %1224 = vmatpush1.msra.mxu0 0.0
    %1225 = vmatprep.subr.mxu0 0.0
    %1226 = vmatpush1.msra.mxu0 %v268
    %1227 = vmatprep.subr.mxu0 0.0
    %1228 = vmatpush1.msra.mxu0 %v267
    %1229 = vmatprep.subr.mxu0 0.0
    %1230 = vmatpush1.msra.mxu0 %v266
    %1231 = vmatprep.subr.mxu0 0.0
    %1232 = vmatpush1.msra.mxu0 %v265
    %1233 = vmatprep.subr.mxu0 0.0
    %1234 = vmatpush2.msra.mxu0 0.0
    %1235 = vmatprep.subr.mxu0 0.0
    %1236 = vmatpush2.msra.mxu0 0.0
    %1237 = vmatprep.subr.mxu0 0.0
    %1238 = vmatpush2.msra.mxu0 0.0
    %1239 = vmatprep.subr.mxu0 0.0
    %1240 = vmatpush2.msra.mxu0 0.0
    %1241 = vmatprep.subr.mxu0 0.0
    %1242 = vmatpush2.msra.mxu0 0.0
    %1243 = vmatprep.subr.mxu0 0.0
    %1244 = vmatpush2.msra.mxu0 0.0
    %1245 = vmatprep.subr.mxu0 0.0
    %1246 = vmatpush2.msra.mxu0 0.0
    %1247 = vmatprep.subr.mxu0 0.0
    %1248 = vmatpush2.msra.mxu0 0.0
    %1249 = vmatprep.subr.mxu0 0.0
    %1250 = vmatpush2.msra.mxu0 0.0
    %1251 = vmatprep.subr.mxu0 0.0
    %1252 = vmatpush2.msra.mxu0 0.0
    %1253 = vmatprep.subr.mxu0 0.0
    %1254 = vmatpush2.msra.mxu0 0.0
    %1255 = vmatprep.subr.mxu0 0.0
    %1256 = vmatpush2.msra.mxu0 0.0
    %1257 = vmatprep.subr.mxu0 0.0
    %1258 = vmatpush2.msra.mxu0 0.0
    %1259 = vmatprep.subr.mxu0 0.0
    %1260 = vmatpush2.msra.mxu0 0.0
    %1261 = vmatprep.subr.mxu0 0.0
    %1262 = vmatpush2.msra.mxu0 0.0
    %1263 = vmatprep.subr.mxu0 0.0
    %1264 = vmatpush2.msra.mxu0 0.0
    %1265 = vmatprep.mubr.f32.mxu0 0.0
    %1266 = vmatmul.mubr.f32.gmra.mxu0 %v1199
    %v1267 = vpop.f32.mrf.mxu0
    %v1268 = vadd.f32 0.0, %v1267
    %v1269 = vpop.f32.mrf.mxu0
    %1270 = vdwg.mxu0
    %v1271 = vadd.f32 %v1194, %v1268
    %v1272 = vxor.u32 %v1271, 2147483648
    %v1273 = vmul.f32 %v1272, 1.442695
    %v1274 = vpow.pop %v1273
    %v1275 = vadd.f32 %v1274, 1.0
    %v1276 = vrcp.pop %v1275
    %v1277 = vmul.f32 1.0, %v1276
    %v1278 = vadd.f32 %v1268, %v364
    %1280 = vrot.lane.b32.xlu0 %v1278, 64
    %v1281 = vpop.permute.xlu0 %1280
    %v1283 = vmul.f32 %v1277, %v1281
    %1285 = vrot.lane.b32.xlu0 %v1283, 64
    %v1286 = vpop.permute.xlu0 %1285
    %v1288 = vadd.f32 %v1194, %v1286
    %v1289 = vtanh.pop %v1288
    %v1290 = vsub.f32 1.0, %v1277
    %1292 = vrot.lane.b32.xlu0 %v1289, 96
    %v1293 = vpop.permute.xlu0 %1292
    %v1295 = vmul.f32 %v1290, %v1293
    %v1296 = vmul.f32 %v1277, %v1192
    %v1297 = vadd.f32 %v1295, %v1296
    %1299 = vrot.lane.b32.xlu0 %v1193, 96
    %v1300 = vpop.permute.xlu0 %1299
    %v1301 = vsel %vm277, %v1300, 0
    %1303 = vmatprep.subr.mxu0 0.0
    %1304 = vmatpush1.msra.mxu0 0.0
    %1305 = vmatprep.subr.mxu0 0.0
    %1306 = vmatpush1.msra.mxu0 0.0
    %1307 = vmatprep.subr.mxu0 0.0
    %1308 = vmatpush1.msra.mxu0 0.0
    %1309 = vmatprep.subr.mxu0 0.0
    %1310 = vmatpush1.msra.mxu0 0.0
    %1311 = vmatprep.subr.mxu0 0.0
    %1312 = vmatpush1.msra.mxu0 0.0
    %1313 = vmatprep.subr.mxu0 0.0
    %1314 = vmatpush1.msra.mxu0 0.0
    %1315 = vmatprep.subr.mxu0 0.0
    %1316 = vmatpush1.msra.mxu0 0.0
    %1317 = vmatprep.subr.mxu0 0.0
    %1318 = vmatpush1.msra.mxu0 0.0
    %1319 = vmatprep.subr.mxu0 0.0
    %1320 = vmatpush1.msra.mxu0 0.0
    %1321 = vmatprep.subr.mxu0 0.0
    %1322 = vmatpush1.msra.mxu0 0.0
    %1323 = vmatprep.subr.mxu0 0.0
    %1324 = vmatpush1.msra.mxu0 0.0
    %1325 = vmatprep.subr.mxu0 0.0
    %1326 = vmatpush1.msra.mxu0 0.0
    %1327 = vmatprep.subr.mxu0 0.0
    %1328 = vmatpush1.msra.mxu0 %v272
    %1329 = vmatprep.subr.mxu0 0.0
    %1330 = vmatpush1.msra.mxu0 %v271
    %1331 = vmatprep.subr.mxu0 0.0
    %1332 = vmatpush1.msra.mxu0 %v270
    %1333 = vmatprep.subr.mxu0 0.0
    %1334 = vmatpush1.msra.mxu0 %v269
    %1335 = vmatprep.subr.mxu0 0.0
    %1336 = vmatpush2.msra.mxu0 0.0
    %1337 = vmatprep.subr.mxu0 0.0
    %1338 = vmatpush2.msra.mxu0 0.0
    %1339 = vmatprep.subr.mxu0 0.0
    %1340 = vmatpush2.msra.mxu0 0.0
    %1341 = vmatprep.subr.mxu0 0.0
    %1342 = vmatpush2.msra.mxu0 0.0
    %1343 = vmatprep.subr.mxu0 0.0
    %1344 = vmatpush2.msra.mxu0 0.0
    %1345 = vmatprep.subr.mxu0 0.0
    %1346 = vmatpush2.msra.mxu0 0.0
    %1347 = vmatprep.subr.mxu0 0.0
    %1348 = vmatpush2.msra.mxu0 0.0
    %1349 = vmatprep.subr.mxu0 0.0
    %1350 = vmatpush2.msra.mxu0 0.0
    %1351 = vmatprep.subr.mxu0 0.0
    %1352 = vmatpush2.msra.mxu0 0.0
    %1353 = vmatprep.subr.mxu0 0.0
    %1354 = vmatpush2.msra.mxu0 0.0
    %1355 = vmatprep.subr.mxu0 0.0
    %1356 = vmatpush2.msra.mxu0 0.0
    %1357 = vmatprep.subr.mxu0 0.0
    %1358 = vmatpush2.msra.mxu0 0.0
    %1359 = vmatprep.subr.mxu0 0.0
    %1360 = vmatpush2.msra.mxu0 0.0
    %1361 = vmatprep.subr.mxu0 0.0
    %1362 = vmatpush2.msra.mxu0 0.0
    %1363 = vmatprep.subr.mxu0 0.0
    %1364 = vmatpush2.msra.mxu0 0.0
    %1365 = vmatprep.subr.mxu0 0.0
    %1366 = vmatpush2.msra.mxu0 0.0
    %1367 = vmatprep.mubr.f32.mxu0 0.0
    %1368 = vmatmul.mubr.f32.gmra.mxu0 %v1301
    %v1369 = vpop.f32.mrf.mxu0
    %v1370 = vadd.f32 0.0, %v1369
    %v1371 = vpop.f32.mrf.mxu0
    %1372 = vdwg.mxu0
    %v1373 = vadd.f32 %v1195, %v1370
    %v1374 = vxor.u32 %v1373, 2147483648
    %v1375 = vmul.f32 %v1374, 1.442695
    %v1376 = vpow.pop %v1375
    %v1377 = vadd.f32 %v1376, 1.0
    %v1378 = vrcp.pop %v1377
    %v1379 = vmul.f32 1.0, %v1378
    %v1380 = vadd.f32 %v1370, %v469
    %1382 = vrot.lane.b32.xlu0 %v1380, 64
    %v1383 = vpop.permute.xlu0 %1382
    %v1385 = vmul.f32 %v1379, %v1383
    %1387 = vrot.lane.b32.xlu0 %v1385, 64
    %v1388 = vpop.permute.xlu0 %1387
    %v1390 = vadd.f32 %v1195, %v1388
    %v1391 = vtanh.pop %v1390
    %v1392 = vsub.f32 1.0, %v1379
    %1394 = vrot.lane.b32.xlu0 %v1391, 96
    %v1395 = vpop.permute.xlu0 %1394
    %v1397 = vmul.f32 %v1392, %v1395
    %v1398 = vmul.f32 %v1379, %v1193
    %v1399 = vadd.f32 %v1397, %v1398
    %v1400 = vsel %vm1189, %v1297, 0.0
    %1402 = vrot.lane.b32.xlu0 %v1400, 96
    %v1403 = vpop.permute.xlu0 %1402
    %1405 = vst.msk [vmem:[#allocation4 + $0x8] sm:$0x3] %vm503, %v1403
    %v1406 = vsel %vm1178, %v1399, 0.0
    %1407 = vst.msk [vmem:[#allocation4 + $0x6] sm:$0x3] %vm511, %v1406
    %v1408 = vsel %vm1189, %v1297, %v1192
    %v1409 = vsel %vm1178, %v1399, %v1193
    %v1410 = vld [vmem:[#allocation2 + $0xa] sm:$0x3]
    %v1411 = vld [vmem:[#allocation3 + $0x4] sm:$0x3]
    %1413 = vrot.lane.b32.xlu0 %v1408, 96
    %v1414 = vpop.permute.xlu0 %1413
    %v1415 = vsel %vm277, %v1414, 0
    %1417 = vmatprep.subr.mxu0 0.0
    %1418 = vmatpush1.msra.mxu0 0.0
    %1419 = vmatprep.subr.mxu0 0.0
    %1420 = vmatpush1.msra.mxu0 0.0
    %1421 = vmatprep.subr.mxu0 0.0
    %1422 = vmatpush1.msra.mxu0 0.0
    %1423 = vmatprep.subr.mxu0 0.0
    %1424 = vmatpush1.msra.mxu0 0.0
    %1425 = vmatprep.subr.mxu0 0.0
    %1426 = vmatpush1.msra.mxu0 0.0
    %1427 = vmatprep.subr.mxu0 0.0
    %1428 = vmatpush1.msra.mxu0 0.0
    %1429 = vmatprep.subr.mxu0 0.0
    %1430 = vmatpush1.msra.mxu0 0.0
    %1431 = vmatprep.subr.mxu0 0.0
    %1432 = vmatpush1.msra.mxu0 0.0
    %1433 = vmatprep.subr.mxu0 0.0
    %1434 = vmatpush1.msra.mxu0 0.0
    %1435 = vmatprep.subr.mxu0 0.0
    %1436 = vmatpush1.msra.mxu0 0.0
    %1437 = vmatprep.subr.mxu0 0.0
    %1438 = vmatpush1.msra.mxu0 0.0
    %1439 = vmatprep.subr.mxu0 0.0
    %1440 = vmatpush1.msra.mxu0 0.0
    %1441 = vmatprep.subr.mxu0 0.0
    %1442 = vmatpush1.msra.mxu0 %v268
    %1443 = vmatprep.subr.mxu0 0.0
    %1444 = vmatpush1.msra.mxu0 %v267
    %1445 = vmatprep.subr.mxu0 0.0
    %1446 = vmatpush1.msra.mxu0 %v266
    %1447 = vmatprep.subr.mxu0 0.0
    %1448 = vmatpush1.msra.mxu0 %v265
    %1449 = vmatprep.subr.mxu0 0.0
    %1450 = vmatpush2.msra.mxu0 0.0
    %1451 = vmatprep.subr.mxu0 0.0
    %1452 = vmatpush2.msra.mxu0 0.0
    %1453 = vmatprep.subr.mxu0 0.0
    %1454 = vmatpush2.msra.mxu0 0.0
    %1455 = vmatprep.subr.mxu0 0.0
    %1456 = vmatpush2.msra.mxu0 0.0
    %1457 = vmatprep.subr.mxu0 0.0
    %1458 = vmatpush2.msra.mxu0 0.0
    %1459 = vmatprep.subr.mxu0 0.0
    %1460 = vmatpush2.msra.mxu0 0.0
    %1461 = vmatprep.subr.mxu0 0.0
    %1462 = vmatpush2.msra.mxu0 0.0
    %1463 = vmatprep.subr.mxu0 0.0
    %1464 = vmatpush2.msra.mxu0 0.0
    %1465 = vmatprep.subr.mxu0 0.0
    %1466 = vmatpush2.msra.mxu0 0.0
    %1467 = vmatprep.subr.mxu0 0.0
    %1468 = vmatpush2.msra.mxu0 0.0
    %1469 = vmatprep.subr.mxu0 0.0
    %1470 = vmatpush2.msra.mxu0 0.0
    %1471 = vmatprep.subr.mxu0 0.0
    %1472 = vmatpush2.msra.mxu0 0.0
    %1473 = vmatprep.subr.mxu0 0.0
    %1474 = vmatpush2.msra.mxu0 0.0
    %1475 = vmatprep.subr.mxu0 0.0
    %1476 = vmatpush2.msra.mxu0 0.0
    %1477 = vmatprep.subr.mxu0 0.0
    %1478 = vmatpush2.msra.mxu0 0.0
    %1479 = vmatprep.subr.mxu0 0.0
    %1480 = vmatpush2.msra.mxu0 0.0
    %1481 = vmatprep.mubr.f32.mxu0 0.0
    %1482 = vmatmul.mubr.f32.gmra.mxu0 %v1415
    %v1483 = vpop.f32.mrf.mxu0
    %v1484 = vadd.f32 0.0, %v1483
    %v1485 = vpop.f32.mrf.mxu0
    %1486 = vdwg.mxu0
    %v1487 = vadd.f32 %v1410, %v1484
    %v1488 = vxor.u32 %v1487, 2147483648
    %v1489 = vmul.f32 %v1488, 1.442695
    %v1490 = vpow.pop %v1489
    %v1491 = vadd.f32 %v1490, 1.0
    %v1492 = vrcp.pop %v1491
    %v1493 = vmul.f32 1.0, %v1492
    %v1494 = vadd.f32 %v1484, %v364
    %1496 = vrot.lane.b32.xlu0 %v1494, 64
    %v1497 = vpop.permute.xlu0 %1496
    %v1499 = vmul.f32 %v1493, %v1497
    %1501 = vrot.lane.b32.xlu0 %v1499, 64
    %v1502 = vpop.permute.xlu0 %1501
    %v1504 = vadd.f32 %v1410, %v1502
    %v1505 = vtanh.pop %v1504
    %v1506 = vsub.f32 1.0, %v1493
    %1508 = vrot.lane.b32.xlu0 %v1505, 96
    %v1509 = vpop.permute.xlu0 %1508
    %v1511 = vmul.f32 %v1506, %v1509
    %v1512 = vmul.f32 %v1493, %v1408
    %v1513 = vadd.f32 %v1511, %v1512
    %1515 = vrot.lane.b32.xlu0 %v1409, 96
    %v1516 = vpop.permute.xlu0 %1515
    %v1517 = vsel %vm277, %v1516, 0
    %1519 = vmatprep.subr.mxu0 0.0
    %1520 = vmatpush1.msra.mxu0 0.0
    %1521 = vmatprep.subr.mxu0 0.0
    %1522 = vmatpush1.msra.mxu0 0.0
    %1523 = vmatprep.subr.mxu0 0.0
    %1524 = vmatpush1.msra.mxu0 0.0
    %1525 = vmatprep.subr.mxu0 0.0
    %1526 = vmatpush1.msra.mxu0 0.0
    %1527 = vmatprep.subr.mxu0 0.0
    %1528 = vmatpush1.msra.mxu0 0.0
    %1529 = vmatprep.subr.mxu0 0.0
    %1530 = vmatpush1.msra.mxu0 0.0
    %1531 = vmatprep.subr.mxu0 0.0
    %1532 = vmatpush1.msra.mxu0 0.0
    %1533 = vmatprep.subr.mxu0 0.0
    %1534 = vmatpush1.msra.mxu0 0.0
    %1535 = vmatprep.subr.mxu0 0.0
    %1536 = vmatpush1.msra.mxu0 0.0
    %1537 = vmatprep.subr.mxu0 0.0
    %1538 = vmatpush1.msra.mxu0 0.0
    %1539 = vmatprep.subr.mxu0 0.0
    %1540 = vmatpush1.msra.mxu0 0.0
    %1541 = vmatprep.subr.mxu0 0.0
    %1542 = vmatpush1.msra.mxu0 0.0
    %1543 = vmatprep.subr.mxu0 0.0
    %1544 = vmatpush1.msra.mxu0 %v272
    %1545 = vmatprep.subr.mxu0 0.0
    %1546 = vmatpush1.msra.mxu0 %v271
    %1547 = vmatprep.subr.mxu0 0.0
    %1548 = vmatpush1.msra.mxu0 %v270
    %1549 = vmatprep.subr.mxu0 0.0
    %1550 = vmatpush1.msra.mxu0 %v269
    %1551 = vmatprep.subr.mxu0 0.0
    %1552 = vmatpush2.msra.mxu0 0.0
    %1553 = vmatprep.subr.mxu0 0.0
    %1554 = vmatpush2.msra.mxu0 0.0
    %1555 = vmatprep.subr.mxu0 0.0
    %1556 = vmatpush2.msra.mxu0 0.0
    %1557 = vmatprep.subr.mxu0 0.0
    %1558 = vmatpush2.msra.mxu0 0.0
    %1559 = vmatprep.subr.mxu0 0.0
    %1560 = vmatpush2.msra.mxu0 0.0
    %1561 = vmatprep.subr.mxu0 0.0
    %1562 = vmatpush2.msra.mxu0 0.0
    %1563 = vmatprep.subr.mxu0 0.0
    %1564 = vmatpush2.msra.mxu0 0.0
    %1565 = vmatprep.subr.mxu0 0.0
    %1566 = vmatpush2.msra.mxu0 0.0
    %1567 = vmatprep.subr.mxu0 0.0
    %1568 = vmatpush2.msra.mxu0 0.0
    %1569 = vmatprep.subr.mxu0 0.0
    %1570 = vmatpush2.msra.mxu0 0.0
    %1571 = vmatprep.subr.mxu0 0.0
    %1572 = vmatpush2.msra.mxu0 0.0
    %1573 = vmatprep.subr.mxu0 0.0
    %1574 = vmatpush2.msra.mxu0 0.0
    %1575 = vmatprep.subr.mxu0 0.0
    %1576 = vmatpush2.msra.mxu0 0.0
    %1577 = vmatprep.subr.mxu0 0.0
    %1578 = vmatpush2.msra.mxu0 0.0
    %1579 = vmatprep.subr.mxu0 0.0
    %1580 = vmatpush2.msra.mxu0 0.0
    %1581 = vmatprep.subr.mxu0 0.0
    %1582 = vmatpush2.msra.mxu0 0.0
    %1583 = vmatprep.mubr.f32.mxu0 0.0
    %1584 = vmatmul.mubr.f32.gmra.mxu0 %v1517
    %v1585 = vpop.f32.mrf.mxu0
    %v1586 = vadd.f32 0.0, %v1585
    %v1587 = vpop.f32.mrf.mxu0
    %1588 = vdwg.mxu0
    %v1589 = vadd.f32 %v1411, %v1586
    %v1590 = vxor.u32 %v1589, 2147483648
    %v1591 = vmul.f32 %v1590, 1.442695
    %v1592 = vpow.pop %v1591
    %v1593 = vadd.f32 %v1592, 1.0
    %v1594 = vrcp.pop %v1593
    %v1595 = vmul.f32 1.0, %v1594
    %v1596 = vadd.f32 %v1586, %v469
    %1598 = vrot.lane.b32.xlu0 %v1596, 64
    %v1599 = vpop.permute.xlu0 %1598
    %v1601 = vmul.f32 %v1595, %v1599
    %1603 = vrot.lane.b32.xlu0 %v1601, 64
    %v1604 = vpop.permute.xlu0 %1603
    %v1606 = vadd.f32 %v1411, %v1604
    %v1607 = vtanh.pop %v1606
    %v1608 = vsub.f32 1.0, %v1595
    %1610 = vrot.lane.b32.xlu0 %v1607, 96
    %v1611 = vpop.permute.xlu0 %1610
    %v1613 = vmul.f32 %v1608, %v1611
    %v1614 = vmul.f32 %v1595, %v1409
    %v1615 = vadd.f32 %v1613, %v1614
    %v1616 = vsel %vm961, %v1513, 0.0
    %1618 = vrot.lane.b32.xlu0 %v1616, 96
    %v1619 = vpop.permute.xlu0 %1618
    %1621 = vst.msk [vmem:[#allocation4 + $0xa] sm:$0x3] %vm503, %v1619
    %v1622 = vsel %vm950, %v1615, 0.0
    %1623 = vst.msk [vmem:[#allocation4 + $0x4] sm:$0x3] %vm511, %v1622
    %v1624 = vsel %vm961, %v1513, %v1408
    %v1625 = vsel %vm950, %v1615, %v1409
    %v1626 = vld [vmem:[#allocation2 + $0xc] sm:$0x3]
    %v1627 = vld [vmem:[#allocation3 + $0x2] sm:$0x3]
    %1629 = vrot.lane.b32.xlu0 %v1624, 96
    %v1630 = vpop.permute.xlu0 %1629
    %v1631 = vsel %vm277, %v1630, 0
    %1633 = vmatprep.subr.mxu0 0.0
    %1634 = vmatpush1.msra.mxu0 0.0
    %1635 = vmatprep.subr.mxu0 0.0
    %1636 = vmatpush1.msra.mxu0 0.0
    %1637 = vmatprep.subr.mxu0 0.0
    %1638 = vmatpush1.msra.mxu0 0.0
    %1639 = vmatprep.subr.mxu0 0.0
    %1640 = vmatpush1.msra.mxu0 0.0
    %1641 = vmatprep.subr.mxu0 0.0
    %1642 = vmatpush1.msra.mxu0 0.0
    %1643 = vmatprep.subr.mxu0 0.0
    %1644 = vmatpush1.msra.mxu0 0.0
    %1645 = vmatprep.subr.mxu0 0.0
    %1646 = vmatpush1.msra.mxu0 0.0
    %1647 = vmatprep.subr.mxu0 0.0
    %1648 = vmatpush1.msra.mxu0 0.0
    %1649 = vmatprep.subr.mxu0 0.0
    %1650 = vmatpush1.msra.mxu0 0.0
    %1651 = vmatprep.subr.mxu0 0.0
    %1652 = vmatpush1.msra.mxu0 0.0
    %1653 = vmatprep.subr.mxu0 0.0
    %1654 = vmatpush1.msra.mxu0 0.0
    %1655 = vmatprep.subr.mxu0 0.0
    %1656 = vmatpush1.msra.mxu0 0.0
    %1657 = vmatprep.subr.mxu0 0.0
    %1658 = vmatpush1.msra.mxu0 %v268
    %1659 = vmatprep.subr.mxu0 0.0
    %1660 = vmatpush1.msra.mxu0 %v267
    %1661 = vmatprep.subr.mxu0 0.0
    %1662 = vmatpush1.msra.mxu0 %v266
    %1663 = vmatprep.subr.mxu0 0.0
    %1664 = vmatpush1.msra.mxu0 %v265
    %1665 = vmatprep.subr.mxu0 0.0
    %1666 = vmatpush2.msra.mxu0 0.0
    %1667 = vmatprep.subr.mxu0 0.0
    %1668 = vmatpush2.msra.mxu0 0.0
    %1669 = vmatprep.subr.mxu0 0.0
    %1670 = vmatpush2.msra.mxu0 0.0
    %1671 = vmatprep.subr.mxu0 0.0
    %1672 = vmatpush2.msra.mxu0 0.0
    %1673 = vmatprep.subr.mxu0 0.0
    %1674 = vmatpush2.msra.mxu0 0.0
    %1675 = vmatprep.subr.mxu0 0.0
    %1676 = vmatpush2.msra.mxu0 0.0
    %1677 = vmatprep.subr.mxu0 0.0
    %1678 = vmatpush2.msra.mxu0 0.0
    %1679 = vmatprep.subr.mxu0 0.0
    %1680 = vmatpush2.msra.mxu0 0.0
    %1681 = vmatprep.subr.mxu0 0.0
    %1682 = vmatpush2.msra.mxu0 0.0
    %1683 = vmatprep.subr.mxu0 0.0
    %1684 = vmatpush2.msra.mxu0 0.0
    %1685 = vmatprep.subr.mxu0 0.0
    %1686 = vmatpush2.msra.mxu0 0.0
    %1687 = vmatprep.subr.mxu0 0.0
    %1688 = vmatpush2.msra.mxu0 0.0
    %1689 = vmatprep.subr.mxu0 0.0
    %1690 = vmatpush2.msra.mxu0 0.0
    %1691 = vmatprep.subr.mxu0 0.0
    %1692 = vmatpush2.msra.mxu0 0.0
    %1693 = vmatprep.subr.mxu0 0.0
    %1694 = vmatpush2.msra.mxu0 0.0
    %1695 = vmatprep.subr.mxu0 0.0
    %1696 = vmatpush2.msra.mxu0 0.0
    %1697 = vmatprep.mubr.f32.mxu0 0.0
    %1698 = vmatmul.mubr.f32.gmra.mxu0 %v1631
    %v1699 = vpop.f32.mrf.mxu0
    %v1700 = vadd.f32 0.0, %v1699
    %v1701 = vpop.f32.mrf.mxu0
    %1702 = vdwg.mxu0
    %v1703 = vadd.f32 %v1626, %v1700
    %v1704 = vxor.u32 %v1703, 2147483648
    %v1705 = vmul.f32 %v1704, 1.442695
    %v1706 = vpow.pop %v1705
    %v1707 = vadd.f32 %v1706, 1.0
    %v1708 = vrcp.pop %v1707
    %v1709 = vmul.f32 1.0, %v1708
    %v1710 = vadd.f32 %v1700, %v364
    %1712 = vrot.lane.b32.xlu0 %v1710, 64
    %v1713 = vpop.permute.xlu0 %1712
    %v1715 = vmul.f32 %v1709, %v1713
    %1717 = vrot.lane.b32.xlu0 %v1715, 64
    %v1718 = vpop.permute.xlu0 %1717
    %v1720 = vadd.f32 %v1626, %v1718
    %v1721 = vtanh.pop %v1720
    %v1722 = vsub.f32 1.0, %v1709
    %1724 = vrot.lane.b32.xlu0 %v1721, 96
    %v1725 = vpop.permute.xlu0 %1724
    %v1727 = vmul.f32 %v1722, %v1725
    %v1728 = vmul.f32 %v1709, %v1624
    %v1729 = vadd.f32 %v1727, %v1728
    %1731 = vrot.lane.b32.xlu0 %v1625, 96
    %v1732 = vpop.permute.xlu0 %1731
    %v1733 = vsel %vm277, %v1732, 0
    %1735 = vmatprep.subr.mxu0 0.0
    %1736 = vmatpush1.msra.mxu0 0.0
    %1737 = vmatprep.subr.mxu0 0.0
    %1738 = vmatpush1.msra.mxu0 0.0
    %1739 = vmatprep.subr.mxu0 0.0
    %1740 = vmatpush1.msra.mxu0 0.0
    %1741 = vmatprep.subr.mxu0 0.0
    %1742 = vmatpush1.msra.mxu0 0.0
    %1743 = vmatprep.subr.mxu0 0.0
    %1744 = vmatpush1.msra.mxu0 0.0
    %1745 = vmatprep.subr.mxu0 0.0
    %1746 = vmatpush1.msra.mxu0 0.0
    %1747 = vmatprep.subr.mxu0 0.0
    %1748 = vmatpush1.msra.mxu0 0.0
    %1749 = vmatprep.subr.mxu0 0.0
    %1750 = vmatpush1.msra.mxu0 0.0
    %1751 = vmatprep.subr.mxu0 0.0
    %1752 = vmatpush1.msra.mxu0 0.0
    %1753 = vmatprep.subr.mxu0 0.0
    %1754 = vmatpush1.msra.mxu0 0.0
    %1755 = vmatprep.subr.mxu0 0.0
    %1756 = vmatpush1.msra.mxu0 0.0
    %1757 = vmatprep.subr.mxu0 0.0
    %1758 = vmatpush1.msra.mxu0 0.0
    %1759 = vmatprep.subr.mxu0 0.0
    %1760 = vmatpush1.msra.mxu0 %v272
    %1761 = vmatprep.subr.mxu0 0.0
    %1762 = vmatpush1.msra.mxu0 %v271
    %1763 = vmatprep.subr.mxu0 0.0
    %1764 = vmatpush1.msra.mxu0 %v270
    %1765 = vmatprep.subr.mxu0 0.0
    %1766 = vmatpush1.msra.mxu0 %v269
    %1767 = vmatprep.subr.mxu0 0.0
    %1768 = vmatpush2.msra.mxu0 0.0
    %1769 = vmatprep.subr.mxu0 0.0
    %1770 = vmatpush2.msra.mxu0 0.0
    %1771 = vmatprep.subr.mxu0 0.0
    %1772 = vmatpush2.msra.mxu0 0.0
    %1773 = vmatprep.subr.mxu0 0.0
    %1774 = vmatpush2.msra.mxu0 0.0
    %1775 = vmatprep.subr.mxu0 0.0
    %1776 = vmatpush2.msra.mxu0 0.0
    %1777 = vmatprep.subr.mxu0 0.0
    %1778 = vmatpush2.msra.mxu0 0.0
    %1779 = vmatprep.subr.mxu0 0.0
    %1780 = vmatpush2.msra.mxu0 0.0
    %1781 = vmatprep.subr.mxu0 0.0
    %1782 = vmatpush2.msra.mxu0 0.0
    %1783 = vmatprep.subr.mxu0 0.0
    %1784 = vmatpush2.msra.mxu0 0.0
    %1785 = vmatprep.subr.mxu0 0.0
    %1786 = vmatpush2.msra.mxu0 0.0
    %1787 = vmatprep.subr.mxu0 0.0
    %1788 = vmatpush2.msra.mxu0 0.0
    %1789 = vmatprep.subr.mxu0 0.0
    %1790 = vmatpush2.msra.mxu0 0.0
    %1791 = vmatprep.subr.mxu0 0.0
    %1792 = vmatpush2.msra.mxu0 0.0
    %1793 = vmatprep.subr.mxu0 0.0
    %1794 = vmatpush2.msra.mxu0 0.0
    %1795 = vmatprep.subr.mxu0 0.0
    %1796 = vmatpush2.msra.mxu0 0.0
    %1797 = vmatprep.subr.mxu0 0.0
    %1798 = vmatpush2.msra.mxu0 0.0
    %1799 = vmatprep.mubr.f32.mxu0 0.0
    %1800 = vmatmul.mubr.f32.gmra.mxu0 %v1733
    %v1801 = vpop.f32.mrf.mxu0
    %v1802 = vadd.f32 0.0, %v1801
    %v1803 = vpop.f32.mrf.mxu0
    %1804 = vdwg.mxu0
    %v1805 = vadd.f32 %v1627, %v1802
    %v1806 = vxor.u32 %v1805, 2147483648
    %v1807 = vmul.f32 %v1806, 1.442695
    %v1808 = vpow.pop %v1807
    %v1809 = vadd.f32 %v1808, 1.0
    %v1810 = vrcp.pop %v1809
    %v1811 = vmul.f32 1.0, %v1810
    %v1812 = vadd.f32 %v1802, %v469
    %1814 = vrot.lane.b32.xlu0 %v1812, 64
    %v1815 = vpop.permute.xlu0 %1814
    %v1817 = vmul.f32 %v1811, %v1815
    %1819 = vrot.lane.b32.xlu0 %v1817, 64
    %v1820 = vpop.permute.xlu0 %1819
    %v1822 = vadd.f32 %v1627, %v1820
    %v1823 = vtanh.pop %v1822
    %v1824 = vsub.f32 1.0, %v1811
    %1826 = vrot.lane.b32.xlu0 %v1823, 96
    %v1827 = vpop.permute.xlu0 %1826
    %v1829 = vmul.f32 %v1824, %v1827
    %v1830 = vmul.f32 %v1811, %v1625
    %v1831 = vadd.f32 %v1829, %v1830
    %v1832 = vsel %vm733, %v1729, 0.0
    %1834 = vrot.lane.b32.xlu0 %v1832, 96
    %v1835 = vpop.permute.xlu0 %1834
    %1837 = vst.msk [vmem:[#allocation4 + $0xc] sm:$0x3] %vm503, %v1835
    %v1838 = vsel %vm722, %v1831, 0.0
    %1839 = vst.msk [vmem:[#allocation4 + $0x2] sm:$0x3] %vm511, %v1838
    %v1840 = vsel %vm733, %v1729, %v1624
    %v1841 = vsel %vm722, %v1831, %v1625
    %v1842 = vld [vmem:[#allocation2 + $0xe] sm:$0x3]
    %v1843 = vld [vmem:[#allocation3] sm:$0x3]
    %1845 = vrot.lane.b32.xlu0 %v1840, 96
    %v1846 = vpop.permute.xlu0 %1845
    %v1847 = vsel %vm277, %v1846, 0
    %1849 = vmatprep.subr.mxu0 0.0
    %1850 = vmatpush1.msra.mxu0 0.0
    %1851 = vmatprep.subr.mxu0 0.0
    %1852 = vmatpush1.msra.mxu0 0.0
    %1853 = vmatprep.subr.mxu0 0.0
    %1854 = vmatpush1.msra.mxu0 0.0
    %1855 = vmatprep.subr.mxu0 0.0
    %1856 = vmatpush1.msra.mxu0 0.0
    %1857 = vmatprep.subr.mxu0 0.0
    %1858 = vmatpush1.msra.mxu0 0.0
    %1859 = vmatprep.subr.mxu0 0.0
    %1860 = vmatpush1.msra.mxu0 0.0
    %1861 = vmatprep.subr.mxu0 0.0
    %1862 = vmatpush1.msra.mxu0 0.0
    %1863 = vmatprep.subr.mxu0 0.0
    %1864 = vmatpush1.msra.mxu0 0.0
    %1865 = vmatprep.subr.mxu0 0.0
    %1866 = vmatpush1.msra.mxu0 0.0
    %1867 = vmatprep.subr.mxu0 0.0
    %1868 = vmatpush1.msra.mxu0 0.0
    %1869 = vmatprep.subr.mxu0 0.0
    %1870 = vmatpush1.msra.mxu0 0.0
    %1871 = vmatprep.subr.mxu0 0.0
    %1872 = vmatpush1.msra.mxu0 0.0
    %1873 = vmatprep.subr.mxu0 0.0
    %1874 = vmatpush1.msra.mxu0 %v268
    %1875 = vmatprep.subr.mxu0 0.0
    %1876 = vmatpush1.msra.mxu0 %v267
    %1877 = vmatprep.subr.mxu0 0.0
    %1878 = vmatpush1.msra.mxu0 %v266
    %1879 = vmatprep.subr.mxu0 0.0
    %1880 = vmatpush1.msra.mxu0 %v265
    %1881 = vmatprep.subr.mxu0 0.0
    %1882 = vmatpush2.msra.mxu0 0.0
    %1883 = vmatprep.subr.mxu0 0.0
    %1884 = vmatpush2.msra.mxu0 0.0
    %1885 = vmatprep.subr.mxu0 0.0
    %1886 = vmatpush2.msra.mxu0 0.0
    %1887 = vmatprep.subr.mxu0 0.0
    %1888 = vmatpush2.msra.mxu0 0.0
    %1889 = vmatprep.subr.mxu0 0.0
    %1890 = vmatpush2.msra.mxu0 0.0
    %1891 = vmatprep.subr.mxu0 0.0
    %1892 = vmatpush2.msra.mxu0 0.0
    %1893 = vmatprep.subr.mxu0 0.0
    %1894 = vmatpush2.msra.mxu0 0.0
    %1895 = vmatprep.subr.mxu0 0.0
    %1896 = vmatpush2.msra.mxu0 0.0
    %1897 = vmatprep.subr.mxu0 0.0
    %1898 = vmatpush2.msra.mxu0 0.0
    %1899 = vmatprep.subr.mxu0 0.0
    %1900 = vmatpush2.msra.mxu0 0.0
    %1901 = vmatprep.subr.mxu0 0.0
    %1902 = vmatpush2.msra.mxu0 0.0
    %1903 = vmatprep.subr.mxu0 0.0
    %1904 = vmatpush2.msra.mxu0 0.0
    %1905 = vmatprep.subr.mxu0 0.0
    %1906 = vmatpush2.msra.mxu0 0.0
    %1907 = vmatprep.subr.mxu0 0.0
    %1908 = vmatpush2.msra.mxu0 0.0
    %1909 = vmatprep.subr.mxu0 0.0
    %1910 = vmatpush2.msra.mxu0 0.0
    %1911 = vmatprep.subr.mxu0 0.0
    %1912 = vmatpush2.msra.mxu0 0.0
    %1913 = vmatprep.mubr.f32.mxu0 0.0
    %1914 = vmatmul.mubr.f32.gmra.mxu0 %v1847
    %v1915 = vpop.f32.mrf.mxu0
    %v1916 = vadd.f32 0.0, %v1915
    %v1917 = vpop.f32.mrf.mxu0
    %1918 = vdwg.mxu0
    %v1919 = vadd.f32 %v1842, %v1916
    %v1920 = vxor.u32 %v1919, 2147483648
    %v1921 = vmul.f32 %v1920, 1.442695
    %v1922 = vpow.pop %v1921
    %v1923 = vadd.f32 %v1922, 1.0
    %v1924 = vrcp.pop %v1923
    %v1925 = vmul.f32 1.0, %v1924
    %v1926 = vadd.f32 %v1916, %v364
    %1928 = vrot.lane.b32.xlu0 %v1926, 64
    %v1929 = vpop.permute.xlu0 %1928
    %v1931 = vmul.f32 %v1925, %v1929
    %1933 = vrot.lane.b32.xlu0 %v1931, 64
    %v1934 = vpop.permute.xlu0 %1933
    %v1936 = vadd.f32 %v1842, %v1934
    %v1937 = vtanh.pop %v1936
    %v1938 = vsub.f32 1.0, %v1925
    %1940 = vrot.lane.b32.xlu0 %v1937, 96
    %v1941 = vpop.permute.xlu0 %1940
    %v1943 = vmul.f32 %v1938, %v1941
    %v1944 = vmul.f32 %v1925, %v1840
    %v1945 = vadd.f32 %v1943, %v1944
    %1947 = vrot.lane.b32.xlu0 %v1841, 96
    %v1948 = vpop.permute.xlu0 %1947
    %v1949 = vsel %vm277, %v1948, 0
    %1951 = vmatprep.subr.mxu0 0.0
    %1952 = vmatpush1.msra.mxu0 0.0
    %1953 = vmatprep.subr.mxu0 0.0
    %1954 = vmatpush1.msra.mxu0 0.0
    %1955 = vmatprep.subr.mxu0 0.0
    %1956 = vmatpush1.msra.mxu0 0.0
    %1957 = vmatprep.subr.mxu0 0.0
    %1958 = vmatpush1.msra.mxu0 0.0
    %1959 = vmatprep.subr.mxu0 0.0
    %1960 = vmatpush1.msra.mxu0 0.0
    %1961 = vmatprep.subr.mxu0 0.0
    %1962 = vmatpush1.msra.mxu0 0.0
    %1963 = vmatprep.subr.mxu0 0.0
    %1964 = vmatpush1.msra.mxu0 0.0
    %1965 = vmatprep.subr.mxu0 0.0
    %1966 = vmatpush1.msra.mxu0 0.0
    %1967 = vmatprep.subr.mxu0 0.0
    %1968 = vmatpush1.msra.mxu0 0.0
    %1969 = vmatprep.subr.mxu0 0.0
    %1970 = vmatpush1.msra.mxu0 0.0
    %1971 = vmatprep.subr.mxu0 0.0
    %1972 = vmatpush1.msra.mxu0 0.0
    %1973 = vmatprep.subr.mxu0 0.0
    %1974 = vmatpush1.msra.mxu0 0.0
    %1975 = vmatprep.subr.mxu0 0.0
    %1976 = vmatpush1.msra.mxu0 %v272
    %1977 = vmatprep.subr.mxu0 0.0
    %1978 = vmatpush1.msra.mxu0 %v271
    %1979 = vmatprep.subr.mxu0 0.0
    %1980 = vmatpush1.msra.mxu0 %v270
    %1981 = vmatprep.subr.mxu0 0.0
    %1982 = vmatpush1.msra.mxu0 %v269
    %1983 = vmatprep.subr.mxu0 0.0
    %1984 = vmatpush2.msra.mxu0 0.0
    %1985 = vmatprep.subr.mxu0 0.0
    %1986 = vmatpush2.msra.mxu0 0.0
    %1987 = vmatprep.subr.mxu0 0.0
    %1988 = vmatpush2.msra.mxu0 0.0
    %1989 = vmatprep.subr.mxu0 0.0
    %1990 = vmatpush2.msra.mxu0 0.0
    %1991 = vmatprep.subr.mxu0 0.0
    %1992 = vmatpush2.msra.mxu0 0.0
    %1993 = vmatprep.subr.mxu0 0.0
    %1994 = vmatpush2.msra.mxu0 0.0
    %1995 = vmatprep.subr.mxu0 0.0
    %1996 = vmatpush2.msra.mxu0 0.0
    %1997 = vmatprep.subr.mxu0 0.0
    %1998 = vmatpush2.msra.mxu0 0.0
    %1999 = vmatprep.subr.mxu0 0.0
    %2000 = vmatpush2.msra.mxu0 0.0
    %2001 = vmatprep.subr.mxu0 0.0
    %2002 = vmatpush2.msra.mxu0 0.0
    %2003 = vmatprep.subr.mxu0 0.0
    %2004 = vmatpush2.msra.mxu0 0.0
    %2005 = vmatprep.subr.mxu0 0.0
    %2006 = vmatpush2.msra.mxu0 0.0
    %2007 = vmatprep.subr.mxu0 0.0
    %2008 = vmatpush2.msra.mxu0 0.0
    %2009 = vmatprep.subr.mxu0 0.0
    %2010 = vmatpush2.msra.mxu0 0.0
    %2011 = vmatprep.subr.mxu0 0.0
    %2012 = vmatpush2.msra.mxu0 0.0
    %2013 = vmatprep.subr.mxu0 0.0
    %2014 = vmatpush2.msra.mxu0 0.0
    %2015 = vmatprep.mubr.f32.mxu0 0.0
    %2016 = vmatmul.mubr.f32.gmra.mxu0 %v1949
    %v2017 = vpop.f32.mrf.mxu0
    %v2018 = vadd.f32 0.0, %v2017
    %v2019 = vpop.f32.mrf.mxu0
    %2020 = vdwg.mxu0
    %v2021 = vadd.f32 %v1843, %v2018
    %v2022 = vxor.u32 %v2021, 2147483648
    %v2023 = vmul.f32 %v2022, 1.442695
    %v2024 = vpow.pop %v2023
    %v2025 = vadd.f32 %v2024, 1.0
    %v2026 = vrcp.pop %v2025
    %v2027 = vmul.f32 1.0, %v2026
    %v2028 = vadd.f32 %v2018, %v469
    %2030 = vrot.lane.b32.xlu0 %v2028, 64
    %v2031 = vpop.permute.xlu0 %2030
    %v2033 = vmul.f32 %v2027, %v2031
    %2035 = vrot.lane.b32.xlu0 %v2033, 64
    %v2036 = vpop.permute.xlu0 %2035
    %v2038 = vadd.f32 %v1843, %v2036
    %v2039 = vtanh.pop %v2038
    %v2040 = vsub.f32 1.0, %v2027
    %2042 = vrot.lane.b32.xlu0 %v2039, 96
    %v2043 = vpop.permute.xlu0 %2042
    %v2045 = vmul.f32 %v2040, %v2043
    %v2046 = vmul.f32 %v2027, %v1841
    %v2047 = vadd.f32 %v2045, %v2046
    %v2048 = vsel %vm509, %v1945, 0.0
    %2050 = vrot.lane.b32.xlu0 %v2048, 96
    %v2051 = vpop.permute.xlu0 %2050
    %2053 = vst.msk [vmem:[#allocation4 + $0xe] sm:$0x3] %vm503, %v2051
    %v2054 = vsel %vm497, %v2047, 0.0
    %2055 = vst.msk [vmem:[#allocation4] sm:$0x3] %vm511, %v2054
    %v2056 = vld [vmem:[#allocation4] sm:$0xff]
    %v2057 = vld [vmem:[#allocation4 + $0x8] sm:$0xff]
    %v2058 = vld [vmem:[%s10] sm:$0xff]
    %v2059 = vld [vmem:[%s10 + $0x8] sm:$0xff]
    %v2060 = vld [vmem:[%s10 + $0x10] sm:$0xff]
    %v2061 = vld [vmem:[%s10 + $0x18] sm:$0xff]
    %v2062 = vld [vmem:[%s10 + $0x20] sm:$0xff]
    %v2063 = vld [vmem:[%s10 + $0x28] sm:$0xff]
    %v2064 = vld [vmem:[%s10 + $0x30] sm:$0xff]
    %v2065 = vld [vmem:[%s10 + $0x38] sm:$0xff]
    %v2066 = vld [vmem:[%s11] sm:$0x1]
    %v2068 = vlaneseq
    %v2069 = vshrl.u32 %v2068, 7
    %v2070 = vsub.s32 0, %v2069
    %v2071 = vrot.slane %v2066, %v2070
    %vm2073 = vcmask 523264
    %v2075 = vsel %vm2073, %v2056, 0
    %v2078 = vsel %vm2073, %v2057, 0
    %2080 = vmatprep.subr.mxu0 0.0
    %2081 = vmatpush1.msra.mxu0 0.0
    %2082 = vmatprep.subr.mxu0 0.0
    %2083 = vmatpush1.msra.mxu0 0.0
    %2084 = vmatprep.subr.mxu0 0.0
    %2085 = vmatpush1.msra.mxu0 0.0
    %2086 = vmatprep.subr.mxu0 0.0
    %2087 = vmatpush1.msra.mxu0 0.0
    %2088 = vmatprep.subr.mxu0 0.0
    %2089 = vmatpush1.msra.mxu0 0.0
    %2090 = vmatprep.subr.mxu0 0.0
    %2091 = vmatpush1.msra.mxu0 0.0
    %2092 = vmatprep.subr.mxu0 0.0
    %2093 = vmatpush1.msra.mxu0 0.0
    %2094 = vmatprep.subr.mxu0 0.0
    %2095 = vmatpush1.msra.mxu0 0.0
    %2096 = vmatprep.subr.mxu0 0.0
    %2097 = vmatpush1.msra.mxu0 %v2065
    %2098 = vmatprep.subr.mxu0 0.0
    %2099 = vmatpush1.msra.mxu0 %v2064
    %2100 = vmatprep.subr.mxu0 0.0
    %2101 = vmatpush1.msra.mxu0 %v2063
    %2102 = vmatprep.subr.mxu0 0.0
    %2103 = vmatpush1.msra.mxu0 %v2062
    %2104 = vmatprep.subr.mxu0 0.0
    %2105 = vmatpush1.msra.mxu0 %v2061
    %2106 = vmatprep.subr.mxu0 0.0
    %2107 = vmatpush1.msra.mxu0 %v2060
    %2108 = vmatprep.subr.mxu0 0.0
    %2109 = vmatpush1.msra.mxu0 %v2059
    %2110 = vmatprep.subr.mxu0 0.0
    %2111 = vmatpush1.msra.mxu0 %v2058
    %2112 = vmatprep.subr.mxu0 0.0
    %2113 = vmatpush2.msra.mxu0 0.0
    %2114 = vmatprep.subr.mxu0 0.0
    %2115 = vmatpush2.msra.mxu0 0.0
    %2116 = vmatprep.subr.mxu0 0.0
    %2117 = vmatpush2.msra.mxu0 0.0
    %2118 = vmatprep.subr.mxu0 0.0
    %2119 = vmatpush2.msra.mxu0 0.0
    %2120 = vmatprep.subr.mxu0 0.0
    %2121 = vmatpush2.msra.mxu0 0.0
    %2122 = vmatprep.subr.mxu0 0.0
    %2123 = vmatpush2.msra.mxu0 0.0
    %2124 = vmatprep.subr.mxu0 0.0
    %2125 = vmatpush2.msra.mxu0 0.0
    %2126 = vmatprep.subr.mxu0 0.0
    %2127 = vmatpush2.msra.mxu0 0.0
    %2128 = vmatprep.subr.mxu0 0.0
    %2129 = vmatpush2.msra.mxu0 0.0
    %2130 = vmatprep.subr.mxu0 0.0
    %2131 = vmatpush2.msra.mxu0 0.0
    %2132 = vmatprep.subr.mxu0 0.0
    %2133 = vmatpush2.msra.mxu0 0.0
    %2134 = vmatprep.subr.mxu0 0.0
    %2135 = vmatpush2.msra.mxu0 0.0
    %2136 = vmatprep.subr.mxu0 0.0
    %2137 = vmatpush2.msra.mxu0 0.0
    %2138 = vmatprep.subr.mxu0 0.0
    %2139 = vmatpush2.msra.mxu0 0.0
    %2140 = vmatprep.subr.mxu0 0.0
    %2141 = vmatpush2.msra.mxu0 0.0
    %2142 = vmatprep.subr.mxu0 0.0
    %2143 = vmatpush2.msra.mxu0 0.0
    %2144 = vmatprep.mubr.f32.mxu0 0.0
    %2145 = vmatmul.mubr.f32.gmra.mxu0 %v2075
    %v2146 = vpop.f32.mrf.mxu0
    %v2147 = vadd.f32 %v2071, %v2146
    %v2148 = vpop.f32.mrf.mxu0
    %2149 = vmatprep.mubr.f32.mxu0 0.0
    %2150 = vmatmul.mubr.f32.gmra.mxu0 %v2078
    %v2151 = vpop.f32.mrf.mxu0
    %v2152 = vadd.f32 %v2071, %v2151
    %v2153 = vpop.f32.mrf.mxu0
    %2154 = vdwg.mxu0
    %vm2155 = vcmask 31744
    %2156 = vst.msk [vmem:[%s12] sm:$0xff] %vm2155, %v2147
    %2157 = vst.msk [vmem:[%s12 + $0x8] sm:$0xff] %vm2155, %v2152
    // Predicated region
    $region62: #{tpu_custom_call.1} parent=1 // pred_check
      _
    $region63: #{tpu_custom_call.1} parent=1 // pred_check_branch
      %2159 = sbr.rel (0) target = $region65
    $region64: #{tpu_custom_call.1} parent=1 // pred_region
      _
    $region65: #{tpu_custom_call.1} parent=1 // pred_fallthru
      _
    // Predicated region
    $region66: #{tpu_custom_call.1} parent=1 // pred_check
      _
    $region67: #{tpu_custom_call.1} parent=1 // pred_check_branch
      %2161 = sbr.rel (0) target = $region69
    $region68: #{tpu_custom_call.1} parent=1 // pred_region
      _
    $region69: #{tpu_custom_call.1} parent=1 // pred_fallthru
      _
    %2162 = vsyncpa [#allocation6], 1
    %2163 = vsyncpa [#allocation8], 1

</llo_original>
